<compile_context>
chip_gen: v5e
topology: v5e:2x2
jax: 0.10.0
libtpu: 0.0.40
codegen_flags: <defaults>
</compile_context>

<pallas_src>
import functools

import jax
import jax.numpy as jnp
from jax.experimental import pallas as pl
from jax.experimental.pallas import tpu as pltpu


# ----------------------------------------------------------------------------
# Fused BasicBlock kernel (one batch image per grid step)
# ----------------------------------------------------------------------------
def _basic_block_kernel(
    xp_ref,    # [1, H+2, W+2, Cin]   spatially zero-padded NHWC input slice
    w1_ref,    # [3, 3, Cin, Cmid]    conv1 weights (HWIO)
    s1_ref,    # [1, Cmid]            folded BN1 scale  (gamma / sqrt(var+eps))
    t1_ref,    # [1, Cmid]            folded BN1 shift  (beta - mean*scale)
    w2_ref,    # [3, 3, Cmid, Cout]   conv2 weights (HWIO)
    s2_ref,    # [1, Cout]            folded BN2 scale
    t2_ref,    # [1, Cout]            folded BN2 shift
    out_ref,   # [1, H, W, Cout]      output
    hpad_ref,  # VMEM scratch [1, H+2, W+2, Cmid]  zero-padded conv1 activation
    *,
    H: int,
    W: int,
):
    Cin = xp_ref.shape[-1]
    Cmid = w1_ref.shape[-1]
    Cout = w2_ref.shape[-1]

    xp = xp_ref[...]          # (1, H+2, W+2, Cin)
    w1 = w1_ref[...]          # (3, 3, Cin, Cmid)
    w2 = w2_ref[...]          # (3, 3, Cmid, Cout)

    # ---- conv1 (3x3, stride 1, pad 1): 9 shifted MXU matmuls, f32 accumulate ----
    acc1 = jnp.zeros((H * W, Cmid), jnp.float32)
    for dy in range(3):
        for dx in range(3):
            patch = xp[:, dy:dy + H, dx:dx + W, :].reshape(H * W, Cin)
            acc1 = acc1 + jnp.dot(patch, w1[dy, dx],
                                  preferred_element_type=jnp.float32)

    # ---- folded BN1 + ReLU ----
    h = jnp.maximum(acc1 * s1_ref[...] + t1_ref[...], 0.0)   # (H*W, Cmid)

    # ---- zero-pad conv1 activation for conv2 (pad=1) via VMEM scratch ----
    hpad_ref[...] = jnp.zeros_like(hpad_ref)
    hpad_ref[:, 1:H + 1, 1:W + 1, :] = h.reshape(1, H, W, Cmid)
    hp = hpad_ref[...]        # (1, H+2, W+2, Cmid)

    # ---- conv2 (3x3, stride 1, pad 1) ----
    acc2 = jnp.zeros((H * W, Cout), jnp.float32)
    for dy in range(3):
        for dx in range(3):
            patch = hp[:, dy:dy + H, dx:dx + W, :].reshape(H * W, Cmid)
            acc2 = acc2 + jnp.dot(patch, w2[dy, dx],
                                  preferred_element_type=jnp.float32)

    # ---- folded BN2 + identity residual + ReLU ----
    out = acc2 * s2_ref[...] + t2_ref[...]
    residual = xp[:, 1:H + 1, 1:W + 1, :].reshape(H * W, Cin)
    out = jnp.maximum(out + residual, 0.0)

    out_ref[...] = out.reshape(1, H, W, Cout)


# ----------------------------------------------------------------------------
# Wrapper
# ----------------------------------------------------------------------------
def basic_block_forward(x_nchw, params, *, eps=1e-5):
    """Fused BasicBlock forward. x_nchw: [B, C, H, W] (f32). Returns [B, C, H, W]."""
    B, Cin, H, W = x_nchw.shape
    w1 = params["conv1_w"]      # [Cmid, Cin, 3, 3]  (PyTorch OIHW)
    w2 = params["conv2_w"]      # [Cout, Cmid, 3, 3]
    Cmid, Cout = w1.shape[0], w2.shape[0]
    assert Cout == Cin, "identity residual requires planes == inplanes (downsample=None)"

    # NHWC + spatial zero pad (padding=1) so all in-kernel slices are static.
    x_nhwc = jnp.transpose(x_nchw, (0, 2, 3, 1))
    xp = jnp.pad(x_nhwc, ((0, 0), (1, 1), (1, 1), (0, 0)))

    # OIHW -> HWIO so each tap w[dy, dx] is a ready-to-matmul [Cin, Cout] slab.
    w1_hwio = jnp.transpose(w1, (2, 3, 1, 0))
    w2_hwio = jnp.transpose(w2, (2, 3, 1, 0))

    # Fold eval-mode BatchNorm into per-channel scale/shift (done once, outside).
    def fold_bn(gamma, beta, mean, var):
        scale = gamma / jnp.sqrt(var + eps)
        shift = beta - mean * scale
        return scale.reshape(1, -1).astype(jnp.float32), shift.reshape(1, -1).astype(jnp.float32)

    s1, t1 = fold_bn(params["bn1_gamma"], params["bn1_beta"],
                     params["bn1_mean"], params["bn1_var"])
    s2, t2 = fold_bn(params["bn2_gamma"], params["bn2_beta"],
                     params["bn2_mean"], params["bn2_var"])

    kernel = functools.partial(_basic_block_kernel, H=H, W=W)

    const4 = lambda b: (0, 0, 0, 0)   # weights resident across the batch grid
    const2 = lambda b: (0, 0)

    out_nhwc = pl.pallas_call(
        kernel,
        out_shape=jax.ShapeDtypeStruct((B, H, W, Cout), jnp.float32),
        grid=(B,),
        in_specs=[
            pl.BlockSpec((1, H + 2, W + 2, Cin), lambda b: (b, 0, 0, 0)),
            pl.BlockSpec((3, 3, Cin, Cmid), const4),
            pl.BlockSpec((1, Cmid), const2),
            pl.BlockSpec((1, Cmid), const2),
            pl.BlockSpec((3, 3, Cmid, Cout), const4),
            pl.BlockSpec((1, Cout), const2),
            pl.BlockSpec((1, Cout), const2),
        ],
        out_specs=pl.BlockSpec((1, H, W, Cout), lambda b: (b, 0, 0, 0)),
        scratch_shapes=[pltpu.VMEM((1, H + 2, W + 2, Cmid), jnp.float32)],
        compiler_params=pltpu.CompilerParams(
            dimension_semantics=("parallel",),   # shard batch across TCs (v7x megacore)
        ),
    )(xp, w1_hwio, s1, t1, w2_hwio, s2, t2)

    return jnp.transpose(out_nhwc, (0, 3, 1, 2))


# ----------------------------------------------------------------------------
# Pure-JAX reference (same math) for a correctness check
# ----------------------------------------------------------------------------
def basic_block_ref(x, params, *, eps=1e-5):
    def bn(y, g, b, m, v):
        g = g.reshape(1, -1, 1, 1); b = b.reshape(1, -1, 1, 1)
        m = m.reshape(1, -1, 1, 1); v = v.reshape(1, -1, 1, 1)
        return (y - m) / jnp.sqrt(v + eps) * g + b

    def conv(y, w):
        dn = jax.lax.conv_dimension_numbers(y.shape, w.shape, ("NCHW", "OIHW", "NCHW"))
        return jax.lax.conv_general_dilated(y, w, (1, 1), "SAME", dimension_numbers=dn)

    out = conv(x, params["conv1_w"])
    out = jnp.maximum(bn(out, params["bn1_gamma"], params["bn1_beta"],
                         params["bn1_mean"], params["bn1_var"]), 0.0)
    out = conv(out, params["conv2_w"])
    out = bn(out, params["bn2_gamma"], params["bn2_beta"],
             params["bn2_mean"], params["bn2_var"])
    return jnp.maximum(out + x, 0.0)


# ----------------------------------------------------------------------------
# Deterministic parameter init
# ----------------------------------------------------------------------------
def init_params(key, inplanes, planes):
    ks = jax.random.split(key, 10)
    lim1 = 1.0 / jnp.sqrt(jnp.float32(inplanes * 9))
    lim2 = 1.0 / jnp.sqrt(jnp.float32(planes * 9))
    return dict(
        conv1_w=jax.random.uniform(ks[0], (planes, inplanes, 3, 3), jnp.float32, -lim1, lim1),
        conv2_w=jax.random.uniform(ks[1], (planes, planes, 3, 3), jnp.float32, -lim2, lim2),
        bn1_gamma=jax.random.uniform(ks[2], (planes,), jnp.float32, 0.5, 1.5),
        bn1_beta=jax.random.uniform(ks[3], (planes,), jnp.float32, -0.1, 0.1),
        bn1_mean=jax.random.uniform(ks[4], (planes,), jnp.float32, -0.1, 0.1),
        bn1_var=jax.random.uniform(ks[5], (planes,), jnp.float32, 0.5, 1.5),
        bn2_gamma=jax.random.uniform(ks[6], (planes,), jnp.float32, 0.5, 1.5),
        bn2_beta=jax.random.uniform(ks[7], (planes,), jnp.float32, -0.1, 0.1),
        bn2_mean=jax.random.uniform(ks[8], (planes,), jnp.float32, -0.1, 0.1),
        bn2_var=jax.random.uniform(ks[9], (planes,), jnp.float32, 0.5, 1.5),
    )


if __name__ == "__main__":
    key = jax.random.PRNGKey(0)
    kx, kp = jax.random.split(key)

    # Small shapes consistent with the module: BasicBlock(inplanes=4, planes=4),
    # stride=1, downsample=None, on a [2, 4, 16, 16] NCHW input.
    B, C, H, W = 2, 4, 16, 16
    x = jax.random.normal(kx, (B, C, H, W), jnp.float32)
    params = init_params(kp, C, C)

    out = basic_block_forward(x, params)
    jax.block_until_ready(out)

    ref = basic_block_ref(x, params)
    assert out.shape == (B, C, H, W)
    assert bool(jnp.allclose(out, ref, atol=1e-4, rtol=1e-4)), \
        f"max abs diff = {float(jnp.max(jnp.abs(out - ref)))}"

    print("KERNEL_OK")
</pallas_src>

<mosaic_0001>
module attributes {stable_mosaic.version = 11 : i64} {
  func.func @_basic_block_kernel(%arg0: i32, %arg1: memref<1x18x18x4xf32, #tpu.memory_space<vmem>>, %arg2: memref<3x3x4x4xf32, #tpu.memory_space<vmem>>, %arg3: memref<1x4xf32, #tpu.memory_space<vmem>>, %arg4: memref<1x4xf32, #tpu.memory_space<vmem>>, %arg5: memref<3x3x4x4xf32, #tpu.memory_space<vmem>>, %arg6: memref<1x4xf32, #tpu.memory_space<vmem>>, %arg7: memref<1x4xf32, #tpu.memory_space<vmem>>, %arg8: memref<1x16x16x4xf32, #tpu.memory_space<vmem>>, %arg9: memref<1x18x18x4xf32, #tpu.memory_space<vmem>>) attributes {dimension_semantics = [#tpu.dimension_semantics<parallel>], iteration_bounds = array<i64: 2>, scalar_prefetch = 0 : i64, scratch_operands = 1 : i64, tpu.core_type = #tpu.core_type<tc>, window_params = [{transform_indices = @transform_0, window_bounds = array<i64: 1, 18, 18, 4>}, {pipeline_mode = #tpu.pipeline_mode<synchronous>, transform_indices = @transform_1, window_bounds = array<i64: 3, 3, 4, 4>}, {pipeline_mode = #tpu.pipeline_mode<synchronous>, transform_indices = @transform_2, window_bounds = array<i64: 1, 4>}, {pipeline_mode = #tpu.pipeline_mode<synchronous>, transform_indices = @transform_3, window_bounds = array<i64: 1, 4>}, {pipeline_mode = #tpu.pipeline_mode<synchronous>, transform_indices = @transform_4, window_bounds = array<i64: 3, 3, 4, 4>}, {pipeline_mode = #tpu.pipeline_mode<synchronous>, transform_indices = @transform_5, window_bounds = array<i64: 1, 4>}, {pipeline_mode = #tpu.pipeline_mode<synchronous>, transform_indices = @transform_6, window_bounds = array<i64: 1, 4>}, {transform_indices = @transform_7, window_bounds = array<i64: 1, 16, 16, 4>}]} {
    %c0 = arith.constant 0 : index
    %c0_0 = arith.constant 0 : index
    %c0_1 = arith.constant 0 : index
    %c0_2 = arith.constant 0 : index
    %0 = vector.load %arg1[%c0, %c0_0, %c0_1, %c0_2] : memref<1x18x18x4xf32, #tpu.memory_space<vmem>>, vector<1x18x18x4xf32>
    %c0_3 = arith.constant 0 : index
    %c0_4 = arith.constant 0 : index
    %c0_5 = arith.constant 0 : index
    %c0_6 = arith.constant 0 : index
    %1 = vector.load %arg2[%c0_3, %c0_4, %c0_5, %c0_6] : memref<3x3x4x4xf32, #tpu.memory_space<vmem>>, vector<3x3x4x4xf32>
    %c0_7 = arith.constant 0 : index
    %c0_8 = arith.constant 0 : index
    %c0_9 = arith.constant 0 : index
    %c0_10 = arith.constant 0 : index
    %2 = vector.load %arg5[%c0_7, %c0_8, %c0_9, %c0_10] : memref<3x3x4x4xf32, #tpu.memory_space<vmem>>, vector<3x3x4x4xf32>
    %cst = arith.constant 0.000000e+00 : f32
    %3 = vector.broadcast %cst : f32 to vector<256x4xf32>
    %4 = vector.extract_strided_slice %0 {offsets = [0, 0, 0, 0], sizes = [1, 16, 16, 4], strides = [1, 1, 1, 1]} : vector<1x18x18x4xf32> to vector<1x16x16x4xf32>
    %5 = vector.shape_cast %4 : vector<1x16x16x4xf32> to vector<256x4xf32>
    %6 = vector.extract_strided_slice %1 {offsets = [0, 0, 0, 0], sizes = [1, 1, 4, 4], strides = [1, 1, 1, 1]} : vector<3x3x4x4xf32> to vector<1x1x4x4xf32>
    %7 = vector.shape_cast %6 : vector<1x1x4x4xf32> to vector<4x4xf32>
    %cst_11 = arith.constant dense<0.000000e+00> : vector<256x4xf32>
    %8 = tpu.matmul %5, %7, %cst_11 {dimension_numbers = #tpu.dot_dimension_numbers<[1], [0], [0], [1], [0, 0, 1, 1], [], []>} : vector<256x4xf32>, vector<4x4xf32>, vector<256x4xf32> -> vector<256x4xf32>
    %9 = arith.addf %3, %8 : vector<256x4xf32>
    %10 = vector.extract_strided_slice %0 {offsets = [0, 0, 1, 0], sizes = [1, 16, 16, 4], strides = [1, 1, 1, 1]} : vector<1x18x18x4xf32> to vector<1x16x16x4xf32>
    %11 = vector.shape_cast %10 : vector<1x16x16x4xf32> to vector<256x4xf32>
    %12 = vector.extract_strided_slice %1 {offsets = [0, 1, 0, 0], sizes = [1, 1, 4, 4], strides = [1, 1, 1, 1]} : vector<3x3x4x4xf32> to vector<1x1x4x4xf32>
    %13 = vector.shape_cast %12 : vector<1x1x4x4xf32> to vector<4x4xf32>
    %cst_12 = arith.constant dense<0.000000e+00> : vector<256x4xf32>
    %14 = tpu.matmul %11, %13, %cst_12 {dimension_numbers = #tpu.dot_dimension_numbers<[1], [0], [0], [1], [0, 0, 1, 1], [], []>} : vector<256x4xf32>, vector<4x4xf32>, vector<256x4xf32> -> vector<256x4xf32>
    %15 = arith.addf %9, %14 : vector<256x4xf32>
    %16 = vector.extract_strided_slice %0 {offsets = [0, 0, 2, 0], sizes = [1, 16, 16, 4], strides = [1, 1, 1, 1]} : vector<1x18x18x4xf32> to vector<1x16x16x4xf32>
    %17 = vector.shape_cast %16 : vector<1x16x16x4xf32> to vector<256x4xf32>
    %18 = vector.extract_strided_slice %1 {offsets = [0, 2, 0, 0], sizes = [1, 1, 4, 4], strides = [1, 1, 1, 1]} : vector<3x3x4x4xf32> to vector<1x1x4x4xf32>
    %19 = vector.shape_cast %18 : vector<1x1x4x4xf32> to vector<4x4xf32>
    %cst_13 = arith.constant dense<0.000000e+00> : vector<256x4xf32>
    %20 = tpu.matmul %17, %19, %cst_13 {dimension_numbers = #tpu.dot_dimension_numbers<[1], [0], [0], [1], [0, 0, 1, 1], [], []>} : vector<256x4xf32>, vector<4x4xf32>, vector<256x4xf32> -> vector<256x4xf32>
    %21 = arith.addf %15, %20 : vector<256x4xf32>
    %22 = vector.extract_strided_slice %0 {offsets = [0, 1, 0, 0], sizes = [1, 16, 16, 4], strides = [1, 1, 1, 1]} : vector<1x18x18x4xf32> to vector<1x16x16x4xf32>
    %23 = vector.shape_cast %22 : vector<1x16x16x4xf32> to vector<256x4xf32>
    %24 = vector.extract_strided_slice %1 {offsets = [1, 0, 0, 0], sizes = [1, 1, 4, 4], strides = [1, 1, 1, 1]} : vector<3x3x4x4xf32> to vector<1x1x4x4xf32>
    %25 = vector.shape_cast %24 : vector<1x1x4x4xf32> to vector<4x4xf32>
    %cst_14 = arith.constant dense<0.000000e+00> : vector<256x4xf32>
    %26 = tpu.matmul %23, %25, %cst_14 {dimension_numbers = #tpu.dot_dimension_numbers<[1], [0], [0], [1], [0, 0, 1, 1], [], []>} : vector<256x4xf32>, vector<4x4xf32>, vector<256x4xf32> -> vector<256x4xf32>
    %27 = arith.addf %21, %26 : vector<256x4xf32>
    %28 = vector.extract_strided_slice %0 {offsets = [0, 1, 1, 0], sizes = [1, 16, 16, 4], strides = [1, 1, 1, 1]} : vector<1x18x18x4xf32> to vector<1x16x16x4xf32>
    %29 = vector.shape_cast %28 : vector<1x16x16x4xf32> to vector<256x4xf32>
    %30 = vector.extract_strided_slice %1 {offsets = [1, 1, 0, 0], sizes = [1, 1, 4, 4], strides = [1, 1, 1, 1]} : vector<3x3x4x4xf32> to vector<1x1x4x4xf32>
    %31 = vector.shape_cast %30 : vector<1x1x4x4xf32> to vector<4x4xf32>
    %cst_15 = arith.constant dense<0.000000e+00> : vector<256x4xf32>
    %32 = tpu.matmul %29, %31, %cst_15 {dimension_numbers = #tpu.dot_dimension_numbers<[1], [0], [0], [1], [0, 0, 1, 1], [], []>} : vector<256x4xf32>, vector<4x4xf32>, vector<256x4xf32> -> vector<256x4xf32>
    %33 = arith.addf %27, %32 : vector<256x4xf32>
    %34 = vector.extract_strided_slice %0 {offsets = [0, 1, 2, 0], sizes = [1, 16, 16, 4], strides = [1, 1, 1, 1]} : vector<1x18x18x4xf32> to vector<1x16x16x4xf32>
    %35 = vector.shape_cast %34 : vector<1x16x16x4xf32> to vector<256x4xf32>
    %36 = vector.extract_strided_slice %1 {offsets = [1, 2, 0, 0], sizes = [1, 1, 4, 4], strides = [1, 1, 1, 1]} : vector<3x3x4x4xf32> to vector<1x1x4x4xf32>
    %37 = vector.shape_cast %36 : vector<1x1x4x4xf32> to vector<4x4xf32>
    %cst_16 = arith.constant dense<0.000000e+00> : vector<256x4xf32>
    %38 = tpu.matmul %35, %37, %cst_16 {dimension_numbers = #tpu.dot_dimension_numbers<[1], [0], [0], [1], [0, 0, 1, 1], [], []>} : vector<256x4xf32>, vector<4x4xf32>, vector<256x4xf32> -> vector<256x4xf32>
    %39 = arith.addf %33, %38 : vector<256x4xf32>
    %40 = vector.extract_strided_slice %0 {offsets = [0, 2, 0, 0], sizes = [1, 16, 16, 4], strides = [1, 1, 1, 1]} : vector<1x18x18x4xf32> to vector<1x16x16x4xf32>
    %41 = vector.shape_cast %40 : vector<1x16x16x4xf32> to vector<256x4xf32>
    %42 = vector.extract_strided_slice %1 {offsets = [2, 0, 0, 0], sizes = [1, 1, 4, 4], strides = [1, 1, 1, 1]} : vector<3x3x4x4xf32> to vector<1x1x4x4xf32>
    %43 = vector.shape_cast %42 : vector<1x1x4x4xf32> to vector<4x4xf32>
    %cst_17 = arith.constant dense<0.000000e+00> : vector<256x4xf32>
    %44 = tpu.matmul %41, %43, %cst_17 {dimension_numbers = #tpu.dot_dimension_numbers<[1], [0], [0], [1], [0, 0, 1, 1], [], []>} : vector<256x4xf32>, vector<4x4xf32>, vector<256x4xf32> -> vector<256x4xf32>
    %45 = arith.addf %39, %44 : vector<256x4xf32>
    %46 = vector.extract_strided_slice %0 {offsets = [0, 2, 1, 0], sizes = [1, 16, 16, 4], strides = [1, 1, 1, 1]} : vector<1x18x18x4xf32> to vector<1x16x16x4xf32>
    %47 = vector.shape_cast %46 : vector<1x16x16x4xf32> to vector<256x4xf32>
    %48 = vector.extract_strided_slice %1 {offsets = [2, 1, 0, 0], sizes = [1, 1, 4, 4], strides = [1, 1, 1, 1]} : vector<3x3x4x4xf32> to vector<1x1x4x4xf32>
    %49 = vector.shape_cast %48 : vector<1x1x4x4xf32> to vector<4x4xf32>
    %cst_18 = arith.constant dense<0.000000e+00> : vector<256x4xf32>
    %50 = tpu.matmul %47, %49, %cst_18 {dimension_numbers = #tpu.dot_dimension_numbers<[1], [0], [0], [1], [0, 0, 1, 1], [], []>} : vector<256x4xf32>, vector<4x4xf32>, vector<256x4xf32> -> vector<256x4xf32>
    %51 = arith.addf %45, %50 : vector<256x4xf32>
    %52 = vector.extract_strided_slice %0 {offsets = [0, 2, 2, 0], sizes = [1, 16, 16, 4], strides = [1, 1, 1, 1]} : vector<1x18x18x4xf32> to vector<1x16x16x4xf32>
    %53 = vector.shape_cast %52 : vector<1x16x16x4xf32> to vector<256x4xf32>
    %54 = vector.extract_strided_slice %1 {offsets = [2, 2, 0, 0], sizes = [1, 1, 4, 4], strides = [1, 1, 1, 1]} : vector<3x3x4x4xf32> to vector<1x1x4x4xf32>
    %55 = vector.shape_cast %54 : vector<1x1x4x4xf32> to vector<4x4xf32>
    %cst_19 = arith.constant dense<0.000000e+00> : vector<256x4xf32>
    %56 = tpu.matmul %53, %55, %cst_19 {dimension_numbers = #tpu.dot_dimension_numbers<[1], [0], [0], [1], [0, 0, 1, 1], [], []>} : vector<256x4xf32>, vector<4x4xf32>, vector<256x4xf32> -> vector<256x4xf32>
    %57 = arith.addf %51, %56 : vector<256x4xf32>
    %c0_20 = arith.constant 0 : index
    %c0_21 = arith.constant 0 : index
    %58 = vector.load %arg3[%c0_20, %c0_21] : memref<1x4xf32, #tpu.memory_space<vmem>>, vector<1x4xf32>
    %59 = vector.broadcast %58 : vector<1x4xf32> to vector<256x4xf32>
    %60 = arith.mulf %57, %59 : vector<256x4xf32>
    %c0_22 = arith.constant 0 : index
    %c0_23 = arith.constant 0 : index
    %61 = vector.load %arg4[%c0_22, %c0_23] : memref<1x4xf32, #tpu.memory_space<vmem>>, vector<1x4xf32>
    %62 = vector.broadcast %61 : vector<1x4xf32> to vector<256x4xf32>
    %63 = arith.addf %60, %62 : vector<256x4xf32>
    %cst_24 = arith.constant 0.000000e+00 : f32
    %64 = vector.broadcast %cst_24 : f32 to vector<256x4xf32>
    %65 = arith.maximumf %63, %64 : vector<256x4xf32>
    %cst_25 = arith.constant 0.000000e+00 : f32
    %66 = vector.broadcast %cst_25 : f32 to vector<1x18x18x4xf32>
    %c0_26 = arith.constant 0 : index
    %c0_27 = arith.constant 0 : index
    %c0_28 = arith.constant 0 : index
    %c0_29 = arith.constant 0 : index
    %67 = vector.load %arg9[%c0_26, %c0_27, %c0_28, %c0_29] : memref<1x18x18x4xf32, #tpu.memory_space<vmem>>, vector<1x18x18x4xf32>
    tpu.vector_store %arg9[%c0_26, %c0_27, %c0_28, %c0_29], %66 {strides = array<i32>} : memref<1x18x18x4xf32, #tpu.memory_space<vmem>>, vector<1x18x18x4xf32>,
    %68 = vector.shape_cast %65 : vector<256x4xf32> to vector<1x16x16x4xf32>
    %c0_30 = arith.constant 0 : index
    %c1 = arith.constant 1 : index
    %c1_31 = arith.constant 1 : index
    %c0_32 = arith.constant 0 : index
    %69 = vector.load %arg9[%c0_30, %c1, %c1_31, %c0_32] : memref<1x18x18x4xf32, #tpu.memory_space<vmem>>, vector<1x16x16x4xf32>
    tpu.vector_store %arg9[%c0_30, %c1, %c1_31, %c0_32], %68 {strides = array<i32>} : memref<1x18x18x4xf32, #tpu.memory_space<vmem>>, vector<1x16x16x4xf32>,
    %c0_33 = arith.constant 0 : index
    %c0_34 = arith.constant 0 : index
    %c0_35 = arith.constant 0 : index
    %c0_36 = arith.constant 0 : index
    %70 = vector.load %arg9[%c0_33, %c0_34, %c0_35, %c0_36] : memref<1x18x18x4xf32, #tpu.memory_space<vmem>>, vector<1x18x18x4xf32>
    %cst_37 = arith.constant 0.000000e+00 : f32
    %71 = vector.broadcast %cst_37 : f32 to vector<256x4xf32>
    %72 = vector.extract_strided_slice %70 {offsets = [0, 0, 0, 0], sizes = [1, 16, 16, 4], strides = [1, 1, 1, 1]} : vector<1x18x18x4xf32> to vector<1x16x16x4xf32>
    %73 = vector.shape_cast %72 : vector<1x16x16x4xf32> to vector<256x4xf32>
    %74 = vector.extract_strided_slice %2 {offsets = [0, 0, 0, 0], sizes = [1, 1, 4, 4], strides = [1, 1, 1, 1]} : vector<3x3x4x4xf32> to vector<1x1x4x4xf32>
    %75 = vector.shape_cast %74 : vector<1x1x4x4xf32> to vector<4x4xf32>
    %cst_38 = arith.constant dense<0.000000e+00> : vector<256x4xf32>
    %76 = tpu.matmul %73, %75, %cst_38 {dimension_numbers = #tpu.dot_dimension_numbers<[1], [0], [0], [1], [0, 0, 1, 1], [], []>} : vector<256x4xf32>, vector<4x4xf32>, vector<256x4xf32> -> vector<256x4xf32>
    %77 = arith.addf %71, %76 : vector<256x4xf32>
    %78 = vector.extract_strided_slice %70 {offsets = [0, 0, 1, 0], sizes = [1, 16, 16, 4], strides = [1, 1, 1, 1]} : vector<1x18x18x4xf32> to vector<1x16x16x4xf32>
    %79 = vector.shape_cast %78 : vector<1x16x16x4xf32> to vector<256x4xf32>
    %80 = vector.extract_strided_slice %2 {offsets = [0, 1, 0, 0], sizes = [1, 1, 4, 4], strides = [1, 1, 1, 1]} : vector<3x3x4x4xf32> to vector<1x1x4x4xf32>
    %81 = vector.shape_cast %80 : vector<1x1x4x4xf32> to vector<4x4xf32>
    %cst_39 = arith.constant dense<0.000000e+00> : vector<256x4xf32>
    %82 = tpu.matmul %79, %81, %cst_39 {dimension_numbers = #tpu.dot_dimension_numbers<[1], [0], [0], [1], [0, 0, 1, 1], [], []>} : vector<256x4xf32>, vector<4x4xf32>, vector<256x4xf32> -> vector<256x4xf32>
    %83 = arith.addf %77, %82 : vector<256x4xf32>
    %84 = vector.extract_strided_slice %70 {offsets = [0, 0, 2, 0], sizes = [1, 16, 16, 4], strides = [1, 1, 1, 1]} : vector<1x18x18x4xf32> to vector<1x16x16x4xf32>
    %85 = vector.shape_cast %84 : vector<1x16x16x4xf32> to vector<256x4xf32>
    %86 = vector.extract_strided_slice %2 {offsets = [0, 2, 0, 0], sizes = [1, 1, 4, 4], strides = [1, 1, 1, 1]} : vector<3x3x4x4xf32> to vector<1x1x4x4xf32>
    %87 = vector.shape_cast %86 : vector<1x1x4x4xf32> to vector<4x4xf32>
    %cst_40 = arith.constant dense<0.000000e+00> : vector<256x4xf32>
    %88 = tpu.matmul %85, %87, %cst_40 {dimension_numbers = #tpu.dot_dimension_numbers<[1], [0], [0], [1], [0, 0, 1, 1], [], []>} : vector<256x4xf32>, vector<4x4xf32>, vector<256x4xf32> -> vector<256x4xf32>
    %89 = arith.addf %83, %88 : vector<256x4xf32>
    %90 = vector.extract_strided_slice %70 {offsets = [0, 1, 0, 0], sizes = [1, 16, 16, 4], strides = [1, 1, 1, 1]} : vector<1x18x18x4xf32> to vector<1x16x16x4xf32>
    %91 = vector.shape_cast %90 : vector<1x16x16x4xf32> to vector<256x4xf32>
    %92 = vector.extract_strided_slice %2 {offsets = [1, 0, 0, 0], sizes = [1, 1, 4, 4], strides = [1, 1, 1, 1]} : vector<3x3x4x4xf32> to vector<1x1x4x4xf32>
    %93 = vector.shape_cast %92 : vector<1x1x4x4xf32> to vector<4x4xf32>
    %cst_41 = arith.constant dense<0.000000e+00> : vector<256x4xf32>
    %94 = tpu.matmul %91, %93, %cst_41 {dimension_numbers = #tpu.dot_dimension_numbers<[1], [0], [0], [1], [0, 0, 1, 1], [], []>} : vector<256x4xf32>, vector<4x4xf32>, vector<256x4xf32> -> vector<256x4xf32>
    %95 = arith.addf %89, %94 : vector<256x4xf32>
    %96 = vector.extract_strided_slice %70 {offsets = [0, 1, 1, 0], sizes = [1, 16, 16, 4], strides = [1, 1, 1, 1]} : vector<1x18x18x4xf32> to vector<1x16x16x4xf32>
    %97 = vector.shape_cast %96 : vector<1x16x16x4xf32> to vector<256x4xf32>
    %98 = vector.extract_strided_slice %2 {offsets = [1, 1, 0, 0], sizes = [1, 1, 4, 4], strides = [1, 1, 1, 1]} : vector<3x3x4x4xf32> to vector<1x1x4x4xf32>
    %99 = vector.shape_cast %98 : vector<1x1x4x4xf32> to vector<4x4xf32>
    %cst_42 = arith.constant dense<0.000000e+00> : vector<256x4xf32>
    %100 = tpu.matmul %97, %99, %cst_42 {dimension_numbers = #tpu.dot_dimension_numbers<[1], [0], [0], [1], [0, 0, 1, 1], [], []>} : vector<256x4xf32>, vector<4x4xf32>, vector<256x4xf32> -> vector<256x4xf32>
    %101 = arith.addf %95, %100 : vector<256x4xf32>
    %102 = vector.extract_strided_slice %70 {offsets = [0, 1, 2, 0], sizes = [1, 16, 16, 4], strides = [1, 1, 1, 1]} : vector<1x18x18x4xf32> to vector<1x16x16x4xf32>
    %103 = vector.shape_cast %102 : vector<1x16x16x4xf32> to vector<256x4xf32>
    %104 = vector.extract_strided_slice %2 {offsets = [1, 2, 0, 0], sizes = [1, 1, 4, 4], strides = [1, 1, 1, 1]} : vector<3x3x4x4xf32> to vector<1x1x4x4xf32>
    %105 = vector.shape_cast %104 : vector<1x1x4x4xf32> to vector<4x4xf32>
    %cst_43 = arith.constant dense<0.000000e+00> : vector<256x4xf32>
    %106 = tpu.matmul %103, %105, %cst_43 {dimension_numbers = #tpu.dot_dimension_numbers<[1], [0], [0], [1], [0, 0, 1, 1], [], []>} : vector<256x4xf32>, vector<4x4xf32>, vector<256x4xf32> -> vector<256x4xf32>
    %107 = arith.addf %101, %106 : vector<256x4xf32>
    %108 = vector.extract_strided_slice %70 {offsets = [0, 2, 0, 0], sizes = [1, 16, 16, 4], strides = [1, 1, 1, 1]} : vector<1x18x18x4xf32> to vector<1x16x16x4xf32>
    %109 = vector.shape_cast %108 : vector<1x16x16x4xf32> to vector<256x4xf32>
    %110 = vector.extract_strided_slice %2 {offsets = [2, 0, 0, 0], sizes = [1, 1, 4, 4], strides = [1, 1, 1, 1]} : vector<3x3x4x4xf32> to vector<1x1x4x4xf32>
    %111 = vector.shape_cast %110 : vector<1x1x4x4xf32> to vector<4x4xf32>
    %cst_44 = arith.constant dense<0.000000e+00> : vector<256x4xf32>
    %112 = tpu.matmul %109, %111, %cst_44 {dimension_numbers = #tpu.dot_dimension_numbers<[1], [0], [0], [1], [0, 0, 1, 1], [], []>} : vector<256x4xf32>, vector<4x4xf32>, vector<256x4xf32> -> vector<256x4xf32>
    %113 = arith.addf %107, %112 : vector<256x4xf32>
    %114 = vector.extract_strided_slice %70 {offsets = [0, 2, 1, 0], sizes = [1, 16, 16, 4], strides = [1, 1, 1, 1]} : vector<1x18x18x4xf32> to vector<1x16x16x4xf32>
    %115 = vector.shape_cast %114 : vector<1x16x16x4xf32> to vector<256x4xf32>
    %116 = vector.extract_strided_slice %2 {offsets = [2, 1, 0, 0], sizes = [1, 1, 4, 4], strides = [1, 1, 1, 1]} : vector<3x3x4x4xf32> to vector<1x1x4x4xf32>
    %117 = vector.shape_cast %116 : vector<1x1x4x4xf32> to vector<4x4xf32>
    %cst_45 = arith.constant dense<0.000000e+00> : vector<256x4xf32>
    %118 = tpu.matmul %115, %117, %cst_45 {dimension_numbers = #tpu.dot_dimension_numbers<[1], [0], [0], [1], [0, 0, 1, 1], [], []>} : vector<256x4xf32>, vector<4x4xf32>, vector<256x4xf32> -> vector<256x4xf32>
    %119 = arith.addf %113, %118 : vector<256x4xf32>
    %120 = vector.extract_strided_slice %70 {offsets = [0, 2, 2, 0], sizes = [1, 16, 16, 4], strides = [1, 1, 1, 1]} : vector<1x18x18x4xf32> to vector<1x16x16x4xf32>
    %121 = vector.shape_cast %120 : vector<1x16x16x4xf32> to vector<256x4xf32>
    %122 = vector.extract_strided_slice %2 {offsets = [2, 2, 0, 0], sizes = [1, 1, 4, 4], strides = [1, 1, 1, 1]} : vector<3x3x4x4xf32> to vector<1x1x4x4xf32>
    %123 = vector.shape_cast %122 : vector<1x1x4x4xf32> to vector<4x4xf32>
    %cst_46 = arith.constant dense<0.000000e+00> : vector<256x4xf32>
    %124 = tpu.matmul %121, %123, %cst_46 {dimension_numbers = #tpu.dot_dimension_numbers<[1], [0], [0], [1], [0, 0, 1, 1], [], []>} : vector<256x4xf32>, vector<4x4xf32>, vector<256x4xf32> -> vector<256x4xf32>
    %125 = arith.addf %119, %124 : vector<256x4xf32>
    %c0_47 = arith.constant 0 : index
    %c0_48 = arith.constant 0 : index
    %126 = vector.load %arg6[%c0_47, %c0_48] : memref<1x4xf32, #tpu.memory_space<vmem>>, vector<1x4xf32>
    %127 = vector.broadcast %126 : vector<1x4xf32> to vector<256x4xf32>
    %128 = arith.mulf %125, %127 : vector<256x4xf32>
    %c0_49 = arith.constant 0 : index
    %c0_50 = arith.constant 0 : index
    %129 = vector.load %arg7[%c0_49, %c0_50] : memref<1x4xf32, #tpu.memory_space<vmem>>, vector<1x4xf32>
    %130 = vector.broadcast %129 : vector<1x4xf32> to vector<256x4xf32>
    %131 = arith.addf %128, %130 : vector<256x4xf32>
    %132 = vector.extract_strided_slice %0 {offsets = [0, 1, 1, 0], sizes = [1, 16, 16, 4], strides = [1, 1, 1, 1]} : vector<1x18x18x4xf32> to vector<1x16x16x4xf32>
    %133 = vector.shape_cast %132 : vector<1x16x16x4xf32> to vector<256x4xf32>
    %134 = arith.addf %131, %133 : vector<256x4xf32>
    %cst_51 = arith.constant 0.000000e+00 : f32
    %135 = vector.broadcast %cst_51 : f32 to vector<256x4xf32>
    %136 = arith.maximumf %134, %135 : vector<256x4xf32>
    %137 = vector.shape_cast %136 : vector<256x4xf32> to vector<1x16x16x4xf32>
    %c0_52 = arith.constant 0 : index
    %c0_53 = arith.constant 0 : index
    %c0_54 = arith.constant 0 : index
    %c0_55 = arith.constant 0 : index
    %138 = vector.load %arg8[%c0_52, %c0_53, %c0_54, %c0_55] : memref<1x16x16x4xf32, #tpu.memory_space<vmem>>, vector<1x16x16x4xf32>
    tpu.vector_store %arg8[%c0_52, %c0_53, %c0_54, %c0_55], %137 {strides = array<i32>} : memref<1x16x16x4xf32, #tpu.memory_space<vmem>>, vector<1x16x16x4xf32>,
    return
  }
  func.func @transform_0(%arg0: i32) -> (i32, i32, i32, i32) {
    %c0_i32 = arith.constant 0 : i32
    %c0_i32_0 = arith.constant 0 : i32
    %c0_i32_1 = arith.constant 0 : i32
    %c0_i32_2 = arith.constant 0 : i32
    return %arg0, %c0_i32, %c0_i32_0, %c0_i32_1 : i32, i32, i32, i32
  }
  func.func @transform_1(%arg0: i32) -> (i32, i32, i32, i32) {
    %c0_i32 = arith.constant 0 : i32
    %c0_i32_0 = arith.constant 0 : i32
    %c0_i32_1 = arith.constant 0 : i32
    %c0_i32_2 = arith.constant 0 : i32
    %c0_i32_3 = arith.constant 0 : i32
    return %c0_i32, %c0_i32_0, %c0_i32_1, %c0_i32_2 : i32, i32, i32, i32
  }
  func.func @transform_2(%arg0: i32) -> (i32, i32) {
    %c0_i32 = arith.constant 0 : i32
    %c0_i32_0 = arith.constant 0 : i32
    %c0_i32_1 = arith.constant 0 : i32
    return %c0_i32, %c0_i32_0 : i32, i32
  }
  func.func @transform_3(%arg0: i32) -> (i32, i32) {
    %c0_i32 = arith.constant 0 : i32
    %c0_i32_0 = arith.constant 0 : i32
    %c0_i32_1 = arith.constant 0 : i32
    return %c0_i32, %c0_i32_0 : i32, i32
  }
  func.func @transform_4(%arg0: i32) -> (i32, i32, i32, i32) {
    %c0_i32 = arith.constant 0 : i32
    %c0_i32_0 = arith.constant 0 : i32
    %c0_i32_1 = arith.constant 0 : i32
    %c0_i32_2 = arith.constant 0 : i32
    %c0_i32_3 = arith.constant 0 : i32
    return %c0_i32, %c0_i32_0, %c0_i32_1, %c0_i32_2 : i32, i32, i32, i32
  }
  func.func @transform_5(%arg0: i32) -> (i32, i32) {
    %c0_i32 = arith.constant 0 : i32
    %c0_i32_0 = arith.constant 0 : i32
    %c0_i32_1 = arith.constant 0 : i32
    return %c0_i32, %c0_i32_0 : i32, i32
  }
  func.func @transform_6(%arg0: i32) -> (i32, i32) {
    %c0_i32 = arith.constant 0 : i32
    %c0_i32_0 = arith.constant 0 : i32
    %c0_i32_1 = arith.constant 0 : i32
    return %c0_i32, %c0_i32_0 : i32, i32
  }
  func.func @transform_7(%arg0: i32) -> (i32, i32, i32, i32) {
    %c0_i32 = arith.constant 0 : i32
    %c0_i32_0 = arith.constant 0 : i32
    %c0_i32_1 = arith.constant 0 : i32
    %c0_i32_2 = arith.constant 0 : i32
    return %arg0, %c0_i32, %c0_i32_0, %c0_i32_1 : i32, i32, i32, i32
  }
}

</mosaic_0001>

<llo_original>
// kernel: tpu_custom_call.1
$region0: #{tpu_custom_call.1}
  #allocation0 [shape = 'u32[]', space=smem, size = 0x4, offset = 0x4, fixed_abs, tag = 'smem constant byte address 0x4 - core index']
  #allocation1 [shape = 'u32[72,128]{1,0:T(1,128)}', space=vmem, size = 0x9000, scoped, tag = 'internal scratch']
  #allocation2 [shape = 'f32[1,18,18,4]{3,2,1,0:T(8,128)}', space=vmem, size = 0x36000, scoped, tag = 'scratch operand']
  %s0 = inlined_call_operand.vmem [shape: f32[2,18,18,4], index: 0, kind: input, shape index: {}]
  %s1 = inlined_call_operand.vmem [shape: f32[3,3,4,4], index: 1, kind: input, shape index: {}]
  %s2 = inlined_call_operand.vmem [shape: f32[1,4], index: 2, kind: input, shape index: {}]
  %s3 = inlined_call_operand.vmem [shape: f32[1,4], index: 3, kind: input, shape index: {}]
  %s4 = inlined_call_operand.vmem [shape: f32[3,3,4,4], index: 4, kind: input, shape index: {}]
  %s5 = inlined_call_operand.vmem [shape: f32[1,4], index: 5, kind: input, shape index: {}]
  %s6 = inlined_call_operand.vmem [shape: f32[1,4], index: 6, kind: input, shape index: {}]
  %s7 = inlined_call_operand.vmem [shape: f32[2,16,16,4], index: 7, kind: output, shape index: {}]
  %s8 = sld [smem:[#allocation0]]
  $region61: #{tpu_custom_call.1} parent=0
    _
  %s10 = ssub.s32 1, %s8
  %s11 = scalar_select 0, %s10, %s8
  loop: start=0, step=1, limit=4
  $region2: #{tpu_custom_call.1} parent=0 // loop_pre_header
    _
  $region3: #{tpu_custom_call.1} parent=0 // loop_header
    %s13 = sphi 0, %s17
    %p14 = scmp.ge.s32.totalorder %s13, 4
    %s23 = sphi 0, %s25
    %s26 = sphi 0, %s23
    %s27 = sphi 0, %s26
    %s43 = sphi 0, %s27
    %s47 = sphi 0, %s47
    %s49 = sphi 0, %s47
    %s50 = sphi 0, %s49
    %s64 = sphi 0, %s50
    %s68 = sphi 0, %s68
    %s70 = sphi 0, %s68
    %s71 = sphi 0, %s70
    %s85 = sphi 0, %s71
    %s89 = sphi 0, %s89
    %s91 = sphi 0, %s89
    %s92 = sphi 0, %s91
    %s106 = sphi 0, %s92
    %s110 = sphi 0, %s110
    %s112 = sphi 0, %s110
    %s113 = sphi 0, %s112
    %s127 = sphi 0, %s113
    %s131 = sphi 0, %s131
    %s133 = sphi 0, %s131
    %s134 = sphi 0, %s133
    %s148 = sphi 0, %s134
    %s152 = sphi 0, %s152
    %s154 = sphi 0, %s152
    %s155 = sphi 0, %s154
    %s169 = sphi 0, %s155
    %s175 = sphi 0, %s177
    %s178 = sphi 0, %s175
    %s179 = sphi 0, %s178
    %s195 = sphi 0, %s179
  $region4: #{tpu_custom_call.1} parent=0 // loop_header_branch
    %16 = sbr.rel (%p14) target = $region8
  $region5: #{tpu_custom_call.1} parent=0 // loop_body
    %s18 = ssub.s32 %s13, 1
    %s19 = ssub.s32 %s13, 2
    %s20 = sadd.s32 %s13, 1
    %s21 = ssub.s32 %s13, %s20
    %p22 = scmp.eq.s32.totalorder %s21, 0
    %s24 = sadd.s32 %s23, 1
    %s25 = scalar_select %p22, %s23, %s24
    %p28 = pneg %p22
    %p29 = scmp.eq.s32.totalorder %s13, 1
    %p30 = por %p28, %p29
    %p31 = scmp.ne.s32.totalorder %s23, %s26
    %p32 = scmp.eq.s32.totalorder %s13, 0
    %p33 = por %p31, %p32
    %p34 = scmp.ne.s32.totalorder %s23, %s26
    %p35 = scmp.eq.s32.totalorder %s18, 1
    %p36 = por %p34, %p35
    %p37 = scmp.ne.s32.totalorder %s26, %s27
    %p38 = scmp.eq.s32.totalorder %s18, 0
    %p39 = por %p37, %p38
    %p40 = scmp.ne.s32.totalorder %s26, %s27
    %p41 = scmp.eq.s32.totalorder %s19, 1
    %p42 = por %p40, %p41
    %p44 = scmp.ne.s32.totalorder %s27, %s43
    %p45 = scmp.eq.s32.totalorder %s19, 0
    %p46 = por %p44, %p45
    %s48 = sadd.s32 %s47, 1
    %p51 = scmp.eq.s32.totalorder %s13, 1
    %p52 = scmp.ne.s32.totalorder %s47, %s49
    %p53 = scmp.eq.s32.totalorder %s13, 0
    %p54 = por %p52, %p53
    %p55 = scmp.ne.s32.totalorder %s47, %s49
    %p56 = scmp.eq.s32.totalorder %s18, 1
    %p57 = por %p55, %p56
    %p58 = scmp.ne.s32.totalorder %s49, %s50
    %p59 = scmp.eq.s32.totalorder %s18, 0
    %p60 = por %p58, %p59
    %p61 = scmp.ne.s32.totalorder %s49, %s50
    %p62 = scmp.eq.s32.totalorder %s19, 1
    %p63 = por %p61, %p62
    %p65 = scmp.ne.s32.totalorder %s50, %s64
    %p66 = scmp.eq.s32.totalorder %s19, 0
    %p67 = por %p65, %p66
    %s69 = sadd.s32 %s68, 1
    %p72 = scmp.eq.s32.totalorder %s13, 1
    %p73 = scmp.ne.s32.totalorder %s68, %s70
    %p74 = scmp.eq.s32.totalorder %s13, 0
    %p75 = por %p73, %p74
    %p76 = scmp.ne.s32.totalorder %s68, %s70
    %p77 = scmp.eq.s32.totalorder %s18, 1
    %p78 = por %p76, %p77
    %p79 = scmp.ne.s32.totalorder %s70, %s71
    %p80 = scmp.eq.s32.totalorder %s18, 0
    %p81 = por %p79, %p80
    %p82 = scmp.ne.s32.totalorder %s70, %s71
    %p83 = scmp.eq.s32.totalorder %s19, 1
    %p84 = por %p82, %p83
    %p86 = scmp.ne.s32.totalorder %s71, %s85
    %p87 = scmp.eq.s32.totalorder %s19, 0
    %p88 = por %p86, %p87
    %s90 = sadd.s32 %s89, 1
    %p93 = scmp.eq.s32.totalorder %s13, 1
    %p94 = scmp.ne.s32.totalorder %s89, %s91
    %p95 = scmp.eq.s32.totalorder %s13, 0
    %p96 = por %p94, %p95
    %p97 = scmp.ne.s32.totalorder %s89, %s91
    %p98 = scmp.eq.s32.totalorder %s18, 1
    %p99 = por %p97, %p98
    %p100 = scmp.ne.s32.totalorder %s91, %s92
    %p101 = scmp.eq.s32.totalorder %s18, 0
    %p102 = por %p100, %p101
    %p103 = scmp.ne.s32.totalorder %s91, %s92
    %p104 = scmp.eq.s32.totalorder %s19, 1
    %p105 = por %p103, %p104
    %p107 = scmp.ne.s32.totalorder %s92, %s106
    %p108 = scmp.eq.s32.totalorder %s19, 0
    %p109 = por %p107, %p108
    %s111 = sadd.s32 %s110, 1
    %p114 = scmp.eq.s32.totalorder %s13, 1
    %p115 = scmp.ne.s32.totalorder %s110, %s112
    %p116 = scmp.eq.s32.totalorder %s13, 0
    %p117 = por %p115, %p116
    %p118 = scmp.ne.s32.totalorder %s110, %s112
    %p119 = scmp.eq.s32.totalorder %s18, 1
    %p120 = por %p118, %p119
    %p121 = scmp.ne.s32.totalorder %s112, %s113
    %p122 = scmp.eq.s32.totalorder %s18, 0
    %p123 = por %p121, %p122
    %p124 = scmp.ne.s32.totalorder %s112, %s113
    %p125 = scmp.eq.s32.totalorder %s19, 1
    %p126 = por %p124, %p125
    %p128 = scmp.ne.s32.totalorder %s113, %s127
    %p129 = scmp.eq.s32.totalorder %s19, 0
    %p130 = por %p128, %p129
    %s132 = sadd.s32 %s131, 1
    %p135 = scmp.eq.s32.totalorder %s13, 1
    %p136 = scmp.ne.s32.totalorder %s131, %s133
    %p137 = scmp.eq.s32.totalorder %s13, 0
    %p138 = por %p136, %p137
    %p139 = scmp.ne.s32.totalorder %s131, %s133
    %p140 = scmp.eq.s32.totalorder %s18, 1
    %p141 = por %p139, %p140
    %p142 = scmp.ne.s32.totalorder %s133, %s134
    %p143 = scmp.eq.s32.totalorder %s18, 0
    %p144 = por %p142, %p143
    %p145 = scmp.ne.s32.totalorder %s133, %s134
    %p146 = scmp.eq.s32.totalorder %s19, 1
    %p147 = por %p145, %p146
    %p149 = scmp.ne.s32.totalorder %s134, %s148
    %p150 = scmp.eq.s32.totalorder %s19, 0
    %p151 = por %p149, %p150
    %s153 = sadd.s32 %s152, 1
    %p156 = scmp.eq.s32.totalorder %s13, 1
    %p157 = scmp.ne.s32.totalorder %s152, %s154
    %p158 = scmp.eq.s32.totalorder %s13, 0
    %p159 = por %p157, %p158
    %p160 = scmp.ne.s32.totalorder %s152, %s154
    %p161 = scmp.eq.s32.totalorder %s18, 1
    %p162 = por %p160, %p161
    %p163 = scmp.ne.s32.totalorder %s154, %s155
    %p164 = scmp.eq.s32.totalorder %s18, 0
    %p165 = por %p163, %p164
    %p166 = scmp.ne.s32.totalorder %s154, %s155
    %p167 = scmp.eq.s32.totalorder %s19, 1
    %p168 = por %p166, %p167
    %p170 = scmp.ne.s32.totalorder %s155, %s169
    %p171 = scmp.eq.s32.totalorder %s19, 0
    %p172 = por %p170, %p171
    %s173 = ssub.s32 %s13, %s20
    %p174 = scmp.eq.s32.totalorder %s173, 0
    %s176 = sadd.s32 %s175, 1
    %s177 = scalar_select %p174, %s175, %s176
    %p180 = pneg %p174
    %p181 = scmp.eq.s32.totalorder %s13, 1
    %p182 = por %p180, %p181
    %p183 = scmp.ne.s32.totalorder %s175, %s178
    %p184 = scmp.eq.s32.totalorder %s13, 0
    %p185 = por %p183, %p184
    %p186 = scmp.ne.s32.totalorder %s175, %s178
    %p187 = scmp.eq.s32.totalorder %s18, 1
    %p188 = por %p186, %p187
    %p189 = scmp.ne.s32.totalorder %s178, %s179
    %p190 = scmp.eq.s32.totalorder %s18, 0
    %p191 = por %p189, %p190
    %p192 = scmp.ne.s32.totalorder %s178, %s179
    %p193 = scmp.eq.s32.totalorder %s19, 1
    %p194 = por %p192, %p193
    %p196 = scmp.ne.s32.totalorder %s179, %s195
    %p197 = scmp.eq.s32.totalorder %s19, 0
    %p198 = por %p196, %p197
    %p199 = scmp.le.s32.totalorder 1, %s13
    %p200 = scmp.lt.s32.totalorder %s13, 3
    %p201 = pnand %p199, %p200
    %p202 = pneg %p201
    // Predicated region
    $region9: #{tpu_custom_call.1} parent=5 // pred_check
      _
    $region10: #{tpu_custom_call.1} parent=5 // pred_check_branch
      %204 = sbr.rel (%p201) target = $region12
    $region11: #{tpu_custom_call.1} parent=5 // pred_region
      %s205 = ssub.s32 %s13, 1
      // Predicated region
      $region13: #{tpu_custom_call.1} parent=11 // pred_check
        %p206 = pneg %p60
      $region14: #{tpu_custom_call.1} parent=11 // pred_check_branch
        %208 = sbr.rel (%p206) target = $region16
      $region15: #{tpu_custom_call.1} parent=11 // pred_region
        _
      $region16: #{tpu_custom_call.1} parent=11 // pred_fallthru
        _
      // Predicated region
      $region17: #{tpu_custom_call.1} parent=11 // pred_check
        %p209 = pneg %p81
      $region18: #{tpu_custom_call.1} parent=11 // pred_check_branch
        %211 = sbr.rel (%p209) target = $region20
      $region19: #{tpu_custom_call.1} parent=11 // pred_region
        _
      $region20: #{tpu_custom_call.1} parent=11 // pred_fallthru
        _
      // Predicated region
      $region21: #{tpu_custom_call.1} parent=11 // pred_check
        %p212 = pneg %p102
      $region22: #{tpu_custom_call.1} parent=11 // pred_check_branch
        %214 = sbr.rel (%p212) target = $region24
      $region23: #{tpu_custom_call.1} parent=11 // pred_region
        _
      $region24: #{tpu_custom_call.1} parent=11 // pred_fallthru
        _
      // Predicated region
      $region25: #{tpu_custom_call.1} parent=11 // pred_check
        %p215 = pneg %p123
      $region26: #{tpu_custom_call.1} parent=11 // pred_check_branch
        %217 = sbr.rel (%p215) target = $region28
      $region27: #{tpu_custom_call.1} parent=11 // pred_region
        _
      $region28: #{tpu_custom_call.1} parent=11 // pred_fallthru
        _
      // Predicated region
      $region29: #{tpu_custom_call.1} parent=11 // pred_check
        %p218 = pneg %p144
      $region30: #{tpu_custom_call.1} parent=11 // pred_check_branch
        %220 = sbr.rel (%p218) target = $region32
      $region31: #{tpu_custom_call.1} parent=11 // pred_region
        _
      $region32: #{tpu_custom_call.1} parent=11 // pred_fallthru
        _
      // Predicated region
      $region33: #{tpu_custom_call.1} parent=11 // pred_check
        %p221 = pneg %p165
      $region34: #{tpu_custom_call.1} parent=11 // pred_check_branch
        %223 = sbr.rel (%p221) target = $region36
      $region35: #{tpu_custom_call.1} parent=11 // pred_region
        _
      $region36: #{tpu_custom_call.1} parent=11 // pred_fallthru
        _
    $region12: #{tpu_custom_call.1} parent=5 // pred_fallthru
      _
    %p224 = scmp.lt.s32.totalorder %s13, 2
    // Predicated region
    $region37: #{tpu_custom_call.1} parent=5 // pred_check
      %p225 = pneg %p224
    $region38: #{tpu_custom_call.1} parent=5 // pred_check_branch
      %227 = sbr.rel (%p225) target = $region40
    $region39: #{tpu_custom_call.1} parent=5 // pred_region
      // Predicated region
      $region41: #{tpu_custom_call.1} parent=39 // pred_check
        %p228 = pneg %p33
      $region42: #{tpu_custom_call.1} parent=39 // pred_check_branch
        %230 = sbr.rel (%p228) target = $region44
      $region43: #{tpu_custom_call.1} parent=39 // pred_region
        %p231 = scmp.lt.s32.totalorder %s13, 1
        %s232 = scalar_select %p231, %s13, 1
        %s233 = smul.addr %s232, 54
        %s234 = smul.addr %s233, 8
        %s235 = scalar_lea.vmem %s0, %s234
      $region44: #{tpu_custom_call.1} parent=39 // pred_fallthru
        _
    $region40: #{tpu_custom_call.1} parent=5 // pred_fallthru
      _
    %p236 = scmp.le.s32.totalorder 1, %s13
    %p237 = scmp.lt.s32.totalorder %s13, 3
    %p238 = pnand %p236, %p237
    %p239 = pneg %p238
    // Predicated region
    $region45: #{tpu_custom_call.1} parent=5 // pred_check
      _
    $region46: #{tpu_custom_call.1} parent=5 // pred_check_branch
      %241 = sbr.rel (%p238) target = $region48
    $region47: #{tpu_custom_call.1} parent=5 // pred_region
      %s242 = ssub.s32 %s13, 1
      %p243 = scmp.lt.s32.totalorder %s18, 1
      %s244 = scalar_select %p243, %s18, 1
      %s245 = smul.addr %s244, 54
      %s246 = smul.addr %s245, 8
      %s247 = scalar_lea.vmem %s0, %s246
      %p248 = pneg %p39
      %p249 = pneg %p36
      %p250 = pneg %p60
      %p251 = pneg %p57
      %p252 = pneg %p81
      %p253 = pneg %p78
      %p254 = pneg %p102
      %p255 = pneg %p99
      %p256 = pneg %p123
      %p257 = pneg %p120
      %p258 = pneg %p144
      %p259 = pneg %p141
      %p260 = pneg %p165
      %p261 = pneg %p162
      %p262 = pneg %p191
      %p263 = pneg %p188
      %p264 = scmp.lt.s32.totalorder %s18, 1
      %s265 = scalar_select %p264, %s18, 1
      %s266 = smul.addr %s265, 32
      %s267 = smul.addr %s266, 8
      %s268 = scalar_lea.vmem %s7, %s267
      %p269 = scmp.lt.s32.totalorder %s18, 1
      %s270 = scalar_select %p269, %s18, 1
      %s271 = smul.addr %s270, 54
      %s272 = smul.addr %s271, 8
      %s273 = scalar_lea.vmem %s0, %s272
      %p274 = scmp.lt.s32.totalorder %s18, 1
      %s275 = scalar_select %p274, %s18, 1
      %s276 = smul.addr %s275, 32
      %s277 = smul.addr %s276, 8
      %s278 = scalar_lea.vmem %s7, %s277
      %v279 = vld [vmem:[%s273] sm:$0xff]
      %v280 = vld [vmem:[%s273 + $0x8] sm:$0xff]
      %v281 = vld [vmem:[%s273 + $0x10] sm:$0x3]
      %v282 = vld [vmem:[%s273 + $0x18] sm:$0xff]
      %v283 = vld [vmem:[%s273 + $0x20] sm:$0xff]
      %v284 = vld [vmem:[%s273 + $0x28] sm:$0x3]
      %v285 = vld [vmem:[%s273 + $0x30] sm:$0xff]
      %v286 = vld [vmem:[%s273 + $0x38] sm:$0xff]
      %v287 = vld [vmem:[%s273 + $0x40] sm:$0x3]
      %v288 = vld [vmem:[%s273 + $0x48] sm:$0xff]
      %v289 = vld [vmem:[%s273 + $0x50] sm:$0xff]
      %v290 = vld [vmem:[%s273 + $0x58] sm:$0x3]
      %v291 = vld [vmem:[%s273 + $0x60] sm:$0xff]
      %v292 = vld [vmem:[%s273 + $0x68] sm:$0xff]
      %v293 = vld [vmem:[%s273 + $0x70] sm:$0x3]
      %v294 = vld [vmem:[%s273 + $0x78] sm:$0xff]
      %v295 = vld [vmem:[%s273 + $0x80] sm:$0xff]
      %v296 = vld [vmem:[%s273 + $0x88] sm:$0x3]
      %v297 = vld [vmem:[%s273 + $0x90] sm:$0xff]
      %v298 = vld [vmem:[%s273 + $0x98] sm:$0xff]
      %v299 = vld [vmem:[%s273 + $0xa0] sm:$0x3]
      %v300 = vld [vmem:[%s273 + $0xa8] sm:$0xff]
      %v301 = vld [vmem:[%s273 + $0xb0] sm:$0xff]
      %v302 = vld [vmem:[%s273 + $0xb8] sm:$0x3]
      %v303 = vld [vmem:[%s273 + $0xc0] sm:$0xff]
      %v304 = vld [vmem:[%s273 + $0xc8] sm:$0xff]
      %v305 = vld [vmem:[%s273 + $0xd0] sm:$0x3]
      %v306 = vld [vmem:[%s273 + $0xd8] sm:$0xff]
      %v307 = vld [vmem:[%s273 + $0xe0] sm:$0xff]
      %v308 = vld [vmem:[%s273 + $0xe8] sm:$0x3]
      %v309 = vld [vmem:[%s273 + $0xf0] sm:$0xff]
      %v310 = vld [vmem:[%s273 + $0xf8] sm:$0xff]
      %v311 = vld [vmem:[%s273 + $0x100] sm:$0x3]
      %v312 = vld [vmem:[%s273 + $0x108] sm:$0xff]
      %v313 = vld [vmem:[%s273 + $0x110] sm:$0xff]
      %v314 = vld [vmem:[%s273 + $0x118] sm:$0x3]
      %v315 = vld [vmem:[%s273 + $0x120] sm:$0xff]
      %v316 = vld [vmem:[%s273 + $0x128] sm:$0xff]
      %v317 = vld [vmem:[%s273 + $0x130] sm:$0x3]
      %v318 = vld [vmem:[%s273 + $0x138] sm:$0xff]
      %v319 = vld [vmem:[%s273 + $0x140] sm:$0xff]
      %v320 = vld [vmem:[%s273 + $0x148] sm:$0x3]
      %v321 = vld [vmem:[%s273 + $0x150] sm:$0xff]
      %v322 = vld [vmem:[%s273 + $0x158] sm:$0xff]
      %v323 = vld [vmem:[%s273 + $0x160] sm:$0x3]
      %v324 = vld [vmem:[%s273 + $0x168] sm:$0xff]
      %v325 = vld [vmem:[%s273 + $0x170] sm:$0xff]
      %v326 = vld [vmem:[%s273 + $0x178] sm:$0x3]
      %v327 = vld [vmem:[%s273 + $0x180] sm:$0xff]
      %v328 = vld [vmem:[%s273 + $0x188] sm:$0xff]
      %v329 = vld [vmem:[%s273 + $0x190] sm:$0x3]
      %v330 = vld [vmem:[%s273 + $0x198] sm:$0xff]
      %v331 = vld [vmem:[%s273 + $0x1a0] sm:$0xff]
      %v332 = vld [vmem:[%s273 + $0x1a8] sm:$0x3]
      %v333 = vld [vmem:[%s1] sm:$0xf]
      %v334 = vld [vmem:[%s1 + $0x4] sm:$0xf]
      %v335 = vld [vmem:[%s1 + $0x8] sm:$0xf]
      %v336 = vld [vmem:[%s1 + $0xc] sm:$0xf]
      %v337 = vld [vmem:[%s1 + $0x10] sm:$0xf]
      %v338 = vld [vmem:[%s1 + $0x14] sm:$0xf]
      %v339 = vld [vmem:[%s1 + $0x18] sm:$0xf]
      %v340 = vld [vmem:[%s1 + $0x1c] sm:$0xf]
      %v341 = vld [vmem:[%s1 + $0x20] sm:$0xf]
      %v342 = vld [vmem:[%s4] sm:$0xf]
      %v343 = vld [vmem:[%s4 + $0x4] sm:$0xf]
      %v344 = vld [vmem:[%s4 + $0x8] sm:$0xf]
      %v345 = vld [vmem:[%s4 + $0xc] sm:$0xf]
      %v346 = vld [vmem:[%s4 + $0x10] sm:$0xf]
      %v347 = vld [vmem:[%s4 + $0x14] sm:$0xf]
      %v348 = vld [vmem:[%s4 + $0x18] sm:$0xf]
      %v349 = vld [vmem:[%s4 + $0x1c] sm:$0xf]
      %v350 = vld [vmem:[%s4 + $0x20] sm:$0xf]
      %vm399 = vcmask 1046528
      %v400 = vrot.slane %v279, 1
      %v401 = vrot.slane %v280, 1
      %v402 = vsel %vm399, %v400, %v401
      %v403 = vrot.slane %v281, 1
      %v404 = vsel %vm399, %v401, %v403
      %v405 = vrot.slane %v282, 1
      %v406 = vrot.slane %v283, 1
      %v407 = vsel %vm399, %v405, %v406
      %v408 = vrot.slane %v284, 1
      %v409 = vsel %vm399, %v406, %v408
      %v410 = vrot.slane %v285, 1
      %v411 = vrot.slane %v286, 1
      %v412 = vsel %vm399, %v410, %v411
      %v413 = vrot.slane %v287, 1
      %v414 = vsel %vm399, %v411, %v413
      %v415 = vrot.slane %v288, 1
      %v416 = vrot.slane %v289, 1
      %v417 = vsel %vm399, %v415, %v416
      %v418 = vrot.slane %v290, 1
      %v419 = vsel %vm399, %v416, %v418
      %v420 = vrot.slane %v291, 1
      %v421 = vrot.slane %v292, 1
      %v422 = vsel %vm399, %v420, %v421
      %v423 = vrot.slane %v293, 1
      %v424 = vsel %vm399, %v421, %v423
      %v425 = vrot.slane %v294, 1
      %v426 = vrot.slane %v295, 1
      %v427 = vsel %vm399, %v425, %v426
      %v428 = vrot.slane %v296, 1
      %v429 = vsel %vm399, %v426, %v428
      %v430 = vrot.slane %v297, 1
      %v431 = vrot.slane %v298, 1
      %v432 = vsel %vm399, %v430, %v431
      %v433 = vrot.slane %v299, 1
      %v434 = vsel %vm399, %v431, %v433
      %v435 = vrot.slane %v300, 1
      %v436 = vrot.slane %v301, 1
      %v437 = vsel %vm399, %v435, %v436
      %v438 = vrot.slane %v302, 1
      %v439 = vsel %vm399, %v436, %v438
      %v440 = vrot.slane %v303, 1
      %v441 = vrot.slane %v304, 1
      %v442 = vsel %vm399, %v440, %v441
      %v443 = vrot.slane %v305, 1
      %v444 = vsel %vm399, %v441, %v443
      %v445 = vrot.slane %v306, 1
      %v446 = vrot.slane %v307, 1
      %v447 = vsel %vm399, %v445, %v446
      %v448 = vrot.slane %v308, 1
      %v449 = vsel %vm399, %v446, %v448
      %v450 = vrot.slane %v309, 1
      %v451 = vrot.slane %v310, 1
      %v452 = vsel %vm399, %v450, %v451
      %v453 = vrot.slane %v311, 1
      %v454 = vsel %vm399, %v451, %v453
      %v455 = vrot.slane %v312, 1
      %v456 = vrot.slane %v313, 1
      %v457 = vsel %vm399, %v455, %v456
      %v458 = vrot.slane %v314, 1
      %v459 = vsel %vm399, %v456, %v458
      %v460 = vrot.slane %v315, 1
      %v461 = vrot.slane %v316, 1
      %v462 = vsel %vm399, %v460, %v461
      %v463 = vrot.slane %v317, 1
      %v464 = vsel %vm399, %v461, %v463
      %v465 = vrot.slane %v318, 1
      %v466 = vrot.slane %v319, 1
      %v467 = vsel %vm399, %v465, %v466
      %v468 = vrot.slane %v320, 1
      %v469 = vsel %vm399, %v466, %v468
      %v470 = vrot.slane %v321, 1
      %v471 = vrot.slane %v322, 1
      %v472 = vsel %vm399, %v470, %v471
      %v473 = vrot.slane %v323, 1
      %v474 = vsel %vm399, %v471, %v473
      %v475 = vrot.slane %v324, 1
      %v476 = vrot.slane %v325, 1
      %v477 = vsel %vm399, %v475, %v476
      %v478 = vrot.slane %v326, 1
      %v479 = vsel %vm399, %v476, %v478
      %vm480 = vcmask 31744
      %v481 = vsel %vm480, %v402, 0
      %v483 = vsel %vm480, %v404, 0
      %v485 = vsel %vm480, %v407, 0
      %v487 = vsel %vm480, %v409, 0
      %v489 = vsel %vm480, %v412, 0
      %v491 = vsel %vm480, %v414, 0
      %v493 = vsel %vm480, %v417, 0
      %v495 = vsel %vm480, %v419, 0
      %v497 = vsel %vm480, %v422, 0
      %v499 = vsel %vm480, %v424, 0
      %v501 = vsel %vm480, %v427, 0
      %v503 = vsel %vm480, %v429, 0
      %v505 = vsel %vm480, %v432, 0
      %v507 = vsel %vm480, %v434, 0
      %v509 = vsel %vm480, %v437, 0
      %v511 = vsel %vm480, %v439, 0
      %v513 = vsel %vm480, %v442, 0
      %v515 = vsel %vm480, %v444, 0
      %v517 = vsel %vm480, %v447, 0
      %v519 = vsel %vm480, %v449, 0
      %v521 = vsel %vm480, %v452, 0
      %v523 = vsel %vm480, %v454, 0
      %v525 = vsel %vm480, %v457, 0
      %v527 = vsel %vm480, %v459, 0
      %v529 = vsel %vm480, %v462, 0
      %v531 = vsel %vm480, %v464, 0
      %v533 = vsel %vm480, %v467, 0
      %v535 = vsel %vm480, %v469, 0
      %v537 = vsel %vm480, %v472, 0
      %v539 = vsel %vm480, %v474, 0
      %v541 = vsel %vm480, %v477, 0
      %v543 = vsel %vm480, %v479, 0
      %vm545 = vcmask 1043456
      %v547 = vsel %vm545, %v334, 0
      %549 = vmatpush.msra.mxu0 0.0
      %550 = vmatpush.msra.mxu0 0.0
      %551 = vmatpush.msra.mxu0 0.0
      %552 = vmatpush.msra.mxu0 0.0
      %553 = vmatpush.msra.mxu0 0.0
      %554 = vmatpush.msra.mxu0 0.0
      %555 = vmatpush.msra.mxu0 0.0
      %556 = vmatpush.msra.mxu0 0.0
      %557 = vmatpush.msra.mxu0 0.0
      %558 = vmatpush.msra.mxu0 0.0
      %559 = vmatpush.msra.mxu0 0.0
      %560 = vmatpush.msra.mxu0 0.0
      %561 = vmatpush.msra.mxu0 0.0
      %562 = vmatpush.msra.mxu0 0.0
      %563 = vmatpush.msra.mxu0 0.0
      %564 = vmatpush.msra.mxu0 %v547
      %565 = vmatmul.f32.gmra.mxu0 %v481
      %v566 = vpop.f32.mrf.mxu0
      %v567 = vadd.f32 0.0, %v566
      %568 = vmatmul.f32.gmra.mxu0 %v483
      %v569 = vpop.f32.mrf.mxu0
      %v570 = vadd.f32 0.0, %v569
      %571 = vmatmul.f32.gmra.mxu0 %v485
      %v572 = vpop.f32.mrf.mxu0
      %v573 = vadd.f32 0.0, %v572
      %574 = vmatmul.f32.gmra.mxu0 %v487
      %v575 = vpop.f32.mrf.mxu0
      %v576 = vadd.f32 0.0, %v575
      %577 = vmatmul.f32.gmra.mxu0 %v489
      %v578 = vpop.f32.mrf.mxu0
      %v579 = vadd.f32 0.0, %v578
      %580 = vmatmul.f32.gmra.mxu0 %v491
      %v581 = vpop.f32.mrf.mxu0
      %v582 = vadd.f32 0.0, %v581
      %583 = vmatmul.f32.gmra.mxu0 %v493
      %v584 = vpop.f32.mrf.mxu0
      %v585 = vadd.f32 0.0, %v584
      %586 = vmatmul.f32.gmra.mxu0 %v495
      %v587 = vpop.f32.mrf.mxu0
      %v588 = vadd.f32 0.0, %v587
      %589 = vmatmul.f32.gmra.mxu0 %v497
      %v590 = vpop.f32.mrf.mxu0
      %v591 = vadd.f32 0.0, %v590
      %592 = vmatmul.f32.gmra.mxu0 %v499
      %v593 = vpop.f32.mrf.mxu0
      %v594 = vadd.f32 0.0, %v593
      %595 = vmatmul.f32.gmra.mxu0 %v501
      %v596 = vpop.f32.mrf.mxu0
      %v597 = vadd.f32 0.0, %v596
      %598 = vmatmul.f32.gmra.mxu0 %v503
      %v599 = vpop.f32.mrf.mxu0
      %v600 = vadd.f32 0.0, %v599
      %601 = vmatmul.f32.gmra.mxu0 %v505
      %v602 = vpop.f32.mrf.mxu0
      %v603 = vadd.f32 0.0, %v602
      %604 = vmatmul.f32.gmra.mxu0 %v507
      %v605 = vpop.f32.mrf.mxu0
      %v606 = vadd.f32 0.0, %v605
      %607 = vmatmul.f32.gmra.mxu0 %v509
      %v608 = vpop.f32.mrf.mxu0
      %v609 = vadd.f32 0.0, %v608
      %610 = vmatmul.f32.gmra.mxu0 %v511
      %v611 = vpop.f32.mrf.mxu0
      %v612 = vadd.f32 0.0, %v611
      %613 = vmatmul.f32.gmra.mxu0 %v513
      %v614 = vpop.f32.mrf.mxu0
      %v615 = vadd.f32 0.0, %v614
      %616 = vmatmul.f32.gmra.mxu0 %v515
      %v617 = vpop.f32.mrf.mxu0
      %v618 = vadd.f32 0.0, %v617
      %619 = vmatmul.f32.gmra.mxu0 %v517
      %v620 = vpop.f32.mrf.mxu0
      %v621 = vadd.f32 0.0, %v620
      %622 = vmatmul.f32.gmra.mxu0 %v519
      %v623 = vpop.f32.mrf.mxu0
      %v624 = vadd.f32 0.0, %v623
      %625 = vmatmul.f32.gmra.mxu0 %v521
      %v626 = vpop.f32.mrf.mxu0
      %v627 = vadd.f32 0.0, %v626
      %628 = vmatmul.f32.gmra.mxu0 %v523
      %v629 = vpop.f32.mrf.mxu0
      %v630 = vadd.f32 0.0, %v629
      %631 = vmatmul.f32.gmra.mxu0 %v525
      %v632 = vpop.f32.mrf.mxu0
      %v633 = vadd.f32 0.0, %v632
      %634 = vmatmul.f32.gmra.mxu0 %v527
      %v635 = vpop.f32.mrf.mxu0
      %v636 = vadd.f32 0.0, %v635
      %637 = vmatmul.f32.gmra.mxu0 %v529
      %v638 = vpop.f32.mrf.mxu0
      %v639 = vadd.f32 0.0, %v638
      %640 = vmatmul.f32.gmra.mxu0 %v531
      %v641 = vpop.f32.mrf.mxu0
      %v642 = vadd.f32 0.0, %v641
      %643 = vmatmul.f32.gmra.mxu0 %v533
      %v644 = vpop.f32.mrf.mxu0
      %v645 = vadd.f32 0.0, %v644
      %646 = vmatmul.f32.gmra.mxu0 %v535
      %v647 = vpop.f32.mrf.mxu0
      %v648 = vadd.f32 0.0, %v647
      %649 = vmatmul.f32.gmra.mxu0 %v537
      %v650 = vpop.f32.mrf.mxu0
      %v651 = vadd.f32 0.0, %v650
      %652 = vmatmul.f32.gmra.mxu0 %v539
      %v653 = vpop.f32.mrf.mxu0
      %v654 = vadd.f32 0.0, %v653
      %655 = vmatmul.f32.gmra.mxu0 %v541
      %v656 = vpop.f32.mrf.mxu0
      %v657 = vadd.f32 0.0, %v656
      %658 = vmatmul.f32.gmra.mxu0 %v543
      %v659 = vpop.f32.mrf.mxu0
      %v660 = vadd.f32 0.0, %v659
      %661 = vdwg.mxu0
      %v662 = vsel %vm480, %v279, 0
      %v664 = vsel %vm480, %v280, 0
      %v666 = vsel %vm480, %v282, 0
      %v668 = vsel %vm480, %v283, 0
      %v670 = vsel %vm480, %v285, 0
      %v672 = vsel %vm480, %v286, 0
      %v674 = vsel %vm480, %v288, 0
      %v676 = vsel %vm480, %v289, 0
      %v678 = vsel %vm480, %v291, 0
      %v680 = vsel %vm480, %v292, 0
      %v682 = vsel %vm480, %v294, 0
      %v684 = vsel %vm480, %v295, 0
      %v686 = vsel %vm480, %v297, 0
      %v688 = vsel %vm480, %v298, 0
      %v690 = vsel %vm480, %v300, 0
      %v692 = vsel %vm480, %v301, 0
      %v694 = vsel %vm480, %v303, 0
      %v696 = vsel %vm480, %v304, 0
      %v698 = vsel %vm480, %v306, 0
      %v700 = vsel %vm480, %v307, 0
      %v702 = vsel %vm480, %v309, 0
      %v704 = vsel %vm480, %v310, 0
      %v706 = vsel %vm480, %v312, 0
      %v708 = vsel %vm480, %v313, 0
      %v710 = vsel %vm480, %v315, 0
      %v712 = vsel %vm480, %v316, 0
      %v714 = vsel %vm480, %v318, 0
      %v716 = vsel %vm480, %v319, 0
      %v718 = vsel %vm480, %v321, 0
      %v720 = vsel %vm480, %v322, 0
      %v722 = vsel %vm480, %v324, 0
      %v724 = vsel %vm480, %v325, 0
      %v727 = vsel %vm545, %v333, 0
      %729 = vmatpush.msra.mxu0 0.0
      %730 = vmatpush.msra.mxu0 0.0
      %731 = vmatpush.msra.mxu0 0.0
      %732 = vmatpush.msra.mxu0 0.0
      %733 = vmatpush.msra.mxu0 0.0
      %734 = vmatpush.msra.mxu0 0.0
      %735 = vmatpush.msra.mxu0 0.0
      %736 = vmatpush.msra.mxu0 0.0
      %737 = vmatpush.msra.mxu0 0.0
      %738 = vmatpush.msra.mxu0 0.0
      %739 = vmatpush.msra.mxu0 0.0
      %740 = vmatpush.msra.mxu0 0.0
      %741 = vmatpush.msra.mxu0 0.0
      %742 = vmatpush.msra.mxu0 0.0
      %743 = vmatpush.msra.mxu0 0.0
      %744 = vmatpush.msra.mxu0 %v727
      %745 = vmatmul.f32.gmra.mxu0 %v662
      %v746 = vpop.f32.mrf.mxu0
      %v747 = vadd.f32 %v567, %v746
      %748 = vmatmul.f32.gmra.mxu0 %v664
      %v749 = vpop.f32.mrf.mxu0
      %v750 = vadd.f32 %v570, %v749
      %751 = vmatmul.f32.gmra.mxu0 %v666
      %v752 = vpop.f32.mrf.mxu0
      %v753 = vadd.f32 %v573, %v752
      %754 = vmatmul.f32.gmra.mxu0 %v668
      %v755 = vpop.f32.mrf.mxu0
      %v756 = vadd.f32 %v576, %v755
      %757 = vmatmul.f32.gmra.mxu0 %v670
      %v758 = vpop.f32.mrf.mxu0
      %v759 = vadd.f32 %v579, %v758
      %760 = vmatmul.f32.gmra.mxu0 %v672
      %v761 = vpop.f32.mrf.mxu0
      %v762 = vadd.f32 %v582, %v761
      %763 = vmatmul.f32.gmra.mxu0 %v674
      %v764 = vpop.f32.mrf.mxu0
      %v765 = vadd.f32 %v585, %v764
      %766 = vmatmul.f32.gmra.mxu0 %v676
      %v767 = vpop.f32.mrf.mxu0
      %v768 = vadd.f32 %v588, %v767
      %769 = vmatmul.f32.gmra.mxu0 %v678
      %v770 = vpop.f32.mrf.mxu0
      %v771 = vadd.f32 %v591, %v770
      %772 = vmatmul.f32.gmra.mxu0 %v680
      %v773 = vpop.f32.mrf.mxu0
      %v774 = vadd.f32 %v594, %v773
      %775 = vmatmul.f32.gmra.mxu0 %v682
      %v776 = vpop.f32.mrf.mxu0
      %v777 = vadd.f32 %v597, %v776
      %778 = vmatmul.f32.gmra.mxu0 %v684
      %v779 = vpop.f32.mrf.mxu0
      %v780 = vadd.f32 %v600, %v779
      %781 = vmatmul.f32.gmra.mxu0 %v686
      %v782 = vpop.f32.mrf.mxu0
      %v783 = vadd.f32 %v603, %v782
      %784 = vmatmul.f32.gmra.mxu0 %v688
      %v785 = vpop.f32.mrf.mxu0
      %v786 = vadd.f32 %v606, %v785
      %787 = vmatmul.f32.gmra.mxu0 %v690
      %v788 = vpop.f32.mrf.mxu0
      %v789 = vadd.f32 %v609, %v788
      %790 = vmatmul.f32.gmra.mxu0 %v692
      %v791 = vpop.f32.mrf.mxu0
      %v792 = vadd.f32 %v612, %v791
      %793 = vmatmul.f32.gmra.mxu0 %v694
      %v794 = vpop.f32.mrf.mxu0
      %v795 = vadd.f32 %v615, %v794
      %796 = vmatmul.f32.gmra.mxu0 %v696
      %v797 = vpop.f32.mrf.mxu0
      %v798 = vadd.f32 %v618, %v797
      %799 = vmatmul.f32.gmra.mxu0 %v698
      %v800 = vpop.f32.mrf.mxu0
      %v801 = vadd.f32 %v621, %v800
      %802 = vmatmul.f32.gmra.mxu0 %v700
      %v803 = vpop.f32.mrf.mxu0
      %v804 = vadd.f32 %v624, %v803
      %805 = vmatmul.f32.gmra.mxu0 %v702
      %v806 = vpop.f32.mrf.mxu0
      %v807 = vadd.f32 %v627, %v806
      %808 = vmatmul.f32.gmra.mxu0 %v704
      %v809 = vpop.f32.mrf.mxu0
      %v810 = vadd.f32 %v630, %v809
      %811 = vmatmul.f32.gmra.mxu0 %v706
      %v812 = vpop.f32.mrf.mxu0
      %v813 = vadd.f32 %v633, %v812
      %814 = vmatmul.f32.gmra.mxu0 %v708
      %v815 = vpop.f32.mrf.mxu0
      %v816 = vadd.f32 %v636, %v815
      %817 = vmatmul.f32.gmra.mxu0 %v710
      %v818 = vpop.f32.mrf.mxu0
      %v819 = vadd.f32 %v639, %v818
      %820 = vmatmul.f32.gmra.mxu0 %v712
      %v821 = vpop.f32.mrf.mxu0
      %v822 = vadd.f32 %v642, %v821
      %823 = vmatmul.f32.gmra.mxu0 %v714
      %v824 = vpop.f32.mrf.mxu0
      %v825 = vadd.f32 %v645, %v824
      %826 = vmatmul.f32.gmra.mxu0 %v716
      %v827 = vpop.f32.mrf.mxu0
      %v828 = vadd.f32 %v648, %v827
      %829 = vmatmul.f32.gmra.mxu0 %v718
      %v830 = vpop.f32.mrf.mxu0
      %v831 = vadd.f32 %v651, %v830
      %832 = vmatmul.f32.gmra.mxu0 %v720
      %v833 = vpop.f32.mrf.mxu0
      %v834 = vadd.f32 %v654, %v833
      %835 = vmatmul.f32.gmra.mxu0 %v722
      %v836 = vpop.f32.mrf.mxu0
      %v837 = vadd.f32 %v657, %v836
      %838 = vmatmul.f32.gmra.mxu0 %v724
      %v839 = vpop.f32.mrf.mxu0
      %v840 = vadd.f32 %v660, %v839
      %841 = vdwg.mxu0
      %vm842 = vcmask 1045504
      %v843 = vrot.slane %v279, 2
      %v844 = vrot.slane %v280, 2
      %v845 = vsel %vm842, %v843, %v844
      %v846 = vrot.slane %v281, 2
      %v847 = vsel %vm842, %v844, %v846
      %v848 = vrot.slane %v282, 2
      %v849 = vrot.slane %v283, 2
      %v850 = vsel %vm842, %v848, %v849
      %v851 = vrot.slane %v284, 2
      %v852 = vsel %vm842, %v849, %v851
      %v853 = vrot.slane %v285, 2
      %v854 = vrot.slane %v286, 2
      %v855 = vsel %vm842, %v853, %v854
      %v856 = vrot.slane %v287, 2
      %v857 = vsel %vm842, %v854, %v856
      %v858 = vrot.slane %v288, 2
      %v859 = vrot.slane %v289, 2
      %v860 = vsel %vm842, %v858, %v859
      %v861 = vrot.slane %v290, 2
      %v862 = vsel %vm842, %v859, %v861
      %v863 = vrot.slane %v291, 2
      %v864 = vrot.slane %v292, 2
      %v865 = vsel %vm842, %v863, %v864
      %v866 = vrot.slane %v293, 2
      %v867 = vsel %vm842, %v864, %v866
      %v868 = vrot.slane %v294, 2
      %v869 = vrot.slane %v295, 2
      %v870 = vsel %vm842, %v868, %v869
      %v871 = vrot.slane %v296, 2
      %v872 = vsel %vm842, %v869, %v871
      %v873 = vrot.slane %v297, 2
      %v874 = vrot.slane %v298, 2
      %v875 = vsel %vm842, %v873, %v874
      %v876 = vrot.slane %v299, 2
      %v877 = vsel %vm842, %v874, %v876
      %v878 = vrot.slane %v300, 2
      %v879 = vrot.slane %v301, 2
      %v880 = vsel %vm842, %v878, %v879
      %v881 = vrot.slane %v302, 2
      %v882 = vsel %vm842, %v879, %v881
      %v883 = vrot.slane %v303, 2
      %v884 = vrot.slane %v304, 2
      %v885 = vsel %vm842, %v883, %v884
      %v886 = vrot.slane %v305, 2
      %v887 = vsel %vm842, %v884, %v886
      %v888 = vrot.slane %v306, 2
      %v889 = vrot.slane %v307, 2
      %v890 = vsel %vm842, %v888, %v889
      %v891 = vrot.slane %v308, 2
      %v892 = vsel %vm842, %v889, %v891
      %v893 = vrot.slane %v309, 2
      %v894 = vrot.slane %v310, 2
      %v895 = vsel %vm842, %v893, %v894
      %v896 = vrot.slane %v311, 2
      %v897 = vsel %vm842, %v894, %v896
      %v898 = vrot.slane %v312, 2
      %v899 = vrot.slane %v313, 2
      %v900 = vsel %vm842, %v898, %v899
      %v901 = vrot.slane %v314, 2
      %v902 = vsel %vm842, %v899, %v901
      %v903 = vrot.slane %v315, 2
      %v904 = vrot.slane %v316, 2
      %v905 = vsel %vm842, %v903, %v904
      %v906 = vrot.slane %v317, 2
      %v907 = vsel %vm842, %v904, %v906
      %v908 = vrot.slane %v318, 2
      %v909 = vrot.slane %v319, 2
      %v910 = vsel %vm842, %v908, %v909
      %v911 = vrot.slane %v320, 2
      %v912 = vsel %vm842, %v909, %v911
      %v913 = vrot.slane %v321, 2
      %v914 = vrot.slane %v322, 2
      %v915 = vsel %vm842, %v913, %v914
      %v916 = vrot.slane %v323, 2
      %v917 = vsel %vm842, %v914, %v916
      %v918 = vrot.slane %v324, 2
      %v919 = vrot.slane %v325, 2
      %v920 = vsel %vm842, %v918, %v919
      %v921 = vrot.slane %v326, 2
      %v922 = vsel %vm842, %v919, %v921
      %v923 = vsel %vm480, %v845, 0
      %v925 = vsel %vm480, %v847, 0
      %v927 = vsel %vm480, %v850, 0
      %v929 = vsel %vm480, %v852, 0
      %v931 = vsel %vm480, %v855, 0
      %v933 = vsel %vm480, %v857, 0
      %v935 = vsel %vm480, %v860, 0
      %v937 = vsel %vm480, %v862, 0
      %v939 = vsel %vm480, %v865, 0
      %v941 = vsel %vm480, %v867, 0
      %v943 = vsel %vm480, %v870, 0
      %v945 = vsel %vm480, %v872, 0
      %v947 = vsel %vm480, %v875, 0
      %v949 = vsel %vm480, %v877, 0
      %v951 = vsel %vm480, %v880, 0
      %v953 = vsel %vm480, %v882, 0
      %v955 = vsel %vm480, %v885, 0
      %v957 = vsel %vm480, %v887, 0
      %v959 = vsel %vm480, %v890, 0
      %v961 = vsel %vm480, %v892, 0
      %v963 = vsel %vm480, %v895, 0
      %v965 = vsel %vm480, %v897, 0
      %v967 = vsel %vm480, %v900, 0
      %v969 = vsel %vm480, %v902, 0
      %v971 = vsel %vm480, %v905, 0
      %v973 = vsel %vm480, %v907, 0
      %v975 = vsel %vm480, %v910, 0
      %v977 = vsel %vm480, %v912, 0
      %v979 = vsel %vm480, %v915, 0
      %v981 = vsel %vm480, %v917, 0
      %v983 = vsel %vm480, %v920, 0
      %v985 = vsel %vm480, %v922, 0
      %v988 = vsel %vm545, %v335, 0
      %990 = vmatpush.msra.mxu0 0.0
      %991 = vmatpush.msra.mxu0 0.0
      %992 = vmatpush.msra.mxu0 0.0
      %993 = vmatpush.msra.mxu0 0.0
      %994 = vmatpush.msra.mxu0 0.0
      %995 = vmatpush.msra.mxu0 0.0
      %996 = vmatpush.msra.mxu0 0.0
      %997 = vmatpush.msra.mxu0 0.0
      %998 = vmatpush.msra.mxu0 0.0
      %999 = vmatpush.msra.mxu0 0.0
      %1000 = vmatpush.msra.mxu0 0.0
      %1001 = vmatpush.msra.mxu0 0.0
      %1002 = vmatpush.msra.mxu0 0.0
      %1003 = vmatpush.msra.mxu0 0.0
      %1004 = vmatpush.msra.mxu0 0.0
      %1005 = vmatpush.msra.mxu0 %v988
      %1006 = vmatmul.f32.gmra.mxu0 %v923
      %v1007 = vpop.f32.mrf.mxu0
      %v1008 = vadd.f32 0.0, %v1007
      %1009 = vmatmul.f32.gmra.mxu0 %v925
      %v1010 = vpop.f32.mrf.mxu0
      %v1011 = vadd.f32 0.0, %v1010
      %1012 = vmatmul.f32.gmra.mxu0 %v927
      %v1013 = vpop.f32.mrf.mxu0
      %v1014 = vadd.f32 0.0, %v1013
      %1015 = vmatmul.f32.gmra.mxu0 %v929
      %v1016 = vpop.f32.mrf.mxu0
      %v1017 = vadd.f32 0.0, %v1016
      %1018 = vmatmul.f32.gmra.mxu0 %v931
      %v1019 = vpop.f32.mrf.mxu0
      %v1020 = vadd.f32 0.0, %v1019
      %1021 = vmatmul.f32.gmra.mxu0 %v933
      %v1022 = vpop.f32.mrf.mxu0
      %v1023 = vadd.f32 0.0, %v1022
      %1024 = vmatmul.f32.gmra.mxu0 %v935
      %v1025 = vpop.f32.mrf.mxu0
      %v1026 = vadd.f32 0.0, %v1025
      %1027 = vmatmul.f32.gmra.mxu0 %v937
      %v1028 = vpop.f32.mrf.mxu0
      %v1029 = vadd.f32 0.0, %v1028
      %1030 = vmatmul.f32.gmra.mxu0 %v939
      %v1031 = vpop.f32.mrf.mxu0
      %v1032 = vadd.f32 0.0, %v1031
      %1033 = vmatmul.f32.gmra.mxu0 %v941
      %v1034 = vpop.f32.mrf.mxu0
      %v1035 = vadd.f32 0.0, %v1034
      %1036 = vmatmul.f32.gmra.mxu0 %v943
      %v1037 = vpop.f32.mrf.mxu0
      %v1038 = vadd.f32 0.0, %v1037
      %1039 = vmatmul.f32.gmra.mxu0 %v945
      %v1040 = vpop.f32.mrf.mxu0
      %v1041 = vadd.f32 0.0, %v1040
      %1042 = vmatmul.f32.gmra.mxu0 %v947
      %v1043 = vpop.f32.mrf.mxu0
      %v1044 = vadd.f32 0.0, %v1043
      %1045 = vmatmul.f32.gmra.mxu0 %v949
      %v1046 = vpop.f32.mrf.mxu0
      %v1047 = vadd.f32 0.0, %v1046
      %1048 = vmatmul.f32.gmra.mxu0 %v951
      %v1049 = vpop.f32.mrf.mxu0
      %v1050 = vadd.f32 0.0, %v1049
      %1051 = vmatmul.f32.gmra.mxu0 %v953
      %v1052 = vpop.f32.mrf.mxu0
      %v1053 = vadd.f32 0.0, %v1052
      %1054 = vmatmul.f32.gmra.mxu0 %v955
      %v1055 = vpop.f32.mrf.mxu0
      %v1056 = vadd.f32 0.0, %v1055
      %1057 = vmatmul.f32.gmra.mxu0 %v957
      %v1058 = vpop.f32.mrf.mxu0
      %v1059 = vadd.f32 0.0, %v1058
      %1060 = vmatmul.f32.gmra.mxu0 %v959
      %v1061 = vpop.f32.mrf.mxu0
      %v1062 = vadd.f32 0.0, %v1061
      %1063 = vmatmul.f32.gmra.mxu0 %v961
      %v1064 = vpop.f32.mrf.mxu0
      %v1065 = vadd.f32 0.0, %v1064
      %1066 = vmatmul.f32.gmra.mxu0 %v963
      %v1067 = vpop.f32.mrf.mxu0
      %v1068 = vadd.f32 0.0, %v1067
      %1069 = vmatmul.f32.gmra.mxu0 %v965
      %v1070 = vpop.f32.mrf.mxu0
      %v1071 = vadd.f32 0.0, %v1070
      %1072 = vmatmul.f32.gmra.mxu0 %v967
      %v1073 = vpop.f32.mrf.mxu0
      %v1074 = vadd.f32 0.0, %v1073
      %1075 = vmatmul.f32.gmra.mxu0 %v969
      %v1076 = vpop.f32.mrf.mxu0
      %v1077 = vadd.f32 0.0, %v1076
      %1078 = vmatmul.f32.gmra.mxu0 %v971
      %v1079 = vpop.f32.mrf.mxu0
      %v1080 = vadd.f32 0.0, %v1079
      %1081 = vmatmul.f32.gmra.mxu0 %v973
      %v1082 = vpop.f32.mrf.mxu0
      %v1083 = vadd.f32 0.0, %v1082
      %1084 = vmatmul.f32.gmra.mxu0 %v975
      %v1085 = vpop.f32.mrf.mxu0
      %v1086 = vadd.f32 0.0, %v1085
      %1087 = vmatmul.f32.gmra.mxu0 %v977
      %v1088 = vpop.f32.mrf.mxu0
      %v1089 = vadd.f32 0.0, %v1088
      %1090 = vmatmul.f32.gmra.mxu0 %v979
      %v1091 = vpop.f32.mrf.mxu0
      %v1092 = vadd.f32 0.0, %v1091
      %1093 = vmatmul.f32.gmra.mxu0 %v981
      %v1094 = vpop.f32.mrf.mxu0
      %v1095 = vadd.f32 0.0, %v1094
      %1096 = vmatmul.f32.gmra.mxu0 %v983
      %v1097 = vpop.f32.mrf.mxu0
      %v1098 = vadd.f32 0.0, %v1097
      %1099 = vmatmul.f32.gmra.mxu0 %v985
      %v1100 = vpop.f32.mrf.mxu0
      %v1101 = vadd.f32 0.0, %v1100
      %1102 = vdwg.mxu0
      %v1103 = vadd.f32 %v747, %v1008
      %v1104 = vadd.f32 %v750, %v1011
      %v1105 = vadd.f32 %v753, %v1014
      %v1106 = vadd.f32 %v756, %v1017
      %v1107 = vadd.f32 %v759, %v1020
      %v1108 = vadd.f32 %v762, %v1023
      %v1109 = vadd.f32 %v765, %v1026
      %v1110 = vadd.f32 %v768, %v1029
      %v1111 = vadd.f32 %v771, %v1032
      %v1112 = vadd.f32 %v774, %v1035
      %v1113 = vadd.f32 %v777, %v1038
      %v1114 = vadd.f32 %v780, %v1041
      %v1115 = vadd.f32 %v783, %v1044
      %v1116 = vadd.f32 %v786, %v1047
      %v1117 = vadd.f32 %v789, %v1050
      %v1118 = vadd.f32 %v792, %v1053
      %v1119 = vadd.f32 %v795, %v1056
      %v1120 = vadd.f32 %v798, %v1059
      %v1121 = vadd.f32 %v801, %v1062
      %v1122 = vadd.f32 %v804, %v1065
      %v1123 = vadd.f32 %v807, %v1068
      %v1124 = vadd.f32 %v810, %v1071
      %v1125 = vadd.f32 %v813, %v1074
      %v1126 = vadd.f32 %v816, %v1077
      %v1127 = vadd.f32 %v819, %v1080
      %v1128 = vadd.f32 %v822, %v1083
      %v1129 = vadd.f32 %v825, %v1086
      %v1130 = vadd.f32 %v828, %v1089
      %v1131 = vadd.f32 %v831, %v1092
      %v1132 = vadd.f32 %v834, %v1095
      %v1133 = vadd.f32 %v837, %v1098
      %v1134 = vadd.f32 %v840, %v1101
      %v1136 = vsel %vm480, %v327, 0
      %v1139 = vsel %vm480, %v328, 0
      %v1142 = vsel %vm545, %v336, 0
      %1144 = vmatpush.msra.mxu0 0.0
      %1145 = vmatpush.msra.mxu0 0.0
      %1146 = vmatpush.msra.mxu0 0.0
      %1147 = vmatpush.msra.mxu0 0.0
      %1148 = vmatpush.msra.mxu0 0.0
      %1149 = vmatpush.msra.mxu0 0.0
      %1150 = vmatpush.msra.mxu0 0.0
      %1151 = vmatpush.msra.mxu0 0.0
      %1152 = vmatpush.msra.mxu0 0.0
      %1153 = vmatpush.msra.mxu0 0.0
      %1154 = vmatpush.msra.mxu0 0.0
      %1155 = vmatpush.msra.mxu0 0.0
      %1156 = vmatpush.msra.mxu0 0.0
      %1157 = vmatpush.msra.mxu0 0.0
      %1158 = vmatpush.msra.mxu0 0.0
      %1159 = vmatpush.msra.mxu0 %v1142
      %1160 = vmatmul.f32.gmra.mxu0 %v666
      %v1161 = vpop.f32.mrf.mxu0
      %v1162 = vadd.f32 0.0, %v1161
      %1163 = vmatmul.f32.gmra.mxu0 %v668
      %v1164 = vpop.f32.mrf.mxu0
      %v1165 = vadd.f32 0.0, %v1164
      %1166 = vmatmul.f32.gmra.mxu0 %v670
      %v1167 = vpop.f32.mrf.mxu0
      %v1168 = vadd.f32 0.0, %v1167
      %1169 = vmatmul.f32.gmra.mxu0 %v672
      %v1170 = vpop.f32.mrf.mxu0
      %v1171 = vadd.f32 0.0, %v1170
      %1172 = vmatmul.f32.gmra.mxu0 %v674
      %v1173 = vpop.f32.mrf.mxu0
      %v1174 = vadd.f32 0.0, %v1173
      %1175 = vmatmul.f32.gmra.mxu0 %v676
      %v1176 = vpop.f32.mrf.mxu0
      %v1177 = vadd.f32 0.0, %v1176
      %1178 = vmatmul.f32.gmra.mxu0 %v678
      %v1179 = vpop.f32.mrf.mxu0
      %v1180 = vadd.f32 0.0, %v1179
      %1181 = vmatmul.f32.gmra.mxu0 %v680
      %v1182 = vpop.f32.mrf.mxu0
      %v1183 = vadd.f32 0.0, %v1182
      %1184 = vmatmul.f32.gmra.mxu0 %v682
      %v1185 = vpop.f32.mrf.mxu0
      %v1186 = vadd.f32 0.0, %v1185
      %1187 = vmatmul.f32.gmra.mxu0 %v684
      %v1188 = vpop.f32.mrf.mxu0
      %v1189 = vadd.f32 0.0, %v1188
      %1190 = vmatmul.f32.gmra.mxu0 %v686
      %v1191 = vpop.f32.mrf.mxu0
      %v1192 = vadd.f32 0.0, %v1191
      %1193 = vmatmul.f32.gmra.mxu0 %v688
      %v1194 = vpop.f32.mrf.mxu0
      %v1195 = vadd.f32 0.0, %v1194
      %1196 = vmatmul.f32.gmra.mxu0 %v690
      %v1197 = vpop.f32.mrf.mxu0
      %v1198 = vadd.f32 0.0, %v1197
      %1199 = vmatmul.f32.gmra.mxu0 %v692
      %v1200 = vpop.f32.mrf.mxu0
      %v1201 = vadd.f32 0.0, %v1200
      %1202 = vmatmul.f32.gmra.mxu0 %v694
      %v1203 = vpop.f32.mrf.mxu0
      %v1204 = vadd.f32 0.0, %v1203
      %1205 = vmatmul.f32.gmra.mxu0 %v696
      %v1206 = vpop.f32.mrf.mxu0
      %v1207 = vadd.f32 0.0, %v1206
      %1208 = vmatmul.f32.gmra.mxu0 %v698
      %v1209 = vpop.f32.mrf.mxu0
      %v1210 = vadd.f32 0.0, %v1209
      %1211 = vmatmul.f32.gmra.mxu0 %v700
      %v1212 = vpop.f32.mrf.mxu0
      %v1213 = vadd.f32 0.0, %v1212
      %1214 = vmatmul.f32.gmra.mxu0 %v702
      %v1215 = vpop.f32.mrf.mxu0
      %v1216 = vadd.f32 0.0, %v1215
      %1217 = vmatmul.f32.gmra.mxu0 %v704
      %v1218 = vpop.f32.mrf.mxu0
      %v1219 = vadd.f32 0.0, %v1218
      %1220 = vmatmul.f32.gmra.mxu0 %v706
      %v1221 = vpop.f32.mrf.mxu0
      %v1222 = vadd.f32 0.0, %v1221
      %1223 = vmatmul.f32.gmra.mxu0 %v708
      %v1224 = vpop.f32.mrf.mxu0
      %v1225 = vadd.f32 0.0, %v1224
      %1226 = vmatmul.f32.gmra.mxu0 %v710
      %v1227 = vpop.f32.mrf.mxu0
      %v1228 = vadd.f32 0.0, %v1227
      %1229 = vmatmul.f32.gmra.mxu0 %v712
      %v1230 = vpop.f32.mrf.mxu0
      %v1231 = vadd.f32 0.0, %v1230
      %1232 = vmatmul.f32.gmra.mxu0 %v714
      %v1233 = vpop.f32.mrf.mxu0
      %v1234 = vadd.f32 0.0, %v1233
      %1235 = vmatmul.f32.gmra.mxu0 %v716
      %v1236 = vpop.f32.mrf.mxu0
      %v1237 = vadd.f32 0.0, %v1236
      %1238 = vmatmul.f32.gmra.mxu0 %v718
      %v1239 = vpop.f32.mrf.mxu0
      %v1240 = vadd.f32 0.0, %v1239
      %1241 = vmatmul.f32.gmra.mxu0 %v720
      %v1242 = vpop.f32.mrf.mxu0
      %v1243 = vadd.f32 0.0, %v1242
      %1244 = vmatmul.f32.gmra.mxu0 %v722
      %v1245 = vpop.f32.mrf.mxu0
      %v1246 = vadd.f32 0.0, %v1245
      %1247 = vmatmul.f32.gmra.mxu0 %v724
      %v1248 = vpop.f32.mrf.mxu0
      %v1249 = vadd.f32 0.0, %v1248
      %1250 = vmatmul.f32.gmra.mxu0 %v1136
      %v1251 = vpop.f32.mrf.mxu0
      %v1252 = vadd.f32 0.0, %v1251
      %1253 = vmatmul.f32.gmra.mxu0 %v1139
      %v1254 = vpop.f32.mrf.mxu0
      %v1255 = vadd.f32 0.0, %v1254
      %1256 = vdwg.mxu0
      %v1257 = vadd.f32 %v1103, %v1162
      %v1258 = vadd.f32 %v1104, %v1165
      %v1259 = vadd.f32 %v1105, %v1168
      %v1260 = vadd.f32 %v1106, %v1171
      %v1261 = vadd.f32 %v1107, %v1174
      %v1262 = vadd.f32 %v1108, %v1177
      %v1263 = vadd.f32 %v1109, %v1180
      %v1264 = vadd.f32 %v1110, %v1183
      %v1265 = vadd.f32 %v1111, %v1186
      %v1266 = vadd.f32 %v1112, %v1189
      %v1267 = vadd.f32 %v1113, %v1192
      %v1268 = vadd.f32 %v1114, %v1195
      %v1269 = vadd.f32 %v1115, %v1198
      %v1270 = vadd.f32 %v1116, %v1201
      %v1271 = vadd.f32 %v1117, %v1204
      %v1272 = vadd.f32 %v1118, %v1207
      %v1273 = vadd.f32 %v1119, %v1210
      %v1274 = vadd.f32 %v1120, %v1213
      %v1275 = vadd.f32 %v1121, %v1216
      %v1276 = vadd.f32 %v1122, %v1219
      %v1277 = vadd.f32 %v1123, %v1222
      %v1278 = vadd.f32 %v1124, %v1225
      %v1279 = vadd.f32 %v1125, %v1228
      %v1280 = vadd.f32 %v1126, %v1231
      %v1281 = vadd.f32 %v1127, %v1234
      %v1282 = vadd.f32 %v1128, %v1237
      %v1283 = vadd.f32 %v1129, %v1240
      %v1284 = vadd.f32 %v1130, %v1243
      %v1285 = vadd.f32 %v1131, %v1246
      %v1286 = vadd.f32 %v1132, %v1249
      %v1287 = vadd.f32 %v1133, %v1252
      %v1288 = vadd.f32 %v1134, %v1255
      %v1290 = vrot.slane %v327, 1
      %v1291 = vrot.slane %v328, 1
      %v1292 = vsel %vm399, %v1290, %v1291
      %v1293 = vrot.slane %v329, 1
      %v1294 = vsel %vm399, %v1291, %v1293
      %v1327 = vsel %vm480, %v1292, 0
      %v1329 = vsel %vm480, %v1294, 0
      %v1332 = vsel %vm545, %v337, 0
      %1334 = vmatpush.msra.mxu0 0.0
      %1335 = vmatpush.msra.mxu0 0.0
      %1336 = vmatpush.msra.mxu0 0.0
      %1337 = vmatpush.msra.mxu0 0.0
      %1338 = vmatpush.msra.mxu0 0.0
      %1339 = vmatpush.msra.mxu0 0.0
      %1340 = vmatpush.msra.mxu0 0.0
      %1341 = vmatpush.msra.mxu0 0.0
      %1342 = vmatpush.msra.mxu0 0.0
      %1343 = vmatpush.msra.mxu0 0.0
      %1344 = vmatpush.msra.mxu0 0.0
      %1345 = vmatpush.msra.mxu0 0.0
      %1346 = vmatpush.msra.mxu0 0.0
      %1347 = vmatpush.msra.mxu0 0.0
      %1348 = vmatpush.msra.mxu0 0.0
      %1349 = vmatpush.msra.mxu0 %v1332
      %1350 = vmatmul.f32.gmra.mxu0 %v485
      %v1351 = vpop.f32.mrf.mxu0
      %v1352 = vadd.f32 0.0, %v1351
      %1353 = vmatmul.f32.gmra.mxu0 %v487
      %v1354 = vpop.f32.mrf.mxu0
      %v1355 = vadd.f32 0.0, %v1354
      %1356 = vmatmul.f32.gmra.mxu0 %v489
      %v1357 = vpop.f32.mrf.mxu0
      %v1358 = vadd.f32 0.0, %v1357
      %1359 = vmatmul.f32.gmra.mxu0 %v491
      %v1360 = vpop.f32.mrf.mxu0
      %v1361 = vadd.f32 0.0, %v1360
      %1362 = vmatmul.f32.gmra.mxu0 %v493
      %v1363 = vpop.f32.mrf.mxu0
      %v1364 = vadd.f32 0.0, %v1363
      %1365 = vmatmul.f32.gmra.mxu0 %v495
      %v1366 = vpop.f32.mrf.mxu0
      %v1367 = vadd.f32 0.0, %v1366
      %1368 = vmatmul.f32.gmra.mxu0 %v497
      %v1369 = vpop.f32.mrf.mxu0
      %v1370 = vadd.f32 0.0, %v1369
      %1371 = vmatmul.f32.gmra.mxu0 %v499
      %v1372 = vpop.f32.mrf.mxu0
      %v1373 = vadd.f32 0.0, %v1372
      %1374 = vmatmul.f32.gmra.mxu0 %v501
      %v1375 = vpop.f32.mrf.mxu0
      %v1376 = vadd.f32 0.0, %v1375
      %1377 = vmatmul.f32.gmra.mxu0 %v503
      %v1378 = vpop.f32.mrf.mxu0
      %v1379 = vadd.f32 0.0, %v1378
      %1380 = vmatmul.f32.gmra.mxu0 %v505
      %v1381 = vpop.f32.mrf.mxu0
      %v1382 = vadd.f32 0.0, %v1381
      %1383 = vmatmul.f32.gmra.mxu0 %v507
      %v1384 = vpop.f32.mrf.mxu0
      %v1385 = vadd.f32 0.0, %v1384
      %1386 = vmatmul.f32.gmra.mxu0 %v509
      %v1387 = vpop.f32.mrf.mxu0
      %v1388 = vadd.f32 0.0, %v1387
      %1389 = vmatmul.f32.gmra.mxu0 %v511
      %v1390 = vpop.f32.mrf.mxu0
      %v1391 = vadd.f32 0.0, %v1390
      %1392 = vmatmul.f32.gmra.mxu0 %v513
      %v1393 = vpop.f32.mrf.mxu0
      %v1394 = vadd.f32 0.0, %v1393
      %1395 = vmatmul.f32.gmra.mxu0 %v515
      %v1396 = vpop.f32.mrf.mxu0
      %v1397 = vadd.f32 0.0, %v1396
      %1398 = vmatmul.f32.gmra.mxu0 %v517
      %v1399 = vpop.f32.mrf.mxu0
      %v1400 = vadd.f32 0.0, %v1399
      %1401 = vmatmul.f32.gmra.mxu0 %v519
      %v1402 = vpop.f32.mrf.mxu0
      %v1403 = vadd.f32 0.0, %v1402
      %1404 = vmatmul.f32.gmra.mxu0 %v521
      %v1405 = vpop.f32.mrf.mxu0
      %v1406 = vadd.f32 0.0, %v1405
      %1407 = vmatmul.f32.gmra.mxu0 %v523
      %v1408 = vpop.f32.mrf.mxu0
      %v1409 = vadd.f32 0.0, %v1408
      %1410 = vmatmul.f32.gmra.mxu0 %v525
      %v1411 = vpop.f32.mrf.mxu0
      %v1412 = vadd.f32 0.0, %v1411
      %1413 = vmatmul.f32.gmra.mxu0 %v527
      %v1414 = vpop.f32.mrf.mxu0
      %v1415 = vadd.f32 0.0, %v1414
      %1416 = vmatmul.f32.gmra.mxu0 %v529
      %v1417 = vpop.f32.mrf.mxu0
      %v1418 = vadd.f32 0.0, %v1417
      %1419 = vmatmul.f32.gmra.mxu0 %v531
      %v1420 = vpop.f32.mrf.mxu0
      %v1421 = vadd.f32 0.0, %v1420
      %1422 = vmatmul.f32.gmra.mxu0 %v533
      %v1423 = vpop.f32.mrf.mxu0
      %v1424 = vadd.f32 0.0, %v1423
      %1425 = vmatmul.f32.gmra.mxu0 %v535
      %v1426 = vpop.f32.mrf.mxu0
      %v1427 = vadd.f32 0.0, %v1426
      %1428 = vmatmul.f32.gmra.mxu0 %v537
      %v1429 = vpop.f32.mrf.mxu0
      %v1430 = vadd.f32 0.0, %v1429
      %1431 = vmatmul.f32.gmra.mxu0 %v539
      %v1432 = vpop.f32.mrf.mxu0
      %v1433 = vadd.f32 0.0, %v1432
      %1434 = vmatmul.f32.gmra.mxu0 %v541
      %v1435 = vpop.f32.mrf.mxu0
      %v1436 = vadd.f32 0.0, %v1435
      %1437 = vmatmul.f32.gmra.mxu0 %v543
      %v1438 = vpop.f32.mrf.mxu0
      %v1439 = vadd.f32 0.0, %v1438
      %1440 = vmatmul.f32.gmra.mxu0 %v1327
      %v1441 = vpop.f32.mrf.mxu0
      %v1442 = vadd.f32 0.0, %v1441
      %1443 = vmatmul.f32.gmra.mxu0 %v1329
      %v1444 = vpop.f32.mrf.mxu0
      %v1445 = vadd.f32 0.0, %v1444
      %1446 = vdwg.mxu0
      %v1447 = vadd.f32 %v1257, %v1352
      %v1448 = vadd.f32 %v1258, %v1355
      %v1449 = vadd.f32 %v1259, %v1358
      %v1450 = vadd.f32 %v1260, %v1361
      %v1451 = vadd.f32 %v1261, %v1364
      %v1452 = vadd.f32 %v1262, %v1367
      %v1453 = vadd.f32 %v1263, %v1370
      %v1454 = vadd.f32 %v1264, %v1373
      %v1455 = vadd.f32 %v1265, %v1376
      %v1456 = vadd.f32 %v1266, %v1379
      %v1457 = vadd.f32 %v1267, %v1382
      %v1458 = vadd.f32 %v1268, %v1385
      %v1459 = vadd.f32 %v1269, %v1388
      %v1460 = vadd.f32 %v1270, %v1391
      %v1461 = vadd.f32 %v1271, %v1394
      %v1462 = vadd.f32 %v1272, %v1397
      %v1463 = vadd.f32 %v1273, %v1400
      %v1464 = vadd.f32 %v1274, %v1403
      %v1465 = vadd.f32 %v1275, %v1406
      %v1466 = vadd.f32 %v1276, %v1409
      %v1467 = vadd.f32 %v1277, %v1412
      %v1468 = vadd.f32 %v1278, %v1415
      %v1469 = vadd.f32 %v1279, %v1418
      %v1470 = vadd.f32 %v1280, %v1421
      %v1471 = vadd.f32 %v1281, %v1424
      %v1472 = vadd.f32 %v1282, %v1427
      %v1473 = vadd.f32 %v1283, %v1430
      %v1474 = vadd.f32 %v1284, %v1433
      %v1475 = vadd.f32 %v1285, %v1436
      %v1476 = vadd.f32 %v1286, %v1439
      %v1477 = vadd.f32 %v1287, %v1442
      %v1478 = vadd.f32 %v1288, %v1445
      %v1479 = vrot.slane %v327, 2
      %v1480 = vrot.slane %v328, 2
      %v1481 = vsel %vm842, %v1479, %v1480
      %v1482 = vrot.slane %v329, 2
      %v1483 = vsel %vm842, %v1480, %v1482
      %v1484 = vsel %vm480, %v1481, 0
      %v1486 = vsel %vm480, %v1483, 0
      %v1489 = vsel %vm545, %v338, 0
      %1491 = vmatpush.msra.mxu0 0.0
      %1492 = vmatpush.msra.mxu0 0.0
      %1493 = vmatpush.msra.mxu0 0.0
      %1494 = vmatpush.msra.mxu0 0.0
      %1495 = vmatpush.msra.mxu0 0.0
      %1496 = vmatpush.msra.mxu0 0.0
      %1497 = vmatpush.msra.mxu0 0.0
      %1498 = vmatpush.msra.mxu0 0.0
      %1499 = vmatpush.msra.mxu0 0.0
      %1500 = vmatpush.msra.mxu0 0.0
      %1501 = vmatpush.msra.mxu0 0.0
      %1502 = vmatpush.msra.mxu0 0.0
      %1503 = vmatpush.msra.mxu0 0.0
      %1504 = vmatpush.msra.mxu0 0.0
      %1505 = vmatpush.msra.mxu0 0.0
      %1506 = vmatpush.msra.mxu0 %v1489
      %1507 = vmatmul.f32.gmra.mxu0 %v927
      %v1508 = vpop.f32.mrf.mxu0
      %v1509 = vadd.f32 0.0, %v1508
      %1510 = vmatmul.f32.gmra.mxu0 %v929
      %v1511 = vpop.f32.mrf.mxu0
      %v1512 = vadd.f32 0.0, %v1511
      %1513 = vmatmul.f32.gmra.mxu0 %v931
      %v1514 = vpop.f32.mrf.mxu0
      %v1515 = vadd.f32 0.0, %v1514
      %1516 = vmatmul.f32.gmra.mxu0 %v933
      %v1517 = vpop.f32.mrf.mxu0
      %v1518 = vadd.f32 0.0, %v1517
      %1519 = vmatmul.f32.gmra.mxu0 %v935
      %v1520 = vpop.f32.mrf.mxu0
      %v1521 = vadd.f32 0.0, %v1520
      %1522 = vmatmul.f32.gmra.mxu0 %v937
      %v1523 = vpop.f32.mrf.mxu0
      %v1524 = vadd.f32 0.0, %v1523
      %1525 = vmatmul.f32.gmra.mxu0 %v939
      %v1526 = vpop.f32.mrf.mxu0
      %v1527 = vadd.f32 0.0, %v1526
      %1528 = vmatmul.f32.gmra.mxu0 %v941
      %v1529 = vpop.f32.mrf.mxu0
      %v1530 = vadd.f32 0.0, %v1529
      %1531 = vmatmul.f32.gmra.mxu0 %v943
      %v1532 = vpop.f32.mrf.mxu0
      %v1533 = vadd.f32 0.0, %v1532
      %1534 = vmatmul.f32.gmra.mxu0 %v945
      %v1535 = vpop.f32.mrf.mxu0
      %v1536 = vadd.f32 0.0, %v1535
      %1537 = vmatmul.f32.gmra.mxu0 %v947
      %v1538 = vpop.f32.mrf.mxu0
      %v1539 = vadd.f32 0.0, %v1538
      %1540 = vmatmul.f32.gmra.mxu0 %v949
      %v1541 = vpop.f32.mrf.mxu0
      %v1542 = vadd.f32 0.0, %v1541
      %1543 = vmatmul.f32.gmra.mxu0 %v951
      %v1544 = vpop.f32.mrf.mxu0
      %v1545 = vadd.f32 0.0, %v1544
      %1546 = vmatmul.f32.gmra.mxu0 %v953
      %v1547 = vpop.f32.mrf.mxu0
      %v1548 = vadd.f32 0.0, %v1547
      %1549 = vmatmul.f32.gmra.mxu0 %v955
      %v1550 = vpop.f32.mrf.mxu0
      %v1551 = vadd.f32 0.0, %v1550
      %1552 = vmatmul.f32.gmra.mxu0 %v957
      %v1553 = vpop.f32.mrf.mxu0
      %v1554 = vadd.f32 0.0, %v1553
      %1555 = vmatmul.f32.gmra.mxu0 %v959
      %v1556 = vpop.f32.mrf.mxu0
      %v1557 = vadd.f32 0.0, %v1556
      %1558 = vmatmul.f32.gmra.mxu0 %v961
      %v1559 = vpop.f32.mrf.mxu0
      %v1560 = vadd.f32 0.0, %v1559
      %1561 = vmatmul.f32.gmra.mxu0 %v963
      %v1562 = vpop.f32.mrf.mxu0
      %v1563 = vadd.f32 0.0, %v1562
      %1564 = vmatmul.f32.gmra.mxu0 %v965
      %v1565 = vpop.f32.mrf.mxu0
      %v1566 = vadd.f32 0.0, %v1565
      %1567 = vmatmul.f32.gmra.mxu0 %v967
      %v1568 = vpop.f32.mrf.mxu0
      %v1569 = vadd.f32 0.0, %v1568
      %1570 = vmatmul.f32.gmra.mxu0 %v969
      %v1571 = vpop.f32.mrf.mxu0
      %v1572 = vadd.f32 0.0, %v1571
      %1573 = vmatmul.f32.gmra.mxu0 %v971
      %v1574 = vpop.f32.mrf.mxu0
      %v1575 = vadd.f32 0.0, %v1574
      %1576 = vmatmul.f32.gmra.mxu0 %v973
      %v1577 = vpop.f32.mrf.mxu0
      %v1578 = vadd.f32 0.0, %v1577
      %1579 = vmatmul.f32.gmra.mxu0 %v975
      %v1580 = vpop.f32.mrf.mxu0
      %v1581 = vadd.f32 0.0, %v1580
      %1582 = vmatmul.f32.gmra.mxu0 %v977
      %v1583 = vpop.f32.mrf.mxu0
      %v1584 = vadd.f32 0.0, %v1583
      %1585 = vmatmul.f32.gmra.mxu0 %v979
      %v1586 = vpop.f32.mrf.mxu0
      %v1587 = vadd.f32 0.0, %v1586
      %1588 = vmatmul.f32.gmra.mxu0 %v981
      %v1589 = vpop.f32.mrf.mxu0
      %v1590 = vadd.f32 0.0, %v1589
      %1591 = vmatmul.f32.gmra.mxu0 %v983
      %v1592 = vpop.f32.mrf.mxu0
      %v1593 = vadd.f32 0.0, %v1592
      %1594 = vmatmul.f32.gmra.mxu0 %v985
      %v1595 = vpop.f32.mrf.mxu0
      %v1596 = vadd.f32 0.0, %v1595
      %1597 = vmatmul.f32.gmra.mxu0 %v1484
      %v1598 = vpop.f32.mrf.mxu0
      %v1599 = vadd.f32 0.0, %v1598
      %1600 = vmatmul.f32.gmra.mxu0 %v1486
      %v1601 = vpop.f32.mrf.mxu0
      %v1602 = vadd.f32 0.0, %v1601
      %1603 = vdwg.mxu0
      %v1604 = vadd.f32 %v1447, %v1509
      %v1605 = vadd.f32 %v1448, %v1512
      %v1606 = vadd.f32 %v1449, %v1515
      %v1607 = vadd.f32 %v1450, %v1518
      %v1608 = vadd.f32 %v1451, %v1521
      %v1609 = vadd.f32 %v1452, %v1524
      %v1610 = vadd.f32 %v1453, %v1527
      %v1611 = vadd.f32 %v1454, %v1530
      %v1612 = vadd.f32 %v1455, %v1533
      %v1613 = vadd.f32 %v1456, %v1536
      %v1614 = vadd.f32 %v1457, %v1539
      %v1615 = vadd.f32 %v1458, %v1542
      %v1616 = vadd.f32 %v1459, %v1545
      %v1617 = vadd.f32 %v1460, %v1548
      %v1618 = vadd.f32 %v1461, %v1551
      %v1619 = vadd.f32 %v1462, %v1554
      %v1620 = vadd.f32 %v1463, %v1557
      %v1621 = vadd.f32 %v1464, %v1560
      %v1622 = vadd.f32 %v1465, %v1563
      %v1623 = vadd.f32 %v1466, %v1566
      %v1624 = vadd.f32 %v1467, %v1569
      %v1625 = vadd.f32 %v1468, %v1572
      %v1626 = vadd.f32 %v1469, %v1575
      %v1627 = vadd.f32 %v1470, %v1578
      %v1628 = vadd.f32 %v1471, %v1581
      %v1629 = vadd.f32 %v1472, %v1584
      %v1630 = vadd.f32 %v1473, %v1587
      %v1631 = vadd.f32 %v1474, %v1590
      %v1632 = vadd.f32 %v1475, %v1593
      %v1633 = vadd.f32 %v1476, %v1596
      %v1634 = vadd.f32 %v1477, %v1599
      %v1635 = vadd.f32 %v1478, %v1602
      %v1637 = vsel %vm480, %v330, 0
      %v1640 = vsel %vm480, %v331, 0
      %v1643 = vsel %vm545, %v339, 0
      %1645 = vmatpush.msra.mxu0 0.0
      %1646 = vmatpush.msra.mxu0 0.0
      %1647 = vmatpush.msra.mxu0 0.0
      %1648 = vmatpush.msra.mxu0 0.0
      %1649 = vmatpush.msra.mxu0 0.0
      %1650 = vmatpush.msra.mxu0 0.0
      %1651 = vmatpush.msra.mxu0 0.0
      %1652 = vmatpush.msra.mxu0 0.0
      %1653 = vmatpush.msra.mxu0 0.0
      %1654 = vmatpush.msra.mxu0 0.0
      %1655 = vmatpush.msra.mxu0 0.0
      %1656 = vmatpush.msra.mxu0 0.0
      %1657 = vmatpush.msra.mxu0 0.0
      %1658 = vmatpush.msra.mxu0 0.0
      %1659 = vmatpush.msra.mxu0 0.0
      %1660 = vmatpush.msra.mxu0 %v1643
      %1661 = vmatmul.f32.gmra.mxu0 %v670
      %v1662 = vpop.f32.mrf.mxu0
      %v1663 = vadd.f32 0.0, %v1662
      %1664 = vmatmul.f32.gmra.mxu0 %v672
      %v1665 = vpop.f32.mrf.mxu0
      %v1666 = vadd.f32 0.0, %v1665
      %1667 = vmatmul.f32.gmra.mxu0 %v674
      %v1668 = vpop.f32.mrf.mxu0
      %v1669 = vadd.f32 0.0, %v1668
      %1670 = vmatmul.f32.gmra.mxu0 %v676
      %v1671 = vpop.f32.mrf.mxu0
      %v1672 = vadd.f32 0.0, %v1671
      %1673 = vmatmul.f32.gmra.mxu0 %v678
      %v1674 = vpop.f32.mrf.mxu0
      %v1675 = vadd.f32 0.0, %v1674
      %1676 = vmatmul.f32.gmra.mxu0 %v680
      %v1677 = vpop.f32.mrf.mxu0
      %v1678 = vadd.f32 0.0, %v1677
      %1679 = vmatmul.f32.gmra.mxu0 %v682
      %v1680 = vpop.f32.mrf.mxu0
      %v1681 = vadd.f32 0.0, %v1680
      %1682 = vmatmul.f32.gmra.mxu0 %v684
      %v1683 = vpop.f32.mrf.mxu0
      %v1684 = vadd.f32 0.0, %v1683
      %1685 = vmatmul.f32.gmra.mxu0 %v686
      %v1686 = vpop.f32.mrf.mxu0
      %v1687 = vadd.f32 0.0, %v1686
      %1688 = vmatmul.f32.gmra.mxu0 %v688
      %v1689 = vpop.f32.mrf.mxu0
      %v1690 = vadd.f32 0.0, %v1689
      %1691 = vmatmul.f32.gmra.mxu0 %v690
      %v1692 = vpop.f32.mrf.mxu0
      %v1693 = vadd.f32 0.0, %v1692
      %1694 = vmatmul.f32.gmra.mxu0 %v692
      %v1695 = vpop.f32.mrf.mxu0
      %v1696 = vadd.f32 0.0, %v1695
      %1697 = vmatmul.f32.gmra.mxu0 %v694
      %v1698 = vpop.f32.mrf.mxu0
      %v1699 = vadd.f32 0.0, %v1698
      %1700 = vmatmul.f32.gmra.mxu0 %v696
      %v1701 = vpop.f32.mrf.mxu0
      %v1702 = vadd.f32 0.0, %v1701
      %1703 = vmatmul.f32.gmra.mxu0 %v698
      %v1704 = vpop.f32.mrf.mxu0
      %v1705 = vadd.f32 0.0, %v1704
      %1706 = vmatmul.f32.gmra.mxu0 %v700
      %v1707 = vpop.f32.mrf.mxu0
      %v1708 = vadd.f32 0.0, %v1707
      %1709 = vmatmul.f32.gmra.mxu0 %v702
      %v1710 = vpop.f32.mrf.mxu0
      %v1711 = vadd.f32 0.0, %v1710
      %1712 = vmatmul.f32.gmra.mxu0 %v704
      %v1713 = vpop.f32.mrf.mxu0
      %v1714 = vadd.f32 0.0, %v1713
      %1715 = vmatmul.f32.gmra.mxu0 %v706
      %v1716 = vpop.f32.mrf.mxu0
      %v1717 = vadd.f32 0.0, %v1716
      %1718 = vmatmul.f32.gmra.mxu0 %v708
      %v1719 = vpop.f32.mrf.mxu0
      %v1720 = vadd.f32 0.0, %v1719
      %1721 = vmatmul.f32.gmra.mxu0 %v710
      %v1722 = vpop.f32.mrf.mxu0
      %v1723 = vadd.f32 0.0, %v1722
      %1724 = vmatmul.f32.gmra.mxu0 %v712
      %v1725 = vpop.f32.mrf.mxu0
      %v1726 = vadd.f32 0.0, %v1725
      %1727 = vmatmul.f32.gmra.mxu0 %v714
      %v1728 = vpop.f32.mrf.mxu0
      %v1729 = vadd.f32 0.0, %v1728
      %1730 = vmatmul.f32.gmra.mxu0 %v716
      %v1731 = vpop.f32.mrf.mxu0
      %v1732 = vadd.f32 0.0, %v1731
      %1733 = vmatmul.f32.gmra.mxu0 %v718
      %v1734 = vpop.f32.mrf.mxu0
      %v1735 = vadd.f32 0.0, %v1734
      %1736 = vmatmul.f32.gmra.mxu0 %v720
      %v1737 = vpop.f32.mrf.mxu0
      %v1738 = vadd.f32 0.0, %v1737
      %1739 = vmatmul.f32.gmra.mxu0 %v722
      %v1740 = vpop.f32.mrf.mxu0
      %v1741 = vadd.f32 0.0, %v1740
      %1742 = vmatmul.f32.gmra.mxu0 %v724
      %v1743 = vpop.f32.mrf.mxu0
      %v1744 = vadd.f32 0.0, %v1743
      %1745 = vmatmul.f32.gmra.mxu0 %v1136
      %v1746 = vpop.f32.mrf.mxu0
      %v1747 = vadd.f32 0.0, %v1746
      %1748 = vmatmul.f32.gmra.mxu0 %v1139
      %v1749 = vpop.f32.mrf.mxu0
      %v1750 = vadd.f32 0.0, %v1749
      %1751 = vmatmul.f32.gmra.mxu0 %v1637
      %v1752 = vpop.f32.mrf.mxu0
      %v1753 = vadd.f32 0.0, %v1752
      %1754 = vmatmul.f32.gmra.mxu0 %v1640
      %v1755 = vpop.f32.mrf.mxu0
      %v1756 = vadd.f32 0.0, %v1755
      %1757 = vdwg.mxu0
      %v1758 = vadd.f32 %v1604, %v1663
      %v1759 = vadd.f32 %v1605, %v1666
      %v1760 = vadd.f32 %v1606, %v1669
      %v1761 = vadd.f32 %v1607, %v1672
      %v1762 = vadd.f32 %v1608, %v1675
      %v1763 = vadd.f32 %v1609, %v1678
      %v1764 = vadd.f32 %v1610, %v1681
      %v1765 = vadd.f32 %v1611, %v1684
      %v1766 = vadd.f32 %v1612, %v1687
      %v1767 = vadd.f32 %v1613, %v1690
      %v1768 = vadd.f32 %v1614, %v1693
      %v1769 = vadd.f32 %v1615, %v1696
      %v1770 = vadd.f32 %v1616, %v1699
      %v1771 = vadd.f32 %v1617, %v1702
      %v1772 = vadd.f32 %v1618, %v1705
      %v1773 = vadd.f32 %v1619, %v1708
      %v1774 = vadd.f32 %v1620, %v1711
      %v1775 = vadd.f32 %v1621, %v1714
      %v1776 = vadd.f32 %v1622, %v1717
      %v1777 = vadd.f32 %v1623, %v1720
      %v1778 = vadd.f32 %v1624, %v1723
      %v1779 = vadd.f32 %v1625, %v1726
      %v1780 = vadd.f32 %v1626, %v1729
      %v1781 = vadd.f32 %v1627, %v1732
      %v1782 = vadd.f32 %v1628, %v1735
      %v1783 = vadd.f32 %v1629, %v1738
      %v1784 = vadd.f32 %v1630, %v1741
      %v1785 = vadd.f32 %v1631, %v1744
      %v1786 = vadd.f32 %v1632, %v1747
      %v1787 = vadd.f32 %v1633, %v1750
      %v1788 = vadd.f32 %v1634, %v1753
      %v1789 = vadd.f32 %v1635, %v1756
      %v1791 = vrot.slane %v330, 1
      %v1792 = vrot.slane %v331, 1
      %v1793 = vsel %vm399, %v1791, %v1792
      %v1794 = vrot.slane %v332, 1
      %v1795 = vsel %vm399, %v1792, %v1794
      %v1796 = vsel %vm480, %v1793, 0
      %v1798 = vsel %vm480, %v1795, 0
      %v1801 = vsel %vm545, %v340, 0
      %1803 = vmatpush.msra.mxu0 0.0
      %1804 = vmatpush.msra.mxu0 0.0
      %1805 = vmatpush.msra.mxu0 0.0
      %1806 = vmatpush.msra.mxu0 0.0
      %1807 = vmatpush.msra.mxu0 0.0
      %1808 = vmatpush.msra.mxu0 0.0
      %1809 = vmatpush.msra.mxu0 0.0
      %1810 = vmatpush.msra.mxu0 0.0
      %1811 = vmatpush.msra.mxu0 0.0
      %1812 = vmatpush.msra.mxu0 0.0
      %1813 = vmatpush.msra.mxu0 0.0
      %1814 = vmatpush.msra.mxu0 0.0
      %1815 = vmatpush.msra.mxu0 0.0
      %1816 = vmatpush.msra.mxu0 0.0
      %1817 = vmatpush.msra.mxu0 0.0
      %1818 = vmatpush.msra.mxu0 %v1801
      %1819 = vmatmul.f32.gmra.mxu0 %v489
      %v1820 = vpop.f32.mrf.mxu0
      %v1821 = vadd.f32 0.0, %v1820
      %1822 = vmatmul.f32.gmra.mxu0 %v491
      %v1823 = vpop.f32.mrf.mxu0
      %v1824 = vadd.f32 0.0, %v1823
      %1825 = vmatmul.f32.gmra.mxu0 %v493
      %v1826 = vpop.f32.mrf.mxu0
      %v1827 = vadd.f32 0.0, %v1826
      %1828 = vmatmul.f32.gmra.mxu0 %v495
      %v1829 = vpop.f32.mrf.mxu0
      %v1830 = vadd.f32 0.0, %v1829
      %1831 = vmatmul.f32.gmra.mxu0 %v497
      %v1832 = vpop.f32.mrf.mxu0
      %v1833 = vadd.f32 0.0, %v1832
      %1834 = vmatmul.f32.gmra.mxu0 %v499
      %v1835 = vpop.f32.mrf.mxu0
      %v1836 = vadd.f32 0.0, %v1835
      %1837 = vmatmul.f32.gmra.mxu0 %v501
      %v1838 = vpop.f32.mrf.mxu0
      %v1839 = vadd.f32 0.0, %v1838
      %1840 = vmatmul.f32.gmra.mxu0 %v503
      %v1841 = vpop.f32.mrf.mxu0
      %v1842 = vadd.f32 0.0, %v1841
      %1843 = vmatmul.f32.gmra.mxu0 %v505
      %v1844 = vpop.f32.mrf.mxu0
      %v1845 = vadd.f32 0.0, %v1844
      %1846 = vmatmul.f32.gmra.mxu0 %v507
      %v1847 = vpop.f32.mrf.mxu0
      %v1848 = vadd.f32 0.0, %v1847
      %1849 = vmatmul.f32.gmra.mxu0 %v509
      %v1850 = vpop.f32.mrf.mxu0
      %v1851 = vadd.f32 0.0, %v1850
      %1852 = vmatmul.f32.gmra.mxu0 %v511
      %v1853 = vpop.f32.mrf.mxu0
      %v1854 = vadd.f32 0.0, %v1853
      %1855 = vmatmul.f32.gmra.mxu0 %v513
      %v1856 = vpop.f32.mrf.mxu0
      %v1857 = vadd.f32 0.0, %v1856
      %1858 = vmatmul.f32.gmra.mxu0 %v515
      %v1859 = vpop.f32.mrf.mxu0
      %v1860 = vadd.f32 0.0, %v1859
      %1861 = vmatmul.f32.gmra.mxu0 %v517
      %v1862 = vpop.f32.mrf.mxu0
      %v1863 = vadd.f32 0.0, %v1862
      %1864 = vmatmul.f32.gmra.mxu0 %v519
      %v1865 = vpop.f32.mrf.mxu0
      %v1866 = vadd.f32 0.0, %v1865
      %1867 = vmatmul.f32.gmra.mxu0 %v521
      %v1868 = vpop.f32.mrf.mxu0
      %v1869 = vadd.f32 0.0, %v1868
      %1870 = vmatmul.f32.gmra.mxu0 %v523
      %v1871 = vpop.f32.mrf.mxu0
      %v1872 = vadd.f32 0.0, %v1871
      %1873 = vmatmul.f32.gmra.mxu0 %v525
      %v1874 = vpop.f32.mrf.mxu0
      %v1875 = vadd.f32 0.0, %v1874
      %1876 = vmatmul.f32.gmra.mxu0 %v527
      %v1877 = vpop.f32.mrf.mxu0
      %v1878 = vadd.f32 0.0, %v1877
      %1879 = vmatmul.f32.gmra.mxu0 %v529
      %v1880 = vpop.f32.mrf.mxu0
      %v1881 = vadd.f32 0.0, %v1880
      %1882 = vmatmul.f32.gmra.mxu0 %v531
      %v1883 = vpop.f32.mrf.mxu0
      %v1884 = vadd.f32 0.0, %v1883
      %1885 = vmatmul.f32.gmra.mxu0 %v533
      %v1886 = vpop.f32.mrf.mxu0
      %v1887 = vadd.f32 0.0, %v1886
      %1888 = vmatmul.f32.gmra.mxu0 %v535
      %v1889 = vpop.f32.mrf.mxu0
      %v1890 = vadd.f32 0.0, %v1889
      %1891 = vmatmul.f32.gmra.mxu0 %v537
      %v1892 = vpop.f32.mrf.mxu0
      %v1893 = vadd.f32 0.0, %v1892
      %1894 = vmatmul.f32.gmra.mxu0 %v539
      %v1895 = vpop.f32.mrf.mxu0
      %v1896 = vadd.f32 0.0, %v1895
      %1897 = vmatmul.f32.gmra.mxu0 %v541
      %v1898 = vpop.f32.mrf.mxu0
      %v1899 = vadd.f32 0.0, %v1898
      %1900 = vmatmul.f32.gmra.mxu0 %v543
      %v1901 = vpop.f32.mrf.mxu0
      %v1902 = vadd.f32 0.0, %v1901
      %1903 = vmatmul.f32.gmra.mxu0 %v1327
      %v1904 = vpop.f32.mrf.mxu0
      %v1905 = vadd.f32 0.0, %v1904
      %1906 = vmatmul.f32.gmra.mxu0 %v1329
      %v1907 = vpop.f32.mrf.mxu0
      %v1908 = vadd.f32 0.0, %v1907
      %1909 = vmatmul.f32.gmra.mxu0 %v1796
      %v1910 = vpop.f32.mrf.mxu0
      %v1911 = vadd.f32 0.0, %v1910
      %1912 = vmatmul.f32.gmra.mxu0 %v1798
      %v1913 = vpop.f32.mrf.mxu0
      %v1914 = vadd.f32 0.0, %v1913
      %1915 = vdwg.mxu0
      %v1916 = vadd.f32 %v1758, %v1821
      %v1917 = vadd.f32 %v1759, %v1824
      %v1918 = vadd.f32 %v1760, %v1827
      %v1919 = vadd.f32 %v1761, %v1830
      %v1920 = vadd.f32 %v1762, %v1833
      %v1921 = vadd.f32 %v1763, %v1836
      %v1922 = vadd.f32 %v1764, %v1839
      %v1923 = vadd.f32 %v1765, %v1842
      %v1924 = vadd.f32 %v1766, %v1845
      %v1925 = vadd.f32 %v1767, %v1848
      %v1926 = vadd.f32 %v1768, %v1851
      %v1927 = vadd.f32 %v1769, %v1854
      %v1928 = vadd.f32 %v1770, %v1857
      %v1929 = vadd.f32 %v1771, %v1860
      %v1930 = vadd.f32 %v1772, %v1863
      %v1931 = vadd.f32 %v1773, %v1866
      %v1932 = vadd.f32 %v1774, %v1869
      %v1933 = vadd.f32 %v1775, %v1872
      %v1934 = vadd.f32 %v1776, %v1875
      %v1935 = vadd.f32 %v1777, %v1878
      %v1936 = vadd.f32 %v1778, %v1881
      %v1937 = vadd.f32 %v1779, %v1884
      %v1938 = vadd.f32 %v1780, %v1887
      %v1939 = vadd.f32 %v1781, %v1890
      %v1940 = vadd.f32 %v1782, %v1893
      %v1941 = vadd.f32 %v1783, %v1896
      %v1942 = vadd.f32 %v1784, %v1899
      %v1943 = vadd.f32 %v1785, %v1902
      %v1944 = vadd.f32 %v1786, %v1905
      %v1945 = vadd.f32 %v1787, %v1908
      %v1946 = vadd.f32 %v1788, %v1911
      %v1947 = vadd.f32 %v1789, %v1914
      %v1948 = vrot.slane %v330, 2
      %v1949 = vrot.slane %v331, 2
      %v1950 = vsel %vm842, %v1948, %v1949
      %v1951 = vrot.slane %v332, 2
      %v1952 = vsel %vm842, %v1949, %v1951
      %v1953 = vsel %vm480, %v1950, 0
      %v1955 = vsel %vm480, %v1952, 0
      %v1958 = vsel %vm545, %v341, 0
      %1960 = vmatpush.msra.mxu0 0.0
      %1961 = vmatpush.msra.mxu0 0.0
      %1962 = vmatpush.msra.mxu0 0.0
      %1963 = vmatpush.msra.mxu0 0.0
      %1964 = vmatpush.msra.mxu0 0.0
      %1965 = vmatpush.msra.mxu0 0.0
      %1966 = vmatpush.msra.mxu0 0.0
      %1967 = vmatpush.msra.mxu0 0.0
      %1968 = vmatpush.msra.mxu0 0.0
      %1969 = vmatpush.msra.mxu0 0.0
      %1970 = vmatpush.msra.mxu0 0.0
      %1971 = vmatpush.msra.mxu0 0.0
      %1972 = vmatpush.msra.mxu0 0.0
      %1973 = vmatpush.msra.mxu0 0.0
      %1974 = vmatpush.msra.mxu0 0.0
      %1975 = vmatpush.msra.mxu0 %v1958
      %1976 = vmatmul.f32.gmra.mxu0 %v931
      %v1977 = vpop.f32.mrf.mxu0
      %v1978 = vadd.f32 0.0, %v1977
      %1979 = vmatmul.f32.gmra.mxu0 %v933
      %v1980 = vpop.f32.mrf.mxu0
      %v1981 = vadd.f32 0.0, %v1980
      %1982 = vmatmul.f32.gmra.mxu0 %v935
      %v1983 = vpop.f32.mrf.mxu0
      %v1984 = vadd.f32 0.0, %v1983
      %1985 = vmatmul.f32.gmra.mxu0 %v937
      %v1986 = vpop.f32.mrf.mxu0
      %v1987 = vadd.f32 0.0, %v1986
      %1988 = vmatmul.f32.gmra.mxu0 %v939
      %v1989 = vpop.f32.mrf.mxu0
      %v1990 = vadd.f32 0.0, %v1989
      %1991 = vmatmul.f32.gmra.mxu0 %v941
      %v1992 = vpop.f32.mrf.mxu0
      %v1993 = vadd.f32 0.0, %v1992
      %1994 = vmatmul.f32.gmra.mxu0 %v943
      %v1995 = vpop.f32.mrf.mxu0
      %v1996 = vadd.f32 0.0, %v1995
      %1997 = vmatmul.f32.gmra.mxu0 %v945
      %v1998 = vpop.f32.mrf.mxu0
      %v1999 = vadd.f32 0.0, %v1998
      %2000 = vmatmul.f32.gmra.mxu0 %v947
      %v2001 = vpop.f32.mrf.mxu0
      %v2002 = vadd.f32 0.0, %v2001
      %2003 = vmatmul.f32.gmra.mxu0 %v949
      %v2004 = vpop.f32.mrf.mxu0
      %v2005 = vadd.f32 0.0, %v2004
      %2006 = vmatmul.f32.gmra.mxu0 %v951
      %v2007 = vpop.f32.mrf.mxu0
      %v2008 = vadd.f32 0.0, %v2007
      %2009 = vmatmul.f32.gmra.mxu0 %v953
      %v2010 = vpop.f32.mrf.mxu0
      %v2011 = vadd.f32 0.0, %v2010
      %2012 = vmatmul.f32.gmra.mxu0 %v955
      %v2013 = vpop.f32.mrf.mxu0
      %v2014 = vadd.f32 0.0, %v2013
      %2015 = vmatmul.f32.gmra.mxu0 %v957
      %v2016 = vpop.f32.mrf.mxu0
      %v2017 = vadd.f32 0.0, %v2016
      %2018 = vmatmul.f32.gmra.mxu0 %v959
      %v2019 = vpop.f32.mrf.mxu0
      %v2020 = vadd.f32 0.0, %v2019
      %2021 = vmatmul.f32.gmra.mxu0 %v961
      %v2022 = vpop.f32.mrf.mxu0
      %v2023 = vadd.f32 0.0, %v2022
      %2024 = vmatmul.f32.gmra.mxu0 %v963
      %v2025 = vpop.f32.mrf.mxu0
      %v2026 = vadd.f32 0.0, %v2025
      %2027 = vmatmul.f32.gmra.mxu0 %v965
      %v2028 = vpop.f32.mrf.mxu0
      %v2029 = vadd.f32 0.0, %v2028
      %2030 = vmatmul.f32.gmra.mxu0 %v967
      %v2031 = vpop.f32.mrf.mxu0
      %v2032 = vadd.f32 0.0, %v2031
      %2033 = vmatmul.f32.gmra.mxu0 %v969
      %v2034 = vpop.f32.mrf.mxu0
      %v2035 = vadd.f32 0.0, %v2034
      %2036 = vmatmul.f32.gmra.mxu0 %v971
      %v2037 = vpop.f32.mrf.mxu0
      %v2038 = vadd.f32 0.0, %v2037
      %2039 = vmatmul.f32.gmra.mxu0 %v973
      %v2040 = vpop.f32.mrf.mxu0
      %v2041 = vadd.f32 0.0, %v2040
      %2042 = vmatmul.f32.gmra.mxu0 %v975
      %v2043 = vpop.f32.mrf.mxu0
      %v2044 = vadd.f32 0.0, %v2043
      %2045 = vmatmul.f32.gmra.mxu0 %v977
      %v2046 = vpop.f32.mrf.mxu0
      %v2047 = vadd.f32 0.0, %v2046
      %2048 = vmatmul.f32.gmra.mxu0 %v979
      %v2049 = vpop.f32.mrf.mxu0
      %v2050 = vadd.f32 0.0, %v2049
      %2051 = vmatmul.f32.gmra.mxu0 %v981
      %v2052 = vpop.f32.mrf.mxu0
      %v2053 = vadd.f32 0.0, %v2052
      %2054 = vmatmul.f32.gmra.mxu0 %v983
      %v2055 = vpop.f32.mrf.mxu0
      %v2056 = vadd.f32 0.0, %v2055
      %2057 = vmatmul.f32.gmra.mxu0 %v985
      %v2058 = vpop.f32.mrf.mxu0
      %v2059 = vadd.f32 0.0, %v2058
      %2060 = vmatmul.f32.gmra.mxu0 %v1484
      %v2061 = vpop.f32.mrf.mxu0
      %v2062 = vadd.f32 0.0, %v2061
      %2063 = vmatmul.f32.gmra.mxu0 %v1486
      %v2064 = vpop.f32.mrf.mxu0
      %v2065 = vadd.f32 0.0, %v2064
      %2066 = vmatmul.f32.gmra.mxu0 %v1953
      %v2067 = vpop.f32.mrf.mxu0
      %v2068 = vadd.f32 0.0, %v2067
      %2069 = vmatmul.f32.gmra.mxu0 %v1955
      %v2070 = vpop.f32.mrf.mxu0
      %v2071 = vadd.f32 0.0, %v2070
      %2072 = vdwg.mxu0
      %v2073 = vadd.f32 %v1916, %v1978
      %v2074 = vadd.f32 %v1917, %v1981
      %v2075 = vadd.f32 %v1918, %v1984
      %v2076 = vadd.f32 %v1919, %v1987
      %v2077 = vadd.f32 %v1920, %v1990
      %v2078 = vadd.f32 %v1921, %v1993
      %v2079 = vadd.f32 %v1922, %v1996
      %v2080 = vadd.f32 %v1923, %v1999
      %v2081 = vadd.f32 %v1924, %v2002
      %v2082 = vadd.f32 %v1925, %v2005
      %v2083 = vadd.f32 %v1926, %v2008
      %v2084 = vadd.f32 %v1927, %v2011
      %v2085 = vadd.f32 %v1928, %v2014
      %v2086 = vadd.f32 %v1929, %v2017
      %v2087 = vadd.f32 %v1930, %v2020
      %v2088 = vadd.f32 %v1931, %v2023
      %v2089 = vadd.f32 %v1932, %v2026
      %v2090 = vadd.f32 %v1933, %v2029
      %v2091 = vadd.f32 %v1934, %v2032
      %v2092 = vadd.f32 %v1935, %v2035
      %v2093 = vadd.f32 %v1936, %v2038
      %v2094 = vadd.f32 %v1937, %v2041
      %v2095 = vadd.f32 %v1938, %v2044
      %v2096 = vadd.f32 %v1939, %v2047
      %v2097 = vadd.f32 %v1940, %v2050
      %v2098 = vadd.f32 %v1941, %v2053
      %v2099 = vadd.f32 %v1942, %v2056
      %v2100 = vadd.f32 %v1943, %v2059
      %v2101 = vadd.f32 %v1944, %v2062
      %v2102 = vadd.f32 %v1945, %v2065
      %v2103 = vadd.f32 %v1946, %v2068
      %v2104 = vadd.f32 %v1947, %v2071
      %v2105 = vld [vmem:[%s2] sm:$0x1]
      %v2107 = vperm.slane %v2105, 0
      %v2109 = vmul.f32 %v2073, %v2107
      %v2110 = vmul.f32 %v2074, %v2107
      %v2111 = vmul.f32 %v2075, %v2107
      %v2112 = vmul.f32 %v2076, %v2107
      %v2113 = vmul.f32 %v2077, %v2107
      %v2114 = vmul.f32 %v2078, %v2107
      %v2115 = vmul.f32 %v2079, %v2107
      %v2116 = vmul.f32 %v2080, %v2107
      %v2117 = vmul.f32 %v2081, %v2107
      %v2118 = vmul.f32 %v2082, %v2107
      %v2119 = vmul.f32 %v2083, %v2107
      %v2120 = vmul.f32 %v2084, %v2107
      %v2121 = vmul.f32 %v2085, %v2107
      %v2122 = vmul.f32 %v2086, %v2107
      %v2123 = vmul.f32 %v2087, %v2107
      %v2124 = vmul.f32 %v2088, %v2107
      %v2125 = vmul.f32 %v2089, %v2107
      %v2126 = vmul.f32 %v2090, %v2107
      %v2127 = vmul.f32 %v2091, %v2107
      %v2128 = vmul.f32 %v2092, %v2107
      %v2129 = vmul.f32 %v2093, %v2107
      %v2130 = vmul.f32 %v2094, %v2107
      %v2131 = vmul.f32 %v2095, %v2107
      %v2132 = vmul.f32 %v2096, %v2107
      %v2133 = vmul.f32 %v2097, %v2107
      %v2134 = vmul.f32 %v2098, %v2107
      %v2135 = vmul.f32 %v2099, %v2107
      %v2136 = vmul.f32 %v2100, %v2107
      %v2137 = vmul.f32 %v2101, %v2107
      %v2138 = vmul.f32 %v2102, %v2107
      %v2139 = vmul.f32 %v2103, %v2107
      %v2140 = vmul.f32 %v2104, %v2107
      %v2141 = vld [vmem:[%s3] sm:$0x1]
      %v2143 = vperm.slane %v2141, 0
      %v2145 = vadd.f32 %v2109, %v2143
      %v2146 = vadd.f32 %v2110, %v2143
      %v2147 = vadd.f32 %v2111, %v2143
      %v2148 = vadd.f32 %v2112, %v2143
      %v2149 = vadd.f32 %v2113, %v2143
      %v2150 = vadd.f32 %v2114, %v2143
      %v2151 = vadd.f32 %v2115, %v2143
      %v2152 = vadd.f32 %v2116, %v2143
      %v2153 = vadd.f32 %v2117, %v2143
      %v2154 = vadd.f32 %v2118, %v2143
      %v2155 = vadd.f32 %v2119, %v2143
      %v2156 = vadd.f32 %v2120, %v2143
      %v2157 = vadd.f32 %v2121, %v2143
      %v2158 = vadd.f32 %v2122, %v2143
      %v2159 = vadd.f32 %v2123, %v2143
      %v2160 = vadd.f32 %v2124, %v2143
      %v2161 = vadd.f32 %v2125, %v2143
      %v2162 = vadd.f32 %v2126, %v2143
      %v2163 = vadd.f32 %v2127, %v2143
      %v2164 = vadd.f32 %v2128, %v2143
      %v2165 = vadd.f32 %v2129, %v2143
      %v2166 = vadd.f32 %v2130, %v2143
      %v2167 = vadd.f32 %v2131, %v2143
      %v2168 = vadd.f32 %v2132, %v2143
      %v2169 = vadd.f32 %v2133, %v2143
      %v2170 = vadd.f32 %v2134, %v2143
      %v2171 = vadd.f32 %v2135, %v2143
      %v2172 = vadd.f32 %v2136, %v2143
      %v2173 = vadd.f32 %v2137, %v2143
      %v2174 = vadd.f32 %v2138, %v2143
      %v2175 = vadd.f32 %v2139, %v2143
      %v2176 = vadd.f32 %v2140, %v2143
      %v2177 = vmax.f32 %v2145, 0.0
      %v2178 = vmax.f32 %v2146, 0.0
      %v2179 = vmax.f32 %v2147, 0.0
      %v2180 = vmax.f32 %v2148, 0.0
      %v2181 = vmax.f32 %v2149, 0.0
      %v2182 = vmax.f32 %v2150, 0.0
      %v2183 = vmax.f32 %v2151, 0.0
      %v2184 = vmax.f32 %v2152, 0.0
      %v2185 = vmax.f32 %v2153, 0.0
      %v2186 = vmax.f32 %v2154, 0.0
      %v2187 = vmax.f32 %v2155, 0.0
      %v2188 = vmax.f32 %v2156, 0.0
      %v2189 = vmax.f32 %v2157, 0.0
      %v2190 = vmax.f32 %v2158, 0.0
      %v2191 = vmax.f32 %v2159, 0.0
      %v2192 = vmax.f32 %v2160, 0.0
      %v2193 = vmax.f32 %v2161, 0.0
      %v2194 = vmax.f32 %v2162, 0.0
      %v2195 = vmax.f32 %v2163, 0.0
      %v2196 = vmax.f32 %v2164, 0.0
      %v2197 = vmax.f32 %v2165, 0.0
      %v2198 = vmax.f32 %v2166, 0.0
      %v2199 = vmax.f32 %v2167, 0.0
      %v2200 = vmax.f32 %v2168, 0.0
      %v2201 = vmax.f32 %v2169, 0.0
      %v2202 = vmax.f32 %v2170, 0.0
      %v2203 = vmax.f32 %v2171, 0.0
      %v2204 = vmax.f32 %v2172, 0.0
      %v2205 = vmax.f32 %v2173, 0.0
      %v2206 = vmax.f32 %v2174, 0.0
      %v2207 = vmax.f32 %v2175, 0.0
      %v2208 = vmax.f32 %v2176, 0.0
      %2209 = vst.msk [vmem:[#allocation2] sm:$0xff] %vm480, 0.0
      %2210 = vst.msk [vmem:[#allocation2 + $0x8] sm:$0xff] %vm480, 0.0
      %vm2211 = vcmask 25600
      %2212 = vst.msk [vmem:[#allocation2 + $0x10] sm:$0x3] %vm2211, 0.0
      %2213 = vst.msk [vmem:[#allocation2 + $0x18] sm:$0xff] %vm480, 0.0
      %2214 = vst.msk [vmem:[#allocation2 + $0x20] sm:$0xff] %vm480, 0.0
      %2215 = vst.msk [vmem:[#allocation2 + $0x28] sm:$0x3] %vm2211, 0.0
      %2216 = vst.msk [vmem:[#allocation2 + $0x30] sm:$0xff] %vm480, 0.0
      %2217 = vst.msk [vmem:[#allocation2 + $0x38] sm:$0xff] %vm480, 0.0
      %2218 = vst.msk [vmem:[#allocation2 + $0x40] sm:$0x3] %vm2211, 0.0
      %2219 = vst.msk [vmem:[#allocation2 + $0x48] sm:$0xff] %vm480, 0.0
      %2220 = vst.msk [vmem:[#allocation2 + $0x50] sm:$0xff] %vm480, 0.0
      %2221 = vst.msk [vmem:[#allocation2 + $0x58] sm:$0x3] %vm2211, 0.0
      %2222 = vst.msk [vmem:[#allocation2 + $0x60] sm:$0xff] %vm480, 0.0
      %2223 = vst.msk [vmem:[#allocation2 + $0x68] sm:$0xff] %vm480, 0.0
      %2224 = vst.msk [vmem:[#allocation2 + $0x70] sm:$0x3] %vm2211, 0.0
      %2225 = vst.msk [vmem:[#allocation2 + $0x78] sm:$0xff] %vm480, 0.0
      %2226 = vst.msk [vmem:[#allocation2 + $0x80] sm:$0xff] %vm480, 0.0
      %2227 = vst.msk [vmem:[#allocation2 + $0x88] sm:$0x3] %vm2211, 0.0
      %2228 = vst.msk [vmem:[#allocation2 + $0x90] sm:$0xff] %vm480, 0.0
      %2229 = vst.msk [vmem:[#allocation2 + $0x98] sm:$0xff] %vm480, 0.0
      %2230 = vst.msk [vmem:[#allocation2 + $0xa0] sm:$0x3] %vm2211, 0.0
      %2231 = vst.msk [vmem:[#allocation2 + $0xa8] sm:$0xff] %vm480, 0.0
      %2232 = vst.msk [vmem:[#allocation2 + $0xb0] sm:$0xff] %vm480, 0.0
      %2233 = vst.msk [vmem:[#allocation2 + $0xb8] sm:$0x3] %vm2211, 0.0
      %2234 = vst.msk [vmem:[#allocation2 + $0xc0] sm:$0xff] %vm480, 0.0
      %2235 = vst.msk [vmem:[#allocation2 + $0xc8] sm:$0xff] %vm480, 0.0
      %2236 = vst.msk [vmem:[#allocation2 + $0xd0] sm:$0x3] %vm2211, 0.0
      %2237 = vst.msk [vmem:[#allocation2 + $0xd8] sm:$0xff] %vm480, 0.0
      %2238 = vst.msk [vmem:[#allocation2 + $0xe0] sm:$0xff] %vm480, 0.0
      %2239 = vst.msk [vmem:[#allocation2 + $0xe8] sm:$0x3] %vm2211, 0.0
      %2240 = vst.msk [vmem:[#allocation2 + $0xf0] sm:$0xff] %vm480, 0.0
      %2241 = vst.msk [vmem:[#allocation2 + $0xf8] sm:$0xff] %vm480, 0.0
      %2242 = vst.msk [vmem:[#allocation2 + $0x100] sm:$0x3] %vm2211, 0.0
      %2243 = vst.msk [vmem:[#allocation2 + $0x108] sm:$0xff] %vm480, 0.0
      %2244 = vst.msk [vmem:[#allocation2 + $0x110] sm:$0xff] %vm480, 0.0
      %2245 = vst.msk [vmem:[#allocation2 + $0x118] sm:$0x3] %vm2211, 0.0
      %2246 = vst.msk [vmem:[#allocation2 + $0x120] sm:$0xff] %vm480, 0.0
      %2247 = vst.msk [vmem:[#allocation2 + $0x128] sm:$0xff] %vm480, 0.0
      %2248 = vst.msk [vmem:[#allocation2 + $0x130] sm:$0x3] %vm2211, 0.0
      %2249 = vst.msk [vmem:[#allocation2 + $0x138] sm:$0xff] %vm480, 0.0
      %2250 = vst.msk [vmem:[#allocation2 + $0x140] sm:$0xff] %vm480, 0.0
      %2251 = vst.msk [vmem:[#allocation2 + $0x148] sm:$0x3] %vm2211, 0.0
      %2252 = vst.msk [vmem:[#allocation2 + $0x150] sm:$0xff] %vm480, 0.0
      %2253 = vst.msk [vmem:[#allocation2 + $0x158] sm:$0xff] %vm480, 0.0
      %2254 = vst.msk [vmem:[#allocation2 + $0x160] sm:$0x3] %vm2211, 0.0
      %2255 = vst.msk [vmem:[#allocation2 + $0x168] sm:$0xff] %vm480, 0.0
      %2256 = vst.msk [vmem:[#allocation2 + $0x170] sm:$0xff] %vm480, 0.0
      %2257 = vst.msk [vmem:[#allocation2 + $0x178] sm:$0x3] %vm2211, 0.0
      %2258 = vst.msk [vmem:[#allocation2 + $0x180] sm:$0xff] %vm480, 0.0
      %2259 = vst.msk [vmem:[#allocation2 + $0x188] sm:$0xff] %vm480, 0.0
      %2260 = vst.msk [vmem:[#allocation2 + $0x190] sm:$0x3] %vm2211, 0.0
      %2261 = vst.msk [vmem:[#allocation2 + $0x198] sm:$0xff] %vm480, 0.0
      %2262 = vst.msk [vmem:[#allocation2 + $0x1a0] sm:$0xff] %vm480, 0.0
      %2263 = vst.msk [vmem:[#allocation2 + $0x1a8] sm:$0x3] %vm2211, 0.0
      %s2264 = scalar_lea.vmem [#allocation2], 24
      %2265 = vst.msk [vmem:[%s2264 + $0x1] sm:$0xff] %vm480, %v2177
      %2266 = vst.msk [vmem:[%s2264 + $0x9] sm:$0xff] %vm480, %v2178
      %2267 = vst.msk [vmem:[%s2264 + $0x19] sm:$0xff] %vm480, %v2179
      %2268 = vst.msk [vmem:[%s2264 + $0x21] sm:$0xff] %vm480, %v2180
      %2269 = vst.msk [vmem:[%s2264 + $0x31] sm:$0xff] %vm480, %v2181
      %2270 = vst.msk [vmem:[%s2264 + $0x39] sm:$0xff] %vm480, %v2182
      %2271 = vst.msk [vmem:[%s2264 + $0x49] sm:$0xff] %vm480, %v2183
      %2272 = vst.msk [vmem:[%s2264 + $0x51] sm:$0xff] %vm480, %v2184
      %2273 = vst.msk [vmem:[%s2264 + $0x61] sm:$0xff] %vm480, %v2185
      %2274 = vst.msk [vmem:[%s2264 + $0x69] sm:$0xff] %vm480, %v2186
      %2275 = vst.msk [vmem:[%s2264 + $0x79] sm:$0xff] %vm480, %v2187
      %2276 = vst.msk [vmem:[%s2264 + $0x81] sm:$0xff] %vm480, %v2188
      %2277 = vst.msk [vmem:[%s2264 + $0x91] sm:$0xff] %vm480, %v2189
      %2278 = vst.msk [vmem:[%s2264 + $0x99] sm:$0xff] %vm480, %v2190
      %2279 = vst.msk [vmem:[%s2264 + $0xa9] sm:$0xff] %vm480, %v2191
      %2280 = vst.msk [vmem:[%s2264 + $0xb1] sm:$0xff] %vm480, %v2192
      %2281 = vst.msk [vmem:[%s2264 + $0xc1] sm:$0xff] %vm480, %v2193
      %2282 = vst.msk [vmem:[%s2264 + $0xc9] sm:$0xff] %vm480, %v2194
      %2283 = vst.msk [vmem:[%s2264 + $0xd9] sm:$0xff] %vm480, %v2195
      %2284 = vst.msk [vmem:[%s2264 + $0xe1] sm:$0xff] %vm480, %v2196
      %2285 = vst.msk [vmem:[%s2264 + $0xf1] sm:$0xff] %vm480, %v2197
      %2286 = vst.msk [vmem:[%s2264 + $0xf9] sm:$0xff] %vm480, %v2198
      %2287 = vst.msk [vmem:[%s2264 + $0x109] sm:$0xff] %vm480, %v2199
      %2288 = vst.msk [vmem:[%s2264 + $0x111] sm:$0xff] %vm480, %v2200
      %2289 = vst.msk [vmem:[%s2264 + $0x121] sm:$0xff] %vm480, %v2201
      %2290 = vst.msk [vmem:[%s2264 + $0x129] sm:$0xff] %vm480, %v2202
      %2291 = vst.msk [vmem:[%s2264 + $0x139] sm:$0xff] %vm480, %v2203
      %2292 = vst.msk [vmem:[%s2264 + $0x141] sm:$0xff] %vm480, %v2204
      %2293 = vst.msk [vmem:[%s2264 + $0x151] sm:$0xff] %vm480, %v2205
      %2294 = vst.msk [vmem:[%s2264 + $0x159] sm:$0xff] %vm480, %v2206
      %2295 = vst.msk [vmem:[%s2264 + $0x169] sm:$0xff] %vm480, %v2207
      %2296 = vst.msk [vmem:[%s2264 + $0x171] sm:$0xff] %vm480, %v2208
      %v2297 = vld [vmem:[#allocation2] sm:$0xff]
      %v2298 = vld [vmem:[#allocation2 + $0x8] sm:$0xff]
      %v2299 = vld [vmem:[#allocation2 + $0x10] sm:$0x3]
      %v2300 = vld [vmem:[#allocation2 + $0x18] sm:$0xff]
      %v2301 = vld [vmem:[#allocation2 + $0x20] sm:$0xff]
      %v2302 = vld [vmem:[#allocation2 + $0x28] sm:$0x3]
      %v2303 = vld [vmem:[#allocation2 + $0x30] sm:$0xff]
      %v2304 = vld [vmem:[#allocation2 + $0x38] sm:$0xff]
      %v2305 = vld [vmem:[#allocation2 + $0x40] sm:$0x3]
      %v2306 = vld [vmem:[#allocation2 + $0x48] sm:$0xff]
      %v2307 = vld [vmem:[#allocation2 + $0x50] sm:$0xff]
      %v2308 = vld [vmem:[#allocation2 + $0x58] sm:$0x3]
      %v2309 = vld [vmem:[#allocation2 + $0x60] sm:$0xff]
      %v2310 = vld [vmem:[#allocation2 + $0x68] sm:$0xff]
      %v2311 = vld [vmem:[#allocation2 + $0x70] sm:$0x3]
      %v2312 = vld [vmem:[#allocation2 + $0x78] sm:$0xff]
      %v2313 = vld [vmem:[#allocation2 + $0x80] sm:$0xff]
      %v2314 = vld [vmem:[#allocation2 + $0x88] sm:$0x3]
      %v2315 = vld [vmem:[#allocation2 + $0x90] sm:$0xff]
      %v2316 = vld [vmem:[#allocation2 + $0x98] sm:$0xff]
      %v2317 = vld [vmem:[#allocation2 + $0xa0] sm:$0x3]
      %v2318 = vld [vmem:[#allocation2 + $0xa8] sm:$0xff]
      %v2319 = vld [vmem:[#allocation2 + $0xb0] sm:$0xff]
      %v2320 = vld [vmem:[#allocation2 + $0xb8] sm:$0x3]
      %v2321 = vld [vmem:[#allocation2 + $0xc0] sm:$0xff]
      %v2322 = vld [vmem:[#allocation2 + $0xc8] sm:$0xff]
      %v2323 = vld [vmem:[#allocation2 + $0xd0] sm:$0x3]
      %v2324 = vld [vmem:[#allocation2 + $0xd8] sm:$0xff]
      %v2325 = vld [vmem:[#allocation2 + $0xe0] sm:$0xff]
      %v2326 = vld [vmem:[#allocation2 + $0xe8] sm:$0x3]
      %v2327 = vld [vmem:[#allocation2 + $0xf0] sm:$0xff]
      %v2328 = vld [vmem:[#allocation2 + $0xf8] sm:$0xff]
      %v2329 = vld [vmem:[#allocation2 + $0x100] sm:$0x3]
      %v2330 = vld [vmem:[#allocation2 + $0x108] sm:$0xff]
      %v2331 = vld [vmem:[#allocation2 + $0x110] sm:$0xff]
      %v2332 = vld [vmem:[#allocation2 + $0x118] sm:$0x3]
      %v2333 = vld [vmem:[#allocation2 + $0x120] sm:$0xff]
      %v2334 = vld [vmem:[#allocation2 + $0x128] sm:$0xff]
      %v2335 = vld [vmem:[#allocation2 + $0x130] sm:$0x3]
      %v2336 = vld [vmem:[#allocation2 + $0x138] sm:$0xff]
      %v2337 = vld [vmem:[#allocation2 + $0x140] sm:$0xff]
      %v2338 = vld [vmem:[#allocation2 + $0x148] sm:$0x3]
      %v2339 = vld [vmem:[#allocation2 + $0x150] sm:$0xff]
      %v2340 = vld [vmem:[#allocation2 + $0x158] sm:$0xff]
      %v2341 = vld [vmem:[#allocation2 + $0x160] sm:$0x3]
      %v2342 = vld [vmem:[#allocation2 + $0x168] sm:$0xff]
      %v2343 = vld [vmem:[#allocation2 + $0x170] sm:$0xff]
      %v2344 = vld [vmem:[#allocation2 + $0x178] sm:$0x3]
      %v2345 = vld [vmem:[#allocation2 + $0x180] sm:$0xff]
      %v2346 = vld [vmem:[#allocation2 + $0x188] sm:$0xff]
      %v2347 = vld [vmem:[#allocation2 + $0x190] sm:$0x3]
      %v2348 = vld [vmem:[#allocation2 + $0x198] sm:$0xff]
      %v2349 = vld [vmem:[#allocation2 + $0x1a0] sm:$0xff]
      %v2350 = vld [vmem:[#allocation2 + $0x1a8] sm:$0x3]
      %v2399 = vrot.slane %v2297, 1
      %v2400 = vrot.slane %v2298, 1
      %v2401 = vsel %vm399, %v2399, %v2400
      %v2402 = vrot.slane %v2299, 1
      %v2403 = vsel %vm399, %v2400, %v2402
      %v2404 = vrot.slane %v2300, 1
      %v2405 = vrot.slane %v2301, 1
      %v2406 = vsel %vm399, %v2404, %v2405
      %v2407 = vrot.slane %v2302, 1
      %v2408 = vsel %vm399, %v2405, %v2407
      %v2409 = vrot.slane %v2303, 1
      %v2410 = vrot.slane %v2304, 1
      %v2411 = vsel %vm399, %v2409, %v2410
      %v2412 = vrot.slane %v2305, 1
      %v2413 = vsel %vm399, %v2410, %v2412
      %v2414 = vrot.slane %v2306, 1
      %v2415 = vrot.slane %v2307, 1
      %v2416 = vsel %vm399, %v2414, %v2415
      %v2417 = vrot.slane %v2308, 1
      %v2418 = vsel %vm399, %v2415, %v2417
      %v2419 = vrot.slane %v2309, 1
      %v2420 = vrot.slane %v2310, 1
      %v2421 = vsel %vm399, %v2419, %v2420
      %v2422 = vrot.slane %v2311, 1
      %v2423 = vsel %vm399, %v2420, %v2422
      %v2424 = vrot.slane %v2312, 1
      %v2425 = vrot.slane %v2313, 1
      %v2426 = vsel %vm399, %v2424, %v2425
      %v2427 = vrot.slane %v2314, 1
      %v2428 = vsel %vm399, %v2425, %v2427
      %v2429 = vrot.slane %v2315, 1
      %v2430 = vrot.slane %v2316, 1
      %v2431 = vsel %vm399, %v2429, %v2430
      %v2432 = vrot.slane %v2317, 1
      %v2433 = vsel %vm399, %v2430, %v2432
      %v2434 = vrot.slane %v2318, 1
      %v2435 = vrot.slane %v2319, 1
      %v2436 = vsel %vm399, %v2434, %v2435
      %v2437 = vrot.slane %v2320, 1
      %v2438 = vsel %vm399, %v2435, %v2437
      %v2439 = vrot.slane %v2321, 1
      %v2440 = vrot.slane %v2322, 1
      %v2441 = vsel %vm399, %v2439, %v2440
      %v2442 = vrot.slane %v2323, 1
      %v2443 = vsel %vm399, %v2440, %v2442
      %v2444 = vrot.slane %v2324, 1
      %v2445 = vrot.slane %v2325, 1
      %v2446 = vsel %vm399, %v2444, %v2445
      %v2447 = vrot.slane %v2326, 1
      %v2448 = vsel %vm399, %v2445, %v2447
      %v2449 = vrot.slane %v2327, 1
      %v2450 = vrot.slane %v2328, 1
      %v2451 = vsel %vm399, %v2449, %v2450
      %v2452 = vrot.slane %v2329, 1
      %v2453 = vsel %vm399, %v2450, %v2452
      %v2454 = vrot.slane %v2330, 1
      %v2455 = vrot.slane %v2331, 1
      %v2456 = vsel %vm399, %v2454, %v2455
      %v2457 = vrot.slane %v2332, 1
      %v2458 = vsel %vm399, %v2455, %v2457
      %v2459 = vrot.slane %v2333, 1
      %v2460 = vrot.slane %v2334, 1
      %v2461 = vsel %vm399, %v2459, %v2460
      %v2462 = vrot.slane %v2335, 1
      %v2463 = vsel %vm399, %v2460, %v2462
      %v2464 = vrot.slane %v2336, 1
      %v2465 = vrot.slane %v2337, 1
      %v2466 = vsel %vm399, %v2464, %v2465
      %v2467 = vrot.slane %v2338, 1
      %v2468 = vsel %vm399, %v2465, %v2467
      %v2469 = vrot.slane %v2339, 1
      %v2470 = vrot.slane %v2340, 1
      %v2471 = vsel %vm399, %v2469, %v2470
      %v2472 = vrot.slane %v2341, 1
      %v2473 = vsel %vm399, %v2470, %v2472
      %v2474 = vrot.slane %v2342, 1
      %v2475 = vrot.slane %v2343, 1
      %v2476 = vsel %vm399, %v2474, %v2475
      %v2477 = vrot.slane %v2344, 1
      %v2478 = vsel %vm399, %v2475, %v2477
      %v2479 = vsel %vm480, %v2401, 0
      %v2481 = vsel %vm480, %v2403, 0
      %v2483 = vsel %vm480, %v2406, 0
      %v2485 = vsel %vm480, %v2408, 0
      %v2487 = vsel %vm480, %v2411, 0
      %v2489 = vsel %vm480, %v2413, 0
      %v2491 = vsel %vm480, %v2416, 0
      %v2493 = vsel %vm480, %v2418, 0
      %v2495 = vsel %vm480, %v2421, 0
      %v2497 = vsel %vm480, %v2423, 0
      %v2499 = vsel %vm480, %v2426, 0
      %v2501 = vsel %vm480, %v2428, 0
      %v2503 = vsel %vm480, %v2431, 0
      %v2505 = vsel %vm480, %v2433, 0
      %v2507 = vsel %vm480, %v2436, 0
      %v2509 = vsel %vm480, %v2438, 0
      %v2511 = vsel %vm480, %v2441, 0
      %v2513 = vsel %vm480, %v2443, 0
      %v2515 = vsel %vm480, %v2446, 0
      %v2517 = vsel %vm480, %v2448, 0
      %v2519 = vsel %vm480, %v2451, 0
      %v2521 = vsel %vm480, %v2453, 0
      %v2523 = vsel %vm480, %v2456, 0
      %v2525 = vsel %vm480, %v2458, 0
      %v2527 = vsel %vm480, %v2461, 0
      %v2529 = vsel %vm480, %v2463, 0
      %v2531 = vsel %vm480, %v2466, 0
      %v2533 = vsel %vm480, %v2468, 0
      %v2535 = vsel %vm480, %v2471, 0
      %v2537 = vsel %vm480, %v2473, 0
      %v2539 = vsel %vm480, %v2476, 0
      %v2541 = vsel %vm480, %v2478, 0
      %v2544 = vsel %vm545, %v343, 0
      %2546 = vmatpush.msra.mxu0 0.0
      %2547 = vmatpush.msra.mxu0 0.0
      %2548 = vmatpush.msra.mxu0 0.0
      %2549 = vmatpush.msra.mxu0 0.0
      %2550 = vmatpush.msra.mxu0 0.0
      %2551 = vmatpush.msra.mxu0 0.0
      %2552 = vmatpush.msra.mxu0 0.0
      %2553 = vmatpush.msra.mxu0 0.0
      %2554 = vmatpush.msra.mxu0 0.0
      %2555 = vmatpush.msra.mxu0 0.0
      %2556 = vmatpush.msra.mxu0 0.0
      %2557 = vmatpush.msra.mxu0 0.0
      %2558 = vmatpush.msra.mxu0 0.0
      %2559 = vmatpush.msra.mxu0 0.0
      %2560 = vmatpush.msra.mxu0 0.0
      %2561 = vmatpush.msra.mxu0 %v2544
      %2562 = vmatmul.f32.gmra.mxu0 %v2479
      %v2563 = vpop.f32.mrf.mxu0
      %v2564 = vadd.f32 0.0, %v2563
      %2565 = vmatmul.f32.gmra.mxu0 %v2481
      %v2566 = vpop.f32.mrf.mxu0
      %v2567 = vadd.f32 0.0, %v2566
      %2568 = vmatmul.f32.gmra.mxu0 %v2483
      %v2569 = vpop.f32.mrf.mxu0
      %v2570 = vadd.f32 0.0, %v2569
      %2571 = vmatmul.f32.gmra.mxu0 %v2485
      %v2572 = vpop.f32.mrf.mxu0
      %v2573 = vadd.f32 0.0, %v2572
      %2574 = vmatmul.f32.gmra.mxu0 %v2487
      %v2575 = vpop.f32.mrf.mxu0
      %v2576 = vadd.f32 0.0, %v2575
      %2577 = vmatmul.f32.gmra.mxu0 %v2489
      %v2578 = vpop.f32.mrf.mxu0
      %v2579 = vadd.f32 0.0, %v2578
      %2580 = vmatmul.f32.gmra.mxu0 %v2491
      %v2581 = vpop.f32.mrf.mxu0
      %v2582 = vadd.f32 0.0, %v2581
      %2583 = vmatmul.f32.gmra.mxu0 %v2493
      %v2584 = vpop.f32.mrf.mxu0
      %v2585 = vadd.f32 0.0, %v2584
      %2586 = vmatmul.f32.gmra.mxu0 %v2495
      %v2587 = vpop.f32.mrf.mxu0
      %v2588 = vadd.f32 0.0, %v2587
      %2589 = vmatmul.f32.gmra.mxu0 %v2497
      %v2590 = vpop.f32.mrf.mxu0
      %v2591 = vadd.f32 0.0, %v2590
      %2592 = vmatmul.f32.gmra.mxu0 %v2499
      %v2593 = vpop.f32.mrf.mxu0
      %v2594 = vadd.f32 0.0, %v2593
      %2595 = vmatmul.f32.gmra.mxu0 %v2501
      %v2596 = vpop.f32.mrf.mxu0
      %v2597 = vadd.f32 0.0, %v2596
      %2598 = vmatmul.f32.gmra.mxu0 %v2503
      %v2599 = vpop.f32.mrf.mxu0
      %v2600 = vadd.f32 0.0, %v2599
      %2601 = vmatmul.f32.gmra.mxu0 %v2505
      %v2602 = vpop.f32.mrf.mxu0
      %v2603 = vadd.f32 0.0, %v2602
      %2604 = vmatmul.f32.gmra.mxu0 %v2507
      %v2605 = vpop.f32.mrf.mxu0
      %v2606 = vadd.f32 0.0, %v2605
      %2607 = vmatmul.f32.gmra.mxu0 %v2509
      %v2608 = vpop.f32.mrf.mxu0
      %v2609 = vadd.f32 0.0, %v2608
      %2610 = vmatmul.f32.gmra.mxu0 %v2511
      %v2611 = vpop.f32.mrf.mxu0
      %v2612 = vadd.f32 0.0, %v2611
      %2613 = vmatmul.f32.gmra.mxu0 %v2513
      %v2614 = vpop.f32.mrf.mxu0
      %v2615 = vadd.f32 0.0, %v2614
      %2616 = vmatmul.f32.gmra.mxu0 %v2515
      %v2617 = vpop.f32.mrf.mxu0
      %v2618 = vadd.f32 0.0, %v2617
      %2619 = vmatmul.f32.gmra.mxu0 %v2517
      %v2620 = vpop.f32.mrf.mxu0
      %v2621 = vadd.f32 0.0, %v2620
      %2622 = vmatmul.f32.gmra.mxu0 %v2519
      %v2623 = vpop.f32.mrf.mxu0
      %v2624 = vadd.f32 0.0, %v2623
      %2625 = vmatmul.f32.gmra.mxu0 %v2521
      %v2626 = vpop.f32.mrf.mxu0
      %v2627 = vadd.f32 0.0, %v2626
      %2628 = vmatmul.f32.gmra.mxu0 %v2523
      %v2629 = vpop.f32.mrf.mxu0
      %v2630 = vadd.f32 0.0, %v2629
      %2631 = vmatmul.f32.gmra.mxu0 %v2525
      %v2632 = vpop.f32.mrf.mxu0
      %v2633 = vadd.f32 0.0, %v2632
      %2634 = vmatmul.f32.gmra.mxu0 %v2527
      %v2635 = vpop.f32.mrf.mxu0
      %v2636 = vadd.f32 0.0, %v2635
      %2637 = vmatmul.f32.gmra.mxu0 %v2529
      %v2638 = vpop.f32.mrf.mxu0
      %v2639 = vadd.f32 0.0, %v2638
      %2640 = vmatmul.f32.gmra.mxu0 %v2531
      %v2641 = vpop.f32.mrf.mxu0
      %v2642 = vadd.f32 0.0, %v2641
      %2643 = vmatmul.f32.gmra.mxu0 %v2533
      %v2644 = vpop.f32.mrf.mxu0
      %v2645 = vadd.f32 0.0, %v2644
      %2646 = vmatmul.f32.gmra.mxu0 %v2535
      %v2647 = vpop.f32.mrf.mxu0
      %v2648 = vadd.f32 0.0, %v2647
      %2649 = vmatmul.f32.gmra.mxu0 %v2537
      %v2650 = vpop.f32.mrf.mxu0
      %v2651 = vadd.f32 0.0, %v2650
      %2652 = vmatmul.f32.gmra.mxu0 %v2539
      %v2653 = vpop.f32.mrf.mxu0
      %v2654 = vadd.f32 0.0, %v2653
      %2655 = vmatmul.f32.gmra.mxu0 %v2541
      %v2656 = vpop.f32.mrf.mxu0
      %v2657 = vadd.f32 0.0, %v2656
      %2658 = vdwg.mxu0
      %v2659 = vsel %vm480, %v2297, 0
      %v2661 = vsel %vm480, %v2298, 0
      %v2663 = vsel %vm480, %v2300, 0
      %v2665 = vsel %vm480, %v2301, 0
      %v2667 = vsel %vm480, %v2303, 0
      %v2669 = vsel %vm480, %v2304, 0
      %v2671 = vsel %vm480, %v2306, 0
      %v2673 = vsel %vm480, %v2307, 0
      %v2675 = vsel %vm480, %v2309, 0
      %v2677 = vsel %vm480, %v2310, 0
      %v2679 = vsel %vm480, %v2312, 0
      %v2681 = vsel %vm480, %v2313, 0
      %v2683 = vsel %vm480, %v2315, 0
      %v2685 = vsel %vm480, %v2316, 0
      %v2687 = vsel %vm480, %v2318, 0
      %v2689 = vsel %vm480, %v2319, 0
      %v2691 = vsel %vm480, %v2321, 0
      %v2693 = vsel %vm480, %v2322, 0
      %v2695 = vsel %vm480, %v2324, 0
      %v2697 = vsel %vm480, %v2325, 0
      %v2699 = vsel %vm480, %v2327, 0
      %v2701 = vsel %vm480, %v2328, 0
      %v2703 = vsel %vm480, %v2330, 0
      %v2705 = vsel %vm480, %v2331, 0
      %v2707 = vsel %vm480, %v2333, 0
      %v2709 = vsel %vm480, %v2334, 0
      %v2711 = vsel %vm480, %v2336, 0
      %v2713 = vsel %vm480, %v2337, 0
      %v2715 = vsel %vm480, %v2339, 0
      %v2717 = vsel %vm480, %v2340, 0
      %v2719 = vsel %vm480, %v2342, 0
      %v2721 = vsel %vm480, %v2343, 0
      %v2724 = vsel %vm545, %v342, 0
      %2726 = vmatpush.msra.mxu0 0.0
      %2727 = vmatpush.msra.mxu0 0.0
      %2728 = vmatpush.msra.mxu0 0.0
      %2729 = vmatpush.msra.mxu0 0.0
      %2730 = vmatpush.msra.mxu0 0.0
      %2731 = vmatpush.msra.mxu0 0.0
      %2732 = vmatpush.msra.mxu0 0.0
      %2733 = vmatpush.msra.mxu0 0.0
      %2734 = vmatpush.msra.mxu0 0.0
      %2735 = vmatpush.msra.mxu0 0.0
      %2736 = vmatpush.msra.mxu0 0.0
      %2737 = vmatpush.msra.mxu0 0.0
      %2738 = vmatpush.msra.mxu0 0.0
      %2739 = vmatpush.msra.mxu0 0.0
      %2740 = vmatpush.msra.mxu0 0.0
      %2741 = vmatpush.msra.mxu0 %v2724
      %2742 = vmatmul.f32.gmra.mxu0 %v2659
      %v2743 = vpop.f32.mrf.mxu0
      %v2744 = vadd.f32 %v2564, %v2743
      %2745 = vmatmul.f32.gmra.mxu0 %v2661
      %v2746 = vpop.f32.mrf.mxu0
      %v2747 = vadd.f32 %v2567, %v2746
      %2748 = vmatmul.f32.gmra.mxu0 %v2663
      %v2749 = vpop.f32.mrf.mxu0
      %v2750 = vadd.f32 %v2570, %v2749
      %2751 = vmatmul.f32.gmra.mxu0 %v2665
      %v2752 = vpop.f32.mrf.mxu0
      %v2753 = vadd.f32 %v2573, %v2752
      %2754 = vmatmul.f32.gmra.mxu0 %v2667
      %v2755 = vpop.f32.mrf.mxu0
      %v2756 = vadd.f32 %v2576, %v2755
      %2757 = vmatmul.f32.gmra.mxu0 %v2669
      %v2758 = vpop.f32.mrf.mxu0
      %v2759 = vadd.f32 %v2579, %v2758
      %2760 = vmatmul.f32.gmra.mxu0 %v2671
      %v2761 = vpop.f32.mrf.mxu0
      %v2762 = vadd.f32 %v2582, %v2761
      %2763 = vmatmul.f32.gmra.mxu0 %v2673
      %v2764 = vpop.f32.mrf.mxu0
      %v2765 = vadd.f32 %v2585, %v2764
      %2766 = vmatmul.f32.gmra.mxu0 %v2675
      %v2767 = vpop.f32.mrf.mxu0
      %v2768 = vadd.f32 %v2588, %v2767
      %2769 = vmatmul.f32.gmra.mxu0 %v2677
      %v2770 = vpop.f32.mrf.mxu0
      %v2771 = vadd.f32 %v2591, %v2770
      %2772 = vmatmul.f32.gmra.mxu0 %v2679
      %v2773 = vpop.f32.mrf.mxu0
      %v2774 = vadd.f32 %v2594, %v2773
      %2775 = vmatmul.f32.gmra.mxu0 %v2681
      %v2776 = vpop.f32.mrf.mxu0
      %v2777 = vadd.f32 %v2597, %v2776
      %2778 = vmatmul.f32.gmra.mxu0 %v2683
      %v2779 = vpop.f32.mrf.mxu0
      %v2780 = vadd.f32 %v2600, %v2779
      %2781 = vmatmul.f32.gmra.mxu0 %v2685
      %v2782 = vpop.f32.mrf.mxu0
      %v2783 = vadd.f32 %v2603, %v2782
      %2784 = vmatmul.f32.gmra.mxu0 %v2687
      %v2785 = vpop.f32.mrf.mxu0
      %v2786 = vadd.f32 %v2606, %v2785
      %2787 = vmatmul.f32.gmra.mxu0 %v2689
      %v2788 = vpop.f32.mrf.mxu0
      %v2789 = vadd.f32 %v2609, %v2788
      %2790 = vmatmul.f32.gmra.mxu0 %v2691
      %v2791 = vpop.f32.mrf.mxu0
      %v2792 = vadd.f32 %v2612, %v2791
      %2793 = vmatmul.f32.gmra.mxu0 %v2693
      %v2794 = vpop.f32.mrf.mxu0
      %v2795 = vadd.f32 %v2615, %v2794
      %2796 = vmatmul.f32.gmra.mxu0 %v2695
      %v2797 = vpop.f32.mrf.mxu0
      %v2798 = vadd.f32 %v2618, %v2797
      %2799 = vmatmul.f32.gmra.mxu0 %v2697
      %v2800 = vpop.f32.mrf.mxu0
      %v2801 = vadd.f32 %v2621, %v2800
      %2802 = vmatmul.f32.gmra.mxu0 %v2699
      %v2803 = vpop.f32.mrf.mxu0
      %v2804 = vadd.f32 %v2624, %v2803
      %2805 = vmatmul.f32.gmra.mxu0 %v2701
      %v2806 = vpop.f32.mrf.mxu0
      %v2807 = vadd.f32 %v2627, %v2806
      %2808 = vmatmul.f32.gmra.mxu0 %v2703
      %v2809 = vpop.f32.mrf.mxu0
      %v2810 = vadd.f32 %v2630, %v2809
      %2811 = vmatmul.f32.gmra.mxu0 %v2705
      %v2812 = vpop.f32.mrf.mxu0
      %v2813 = vadd.f32 %v2633, %v2812
      %2814 = vmatmul.f32.gmra.mxu0 %v2707
      %v2815 = vpop.f32.mrf.mxu0
      %v2816 = vadd.f32 %v2636, %v2815
      %2817 = vmatmul.f32.gmra.mxu0 %v2709
      %v2818 = vpop.f32.mrf.mxu0
      %v2819 = vadd.f32 %v2639, %v2818
      %2820 = vmatmul.f32.gmra.mxu0 %v2711
      %v2821 = vpop.f32.mrf.mxu0
      %v2822 = vadd.f32 %v2642, %v2821
      %2823 = vmatmul.f32.gmra.mxu0 %v2713
      %v2824 = vpop.f32.mrf.mxu0
      %v2825 = vadd.f32 %v2645, %v2824
      %2826 = vmatmul.f32.gmra.mxu0 %v2715
      %v2827 = vpop.f32.mrf.mxu0
      %v2828 = vadd.f32 %v2648, %v2827
      %2829 = vmatmul.f32.gmra.mxu0 %v2717
      %v2830 = vpop.f32.mrf.mxu0
      %v2831 = vadd.f32 %v2651, %v2830
      %2832 = vmatmul.f32.gmra.mxu0 %v2719
      %v2833 = vpop.f32.mrf.mxu0
      %v2834 = vadd.f32 %v2654, %v2833
      %2835 = vmatmul.f32.gmra.mxu0 %v2721
      %v2836 = vpop.f32.mrf.mxu0
      %v2837 = vadd.f32 %v2657, %v2836
      %2838 = vdwg.mxu0
      %v2839 = vrot.slane %v2297, 2
      %v2840 = vrot.slane %v2298, 2
      %v2841 = vsel %vm842, %v2839, %v2840
      %v2842 = vrot.slane %v2299, 2
      %v2843 = vsel %vm842, %v2840, %v2842
      %v2844 = vrot.slane %v2300, 2
      %v2845 = vrot.slane %v2301, 2
      %v2846 = vsel %vm842, %v2844, %v2845
      %v2847 = vrot.slane %v2302, 2
      %v2848 = vsel %vm842, %v2845, %v2847
      %v2849 = vrot.slane %v2303, 2
      %v2850 = vrot.slane %v2304, 2
      %v2851 = vsel %vm842, %v2849, %v2850
      %v2852 = vrot.slane %v2305, 2
      %v2853 = vsel %vm842, %v2850, %v2852
      %v2854 = vrot.slane %v2306, 2
      %v2855 = vrot.slane %v2307, 2
      %v2856 = vsel %vm842, %v2854, %v2855
      %v2857 = vrot.slane %v2308, 2
      %v2858 = vsel %vm842, %v2855, %v2857
      %v2859 = vrot.slane %v2309, 2
      %v2860 = vrot.slane %v2310, 2
      %v2861 = vsel %vm842, %v2859, %v2860
      %v2862 = vrot.slane %v2311, 2
      %v2863 = vsel %vm842, %v2860, %v2862
      %v2864 = vrot.slane %v2312, 2
      %v2865 = vrot.slane %v2313, 2
      %v2866 = vsel %vm842, %v2864, %v2865
      %v2867 = vrot.slane %v2314, 2
      %v2868 = vsel %vm842, %v2865, %v2867
      %v2869 = vrot.slane %v2315, 2
      %v2870 = vrot.slane %v2316, 2
      %v2871 = vsel %vm842, %v2869, %v2870
      %v2872 = vrot.slane %v2317, 2
      %v2873 = vsel %vm842, %v2870, %v2872
      %v2874 = vrot.slane %v2318, 2
      %v2875 = vrot.slane %v2319, 2
      %v2876 = vsel %vm842, %v2874, %v2875
      %v2877 = vrot.slane %v2320, 2
      %v2878 = vsel %vm842, %v2875, %v2877
      %v2879 = vrot.slane %v2321, 2
      %v2880 = vrot.slane %v2322, 2
      %v2881 = vsel %vm842, %v2879, %v2880
      %v2882 = vrot.slane %v2323, 2
      %v2883 = vsel %vm842, %v2880, %v2882
      %v2884 = vrot.slane %v2324, 2
      %v2885 = vrot.slane %v2325, 2
      %v2886 = vsel %vm842, %v2884, %v2885
      %v2887 = vrot.slane %v2326, 2
      %v2888 = vsel %vm842, %v2885, %v2887
      %v2889 = vrot.slane %v2327, 2
      %v2890 = vrot.slane %v2328, 2
      %v2891 = vsel %vm842, %v2889, %v2890
      %v2892 = vrot.slane %v2329, 2
      %v2893 = vsel %vm842, %v2890, %v2892
      %v2894 = vrot.slane %v2330, 2
      %v2895 = vrot.slane %v2331, 2
      %v2896 = vsel %vm842, %v2894, %v2895
      %v2897 = vrot.slane %v2332, 2
      %v2898 = vsel %vm842, %v2895, %v2897
      %v2899 = vrot.slane %v2333, 2
      %v2900 = vrot.slane %v2334, 2
      %v2901 = vsel %vm842, %v2899, %v2900
      %v2902 = vrot.slane %v2335, 2
      %v2903 = vsel %vm842, %v2900, %v2902
      %v2904 = vrot.slane %v2336, 2
      %v2905 = vrot.slane %v2337, 2
      %v2906 = vsel %vm842, %v2904, %v2905
      %v2907 = vrot.slane %v2338, 2
      %v2908 = vsel %vm842, %v2905, %v2907
      %v2909 = vrot.slane %v2339, 2
      %v2910 = vrot.slane %v2340, 2
      %v2911 = vsel %vm842, %v2909, %v2910
      %v2912 = vrot.slane %v2341, 2
      %v2913 = vsel %vm842, %v2910, %v2912
      %v2914 = vrot.slane %v2342, 2
      %v2915 = vrot.slane %v2343, 2
      %v2916 = vsel %vm842, %v2914, %v2915
      %v2917 = vrot.slane %v2344, 2
      %v2918 = vsel %vm842, %v2915, %v2917
      %v2919 = vsel %vm480, %v2841, 0
      %v2921 = vsel %vm480, %v2843, 0
      %v2923 = vsel %vm480, %v2846, 0
      %v2925 = vsel %vm480, %v2848, 0
      %v2927 = vsel %vm480, %v2851, 0
      %v2929 = vsel %vm480, %v2853, 0
      %v2931 = vsel %vm480, %v2856, 0
      %v2933 = vsel %vm480, %v2858, 0
      %v2935 = vsel %vm480, %v2861, 0
      %v2937 = vsel %vm480, %v2863, 0
      %v2939 = vsel %vm480, %v2866, 0
      %v2941 = vsel %vm480, %v2868, 0
      %v2943 = vsel %vm480, %v2871, 0
      %v2945 = vsel %vm480, %v2873, 0
      %v2947 = vsel %vm480, %v2876, 0
      %v2949 = vsel %vm480, %v2878, 0
      %v2951 = vsel %vm480, %v2881, 0
      %v2953 = vsel %vm480, %v2883, 0
      %v2955 = vsel %vm480, %v2886, 0
      %v2957 = vsel %vm480, %v2888, 0
      %v2959 = vsel %vm480, %v2891, 0
      %v2961 = vsel %vm480, %v2893, 0
      %v2963 = vsel %vm480, %v2896, 0
      %v2965 = vsel %vm480, %v2898, 0
      %v2967 = vsel %vm480, %v2901, 0
      %v2969 = vsel %vm480, %v2903, 0
      %v2971 = vsel %vm480, %v2906, 0
      %v2973 = vsel %vm480, %v2908, 0
      %v2975 = vsel %vm480, %v2911, 0
      %v2977 = vsel %vm480, %v2913, 0
      %v2979 = vsel %vm480, %v2916, 0
      %v2981 = vsel %vm480, %v2918, 0
      %v2984 = vsel %vm545, %v344, 0
      %2986 = vmatpush.msra.mxu0 0.0
      %2987 = vmatpush.msra.mxu0 0.0
      %2988 = vmatpush.msra.mxu0 0.0
      %2989 = vmatpush.msra.mxu0 0.0
      %2990 = vmatpush.msra.mxu0 0.0
      %2991 = vmatpush.msra.mxu0 0.0
      %2992 = vmatpush.msra.mxu0 0.0
      %2993 = vmatpush.msra.mxu0 0.0
      %2994 = vmatpush.msra.mxu0 0.0
      %2995 = vmatpush.msra.mxu0 0.0
      %2996 = vmatpush.msra.mxu0 0.0
      %2997 = vmatpush.msra.mxu0 0.0
      %2998 = vmatpush.msra.mxu0 0.0
      %2999 = vmatpush.msra.mxu0 0.0
      %3000 = vmatpush.msra.mxu0 0.0
      %3001 = vmatpush.msra.mxu0 %v2984
      %3002 = vmatmul.f32.gmra.mxu0 %v2919
      %v3003 = vpop.f32.mrf.mxu0
      %v3004 = vadd.f32 0.0, %v3003
      %3005 = vmatmul.f32.gmra.mxu0 %v2921
      %v3006 = vpop.f32.mrf.mxu0
      %v3007 = vadd.f32 0.0, %v3006
      %3008 = vmatmul.f32.gmra.mxu0 %v2923
      %v3009 = vpop.f32.mrf.mxu0
      %v3010 = vadd.f32 0.0, %v3009
      %3011 = vmatmul.f32.gmra.mxu0 %v2925
      %v3012 = vpop.f32.mrf.mxu0
      %v3013 = vadd.f32 0.0, %v3012
      %3014 = vmatmul.f32.gmra.mxu0 %v2927
      %v3015 = vpop.f32.mrf.mxu0
      %v3016 = vadd.f32 0.0, %v3015
      %3017 = vmatmul.f32.gmra.mxu0 %v2929
      %v3018 = vpop.f32.mrf.mxu0
      %v3019 = vadd.f32 0.0, %v3018
      %3020 = vmatmul.f32.gmra.mxu0 %v2931
      %v3021 = vpop.f32.mrf.mxu0
      %v3022 = vadd.f32 0.0, %v3021
      %3023 = vmatmul.f32.gmra.mxu0 %v2933
      %v3024 = vpop.f32.mrf.mxu0
      %v3025 = vadd.f32 0.0, %v3024
      %3026 = vmatmul.f32.gmra.mxu0 %v2935
      %v3027 = vpop.f32.mrf.mxu0
      %v3028 = vadd.f32 0.0, %v3027
      %3029 = vmatmul.f32.gmra.mxu0 %v2937
      %v3030 = vpop.f32.mrf.mxu0
      %v3031 = vadd.f32 0.0, %v3030
      %3032 = vmatmul.f32.gmra.mxu0 %v2939
      %v3033 = vpop.f32.mrf.mxu0
      %v3034 = vadd.f32 0.0, %v3033
      %3035 = vmatmul.f32.gmra.mxu0 %v2941
      %v3036 = vpop.f32.mrf.mxu0
      %v3037 = vadd.f32 0.0, %v3036
      %3038 = vmatmul.f32.gmra.mxu0 %v2943
      %v3039 = vpop.f32.mrf.mxu0
      %v3040 = vadd.f32 0.0, %v3039
      %3041 = vmatmul.f32.gmra.mxu0 %v2945
      %v3042 = vpop.f32.mrf.mxu0
      %v3043 = vadd.f32 0.0, %v3042
      %3044 = vmatmul.f32.gmra.mxu0 %v2947
      %v3045 = vpop.f32.mrf.mxu0
      %v3046 = vadd.f32 0.0, %v3045
      %3047 = vmatmul.f32.gmra.mxu0 %v2949
      %v3048 = vpop.f32.mrf.mxu0
      %v3049 = vadd.f32 0.0, %v3048
      %3050 = vmatmul.f32.gmra.mxu0 %v2951
      %v3051 = vpop.f32.mrf.mxu0
      %v3052 = vadd.f32 0.0, %v3051
      %3053 = vmatmul.f32.gmra.mxu0 %v2953
      %v3054 = vpop.f32.mrf.mxu0
      %v3055 = vadd.f32 0.0, %v3054
      %3056 = vmatmul.f32.gmra.mxu0 %v2955
      %v3057 = vpop.f32.mrf.mxu0
      %v3058 = vadd.f32 0.0, %v3057
      %3059 = vmatmul.f32.gmra.mxu0 %v2957
      %v3060 = vpop.f32.mrf.mxu0
      %v3061 = vadd.f32 0.0, %v3060
      %3062 = vmatmul.f32.gmra.mxu0 %v2959
      %v3063 = vpop.f32.mrf.mxu0
      %v3064 = vadd.f32 0.0, %v3063
      %3065 = vmatmul.f32.gmra.mxu0 %v2961
      %v3066 = vpop.f32.mrf.mxu0
      %v3067 = vadd.f32 0.0, %v3066
      %3068 = vmatmul.f32.gmra.mxu0 %v2963
      %v3069 = vpop.f32.mrf.mxu0
      %v3070 = vadd.f32 0.0, %v3069
      %3071 = vmatmul.f32.gmra.mxu0 %v2965
      %v3072 = vpop.f32.mrf.mxu0
      %v3073 = vadd.f32 0.0, %v3072
      %3074 = vmatmul.f32.gmra.mxu0 %v2967
      %v3075 = vpop.f32.mrf.mxu0
      %v3076 = vadd.f32 0.0, %v3075
      %3077 = vmatmul.f32.gmra.mxu0 %v2969
      %v3078 = vpop.f32.mrf.mxu0
      %v3079 = vadd.f32 0.0, %v3078
      %3080 = vmatmul.f32.gmra.mxu0 %v2971
      %v3081 = vpop.f32.mrf.mxu0
      %v3082 = vadd.f32 0.0, %v3081
      %3083 = vmatmul.f32.gmra.mxu0 %v2973
      %v3084 = vpop.f32.mrf.mxu0
      %v3085 = vadd.f32 0.0, %v3084
      %3086 = vmatmul.f32.gmra.mxu0 %v2975
      %v3087 = vpop.f32.mrf.mxu0
      %v3088 = vadd.f32 0.0, %v3087
      %3089 = vmatmul.f32.gmra.mxu0 %v2977
      %v3090 = vpop.f32.mrf.mxu0
      %v3091 = vadd.f32 0.0, %v3090
      %3092 = vmatmul.f32.gmra.mxu0 %v2979
      %v3093 = vpop.f32.mrf.mxu0
      %v3094 = vadd.f32 0.0, %v3093
      %3095 = vmatmul.f32.gmra.mxu0 %v2981
      %v3096 = vpop.f32.mrf.mxu0
      %v3097 = vadd.f32 0.0, %v3096
      %3098 = vdwg.mxu0
      %v3099 = vadd.f32 %v2744, %v3004
      %v3100 = vadd.f32 %v2747, %v3007
      %v3101 = vadd.f32 %v2750, %v3010
      %v3102 = vadd.f32 %v2753, %v3013
      %v3103 = vadd.f32 %v2756, %v3016
      %v3104 = vadd.f32 %v2759, %v3019
      %v3105 = vadd.f32 %v2762, %v3022
      %v3106 = vadd.f32 %v2765, %v3025
      %v3107 = vadd.f32 %v2768, %v3028
      %v3108 = vadd.f32 %v2771, %v3031
      %v3109 = vadd.f32 %v2774, %v3034
      %v3110 = vadd.f32 %v2777, %v3037
      %v3111 = vadd.f32 %v2780, %v3040
      %v3112 = vadd.f32 %v2783, %v3043
      %v3113 = vadd.f32 %v2786, %v3046
      %v3114 = vadd.f32 %v2789, %v3049
      %v3115 = vadd.f32 %v2792, %v3052
      %v3116 = vadd.f32 %v2795, %v3055
      %v3117 = vadd.f32 %v2798, %v3058
      %v3118 = vadd.f32 %v2801, %v3061
      %v3119 = vadd.f32 %v2804, %v3064
      %v3120 = vadd.f32 %v2807, %v3067
      %v3121 = vadd.f32 %v2810, %v3070
      %v3122 = vadd.f32 %v2813, %v3073
      %v3123 = vadd.f32 %v2816, %v3076
      %v3124 = vadd.f32 %v2819, %v3079
      %v3125 = vadd.f32 %v2822, %v3082
      %v3126 = vadd.f32 %v2825, %v3085
      %v3127 = vadd.f32 %v2828, %v3088
      %v3128 = vadd.f32 %v2831, %v3091
      %v3129 = vadd.f32 %v2834, %v3094
      %v3130 = vadd.f32 %v2837, %v3097
      %v3132 = vsel %vm480, %v2345, 0
      %v3135 = vsel %vm480, %v2346, 0
      %v3138 = vsel %vm545, %v345, 0
      %3140 = vmatpush.msra.mxu0 0.0
      %3141 = vmatpush.msra.mxu0 0.0
      %3142 = vmatpush.msra.mxu0 0.0
      %3143 = vmatpush.msra.mxu0 0.0
      %3144 = vmatpush.msra.mxu0 0.0
      %3145 = vmatpush.msra.mxu0 0.0
      %3146 = vmatpush.msra.mxu0 0.0
      %3147 = vmatpush.msra.mxu0 0.0
      %3148 = vmatpush.msra.mxu0 0.0
      %3149 = vmatpush.msra.mxu0 0.0
      %3150 = vmatpush.msra.mxu0 0.0
      %3151 = vmatpush.msra.mxu0 0.0
      %3152 = vmatpush.msra.mxu0 0.0
      %3153 = vmatpush.msra.mxu0 0.0
      %3154 = vmatpush.msra.mxu0 0.0
      %3155 = vmatpush.msra.mxu0 %v3138
      %3156 = vmatmul.f32.gmra.mxu0 %v2663
      %v3157 = vpop.f32.mrf.mxu0
      %v3158 = vadd.f32 0.0, %v3157
      %3159 = vmatmul.f32.gmra.mxu0 %v2665
      %v3160 = vpop.f32.mrf.mxu0
      %v3161 = vadd.f32 0.0, %v3160
      %3162 = vmatmul.f32.gmra.mxu0 %v2667
      %v3163 = vpop.f32.mrf.mxu0
      %v3164 = vadd.f32 0.0, %v3163
      %3165 = vmatmul.f32.gmra.mxu0 %v2669
      %v3166 = vpop.f32.mrf.mxu0
      %v3167 = vadd.f32 0.0, %v3166
      %3168 = vmatmul.f32.gmra.mxu0 %v2671
      %v3169 = vpop.f32.mrf.mxu0
      %v3170 = vadd.f32 0.0, %v3169
      %3171 = vmatmul.f32.gmra.mxu0 %v2673
      %v3172 = vpop.f32.mrf.mxu0
      %v3173 = vadd.f32 0.0, %v3172
      %3174 = vmatmul.f32.gmra.mxu0 %v2675
      %v3175 = vpop.f32.mrf.mxu0
      %v3176 = vadd.f32 0.0, %v3175
      %3177 = vmatmul.f32.gmra.mxu0 %v2677
      %v3178 = vpop.f32.mrf.mxu0
      %v3179 = vadd.f32 0.0, %v3178
      %3180 = vmatmul.f32.gmra.mxu0 %v2679
      %v3181 = vpop.f32.mrf.mxu0
      %v3182 = vadd.f32 0.0, %v3181
      %3183 = vmatmul.f32.gmra.mxu0 %v2681
      %v3184 = vpop.f32.mrf.mxu0
      %v3185 = vadd.f32 0.0, %v3184
      %3186 = vmatmul.f32.gmra.mxu0 %v2683
      %v3187 = vpop.f32.mrf.mxu0
      %v3188 = vadd.f32 0.0, %v3187
      %3189 = vmatmul.f32.gmra.mxu0 %v2685
      %v3190 = vpop.f32.mrf.mxu0
      %v3191 = vadd.f32 0.0, %v3190
      %3192 = vmatmul.f32.gmra.mxu0 %v2687
      %v3193 = vpop.f32.mrf.mxu0
      %v3194 = vadd.f32 0.0, %v3193
      %3195 = vmatmul.f32.gmra.mxu0 %v2689
      %v3196 = vpop.f32.mrf.mxu0
      %v3197 = vadd.f32 0.0, %v3196
      %3198 = vmatmul.f32.gmra.mxu0 %v2691
      %v3199 = vpop.f32.mrf.mxu0
      %v3200 = vadd.f32 0.0, %v3199
      %3201 = vmatmul.f32.gmra.mxu0 %v2693
      %v3202 = vpop.f32.mrf.mxu0
      %v3203 = vadd.f32 0.0, %v3202
      %3204 = vmatmul.f32.gmra.mxu0 %v2695
      %v3205 = vpop.f32.mrf.mxu0
      %v3206 = vadd.f32 0.0, %v3205
      %3207 = vmatmul.f32.gmra.mxu0 %v2697
      %v3208 = vpop.f32.mrf.mxu0
      %v3209 = vadd.f32 0.0, %v3208
      %3210 = vmatmul.f32.gmra.mxu0 %v2699
      %v3211 = vpop.f32.mrf.mxu0
      %v3212 = vadd.f32 0.0, %v3211
      %3213 = vmatmul.f32.gmra.mxu0 %v2701
      %v3214 = vpop.f32.mrf.mxu0
      %v3215 = vadd.f32 0.0, %v3214
      %3216 = vmatmul.f32.gmra.mxu0 %v2703
      %v3217 = vpop.f32.mrf.mxu0
      %v3218 = vadd.f32 0.0, %v3217
      %3219 = vmatmul.f32.gmra.mxu0 %v2705
      %v3220 = vpop.f32.mrf.mxu0
      %v3221 = vadd.f32 0.0, %v3220
      %3222 = vmatmul.f32.gmra.mxu0 %v2707
      %v3223 = vpop.f32.mrf.mxu0
      %v3224 = vadd.f32 0.0, %v3223
      %3225 = vmatmul.f32.gmra.mxu0 %v2709
      %v3226 = vpop.f32.mrf.mxu0
      %v3227 = vadd.f32 0.0, %v3226
      %3228 = vmatmul.f32.gmra.mxu0 %v2711
      %v3229 = vpop.f32.mrf.mxu0
      %v3230 = vadd.f32 0.0, %v3229
      %3231 = vmatmul.f32.gmra.mxu0 %v2713
      %v3232 = vpop.f32.mrf.mxu0
      %v3233 = vadd.f32 0.0, %v3232
      %3234 = vmatmul.f32.gmra.mxu0 %v2715
      %v3235 = vpop.f32.mrf.mxu0
      %v3236 = vadd.f32 0.0, %v3235
      %3237 = vmatmul.f32.gmra.mxu0 %v2717
      %v3238 = vpop.f32.mrf.mxu0
      %v3239 = vadd.f32 0.0, %v3238
      %3240 = vmatmul.f32.gmra.mxu0 %v2719
      %v3241 = vpop.f32.mrf.mxu0
      %v3242 = vadd.f32 0.0, %v3241
      %3243 = vmatmul.f32.gmra.mxu0 %v2721
      %v3244 = vpop.f32.mrf.mxu0
      %v3245 = vadd.f32 0.0, %v3244
      %3246 = vmatmul.f32.gmra.mxu0 %v3132
      %v3247 = vpop.f32.mrf.mxu0
      %v3248 = vadd.f32 0.0, %v3247
      %3249 = vmatmul.f32.gmra.mxu0 %v3135
      %v3250 = vpop.f32.mrf.mxu0
      %v3251 = vadd.f32 0.0, %v3250
      %3252 = vdwg.mxu0
      %v3253 = vadd.f32 %v3099, %v3158
      %v3254 = vadd.f32 %v3100, %v3161
      %v3255 = vadd.f32 %v3101, %v3164
      %v3256 = vadd.f32 %v3102, %v3167
      %v3257 = vadd.f32 %v3103, %v3170
      %v3258 = vadd.f32 %v3104, %v3173
      %v3259 = vadd.f32 %v3105, %v3176
      %v3260 = vadd.f32 %v3106, %v3179
      %v3261 = vadd.f32 %v3107, %v3182
      %v3262 = vadd.f32 %v3108, %v3185
      %v3263 = vadd.f32 %v3109, %v3188
      %v3264 = vadd.f32 %v3110, %v3191
      %v3265 = vadd.f32 %v3111, %v3194
      %v3266 = vadd.f32 %v3112, %v3197
      %v3267 = vadd.f32 %v3113, %v3200
      %v3268 = vadd.f32 %v3114, %v3203
      %v3269 = vadd.f32 %v3115, %v3206
      %v3270 = vadd.f32 %v3116, %v3209
      %v3271 = vadd.f32 %v3117, %v3212
      %v3272 = vadd.f32 %v3118, %v3215
      %v3273 = vadd.f32 %v3119, %v3218
      %v3274 = vadd.f32 %v3120, %v3221
      %v3275 = vadd.f32 %v3121, %v3224
      %v3276 = vadd.f32 %v3122, %v3227
      %v3277 = vadd.f32 %v3123, %v3230
      %v3278 = vadd.f32 %v3124, %v3233
      %v3279 = vadd.f32 %v3125, %v3236
      %v3280 = vadd.f32 %v3126, %v3239
      %v3281 = vadd.f32 %v3127, %v3242
      %v3282 = vadd.f32 %v3128, %v3245
      %v3283 = vadd.f32 %v3129, %v3248
      %v3284 = vadd.f32 %v3130, %v3251
      %v3286 = vrot.slane %v2345, 1
      %v3287 = vrot.slane %v2346, 1
      %v3288 = vsel %vm399, %v3286, %v3287
      %v3289 = vrot.slane %v2347, 1
      %v3290 = vsel %vm399, %v3287, %v3289
      %v3291 = vsel %vm480, %v3288, 0
      %v3293 = vsel %vm480, %v3290, 0
      %v3296 = vsel %vm545, %v346, 0
      %3298 = vmatpush.msra.mxu0 0.0
      %3299 = vmatpush.msra.mxu0 0.0
      %3300 = vmatpush.msra.mxu0 0.0
      %3301 = vmatpush.msra.mxu0 0.0
      %3302 = vmatpush.msra.mxu0 0.0
      %3303 = vmatpush.msra.mxu0 0.0
      %3304 = vmatpush.msra.mxu0 0.0
      %3305 = vmatpush.msra.mxu0 0.0
      %3306 = vmatpush.msra.mxu0 0.0
      %3307 = vmatpush.msra.mxu0 0.0
      %3308 = vmatpush.msra.mxu0 0.0
      %3309 = vmatpush.msra.mxu0 0.0
      %3310 = vmatpush.msra.mxu0 0.0
      %3311 = vmatpush.msra.mxu0 0.0
      %3312 = vmatpush.msra.mxu0 0.0
      %3313 = vmatpush.msra.mxu0 %v3296
      %3314 = vmatmul.f32.gmra.mxu0 %v2483
      %v3315 = vpop.f32.mrf.mxu0
      %v3316 = vadd.f32 0.0, %v3315
      %3317 = vmatmul.f32.gmra.mxu0 %v2485
      %v3318 = vpop.f32.mrf.mxu0
      %v3319 = vadd.f32 0.0, %v3318
      %3320 = vmatmul.f32.gmra.mxu0 %v2487
      %v3321 = vpop.f32.mrf.mxu0
      %v3322 = vadd.f32 0.0, %v3321
      %3323 = vmatmul.f32.gmra.mxu0 %v2489
      %v3324 = vpop.f32.mrf.mxu0
      %v3325 = vadd.f32 0.0, %v3324
      %3326 = vmatmul.f32.gmra.mxu0 %v2491
      %v3327 = vpop.f32.mrf.mxu0
      %v3328 = vadd.f32 0.0, %v3327
      %3329 = vmatmul.f32.gmra.mxu0 %v2493
      %v3330 = vpop.f32.mrf.mxu0
      %v3331 = vadd.f32 0.0, %v3330
      %3332 = vmatmul.f32.gmra.mxu0 %v2495
      %v3333 = vpop.f32.mrf.mxu0
      %v3334 = vadd.f32 0.0, %v3333
      %3335 = vmatmul.f32.gmra.mxu0 %v2497
      %v3336 = vpop.f32.mrf.mxu0
      %v3337 = vadd.f32 0.0, %v3336
      %3338 = vmatmul.f32.gmra.mxu0 %v2499
      %v3339 = vpop.f32.mrf.mxu0
      %v3340 = vadd.f32 0.0, %v3339
      %3341 = vmatmul.f32.gmra.mxu0 %v2501
      %v3342 = vpop.f32.mrf.mxu0
      %v3343 = vadd.f32 0.0, %v3342
      %3344 = vmatmul.f32.gmra.mxu0 %v2503
      %v3345 = vpop.f32.mrf.mxu0
      %v3346 = vadd.f32 0.0, %v3345
      %3347 = vmatmul.f32.gmra.mxu0 %v2505
      %v3348 = vpop.f32.mrf.mxu0
      %v3349 = vadd.f32 0.0, %v3348
      %3350 = vmatmul.f32.gmra.mxu0 %v2507
      %v3351 = vpop.f32.mrf.mxu0
      %v3352 = vadd.f32 0.0, %v3351
      %3353 = vmatmul.f32.gmra.mxu0 %v2509
      %v3354 = vpop.f32.mrf.mxu0
      %v3355 = vadd.f32 0.0, %v3354
      %3356 = vmatmul.f32.gmra.mxu0 %v2511
      %v3357 = vpop.f32.mrf.mxu0
      %v3358 = vadd.f32 0.0, %v3357
      %3359 = vmatmul.f32.gmra.mxu0 %v2513
      %v3360 = vpop.f32.mrf.mxu0
      %v3361 = vadd.f32 0.0, %v3360
      %3362 = vmatmul.f32.gmra.mxu0 %v2515
      %v3363 = vpop.f32.mrf.mxu0
      %v3364 = vadd.f32 0.0, %v3363
      %3365 = vmatmul.f32.gmra.mxu0 %v2517
      %v3366 = vpop.f32.mrf.mxu0
      %v3367 = vadd.f32 0.0, %v3366
      %3368 = vmatmul.f32.gmra.mxu0 %v2519
      %v3369 = vpop.f32.mrf.mxu0
      %v3370 = vadd.f32 0.0, %v3369
      %3371 = vmatmul.f32.gmra.mxu0 %v2521
      %v3372 = vpop.f32.mrf.mxu0
      %v3373 = vadd.f32 0.0, %v3372
      %3374 = vmatmul.f32.gmra.mxu0 %v2523
      %v3375 = vpop.f32.mrf.mxu0
      %v3376 = vadd.f32 0.0, %v3375
      %3377 = vmatmul.f32.gmra.mxu0 %v2525
      %v3378 = vpop.f32.mrf.mxu0
      %v3379 = vadd.f32 0.0, %v3378
      %3380 = vmatmul.f32.gmra.mxu0 %v2527
      %v3381 = vpop.f32.mrf.mxu0
      %v3382 = vadd.f32 0.0, %v3381
      %3383 = vmatmul.f32.gmra.mxu0 %v2529
      %v3384 = vpop.f32.mrf.mxu0
      %v3385 = vadd.f32 0.0, %v3384
      %3386 = vmatmul.f32.gmra.mxu0 %v2531
      %v3387 = vpop.f32.mrf.mxu0
      %v3388 = vadd.f32 0.0, %v3387
      %3389 = vmatmul.f32.gmra.mxu0 %v2533
      %v3390 = vpop.f32.mrf.mxu0
      %v3391 = vadd.f32 0.0, %v3390
      %3392 = vmatmul.f32.gmra.mxu0 %v2535
      %v3393 = vpop.f32.mrf.mxu0
      %v3394 = vadd.f32 0.0, %v3393
      %3395 = vmatmul.f32.gmra.mxu0 %v2537
      %v3396 = vpop.f32.mrf.mxu0
      %v3397 = vadd.f32 0.0, %v3396
      %3398 = vmatmul.f32.gmra.mxu0 %v2539
      %v3399 = vpop.f32.mrf.mxu0
      %v3400 = vadd.f32 0.0, %v3399
      %3401 = vmatmul.f32.gmra.mxu0 %v2541
      %v3402 = vpop.f32.mrf.mxu0
      %v3403 = vadd.f32 0.0, %v3402
      %3404 = vmatmul.f32.gmra.mxu0 %v3291
      %v3405 = vpop.f32.mrf.mxu0
      %v3406 = vadd.f32 0.0, %v3405
      %3407 = vmatmul.f32.gmra.mxu0 %v3293
      %v3408 = vpop.f32.mrf.mxu0
      %v3409 = vadd.f32 0.0, %v3408
      %3410 = vdwg.mxu0
      %v3411 = vadd.f32 %v3253, %v3316
      %v3412 = vadd.f32 %v3254, %v3319
      %v3413 = vadd.f32 %v3255, %v3322
      %v3414 = vadd.f32 %v3256, %v3325
      %v3415 = vadd.f32 %v3257, %v3328
      %v3416 = vadd.f32 %v3258, %v3331
      %v3417 = vadd.f32 %v3259, %v3334
      %v3418 = vadd.f32 %v3260, %v3337
      %v3419 = vadd.f32 %v3261, %v3340
      %v3420 = vadd.f32 %v3262, %v3343
      %v3421 = vadd.f32 %v3263, %v3346
      %v3422 = vadd.f32 %v3264, %v3349
      %v3423 = vadd.f32 %v3265, %v3352
      %v3424 = vadd.f32 %v3266, %v3355
      %v3425 = vadd.f32 %v3267, %v3358
      %v3426 = vadd.f32 %v3268, %v3361
      %v3427 = vadd.f32 %v3269, %v3364
      %v3428 = vadd.f32 %v3270, %v3367
      %v3429 = vadd.f32 %v3271, %v3370
      %v3430 = vadd.f32 %v3272, %v3373
      %v3431 = vadd.f32 %v3273, %v3376
      %v3432 = vadd.f32 %v3274, %v3379
      %v3433 = vadd.f32 %v3275, %v3382
      %v3434 = vadd.f32 %v3276, %v3385
      %v3435 = vadd.f32 %v3277, %v3388
      %v3436 = vadd.f32 %v3278, %v3391
      %v3437 = vadd.f32 %v3279, %v3394
      %v3438 = vadd.f32 %v3280, %v3397
      %v3439 = vadd.f32 %v3281, %v3400
      %v3440 = vadd.f32 %v3282, %v3403
      %v3441 = vadd.f32 %v3283, %v3406
      %v3442 = vadd.f32 %v3284, %v3409
      %v3443 = vrot.slane %v2345, 2
      %v3444 = vrot.slane %v2346, 2
      %v3445 = vsel %vm842, %v3443, %v3444
      %v3446 = vrot.slane %v2347, 2
      %v3447 = vsel %vm842, %v3444, %v3446
      %v3448 = vsel %vm480, %v3445, 0
      %v3450 = vsel %vm480, %v3447, 0
      %v3453 = vsel %vm545, %v347, 0
      %3455 = vmatpush.msra.mxu0 0.0
      %3456 = vmatpush.msra.mxu0 0.0
      %3457 = vmatpush.msra.mxu0 0.0
      %3458 = vmatpush.msra.mxu0 0.0
      %3459 = vmatpush.msra.mxu0 0.0
      %3460 = vmatpush.msra.mxu0 0.0
      %3461 = vmatpush.msra.mxu0 0.0
      %3462 = vmatpush.msra.mxu0 0.0
      %3463 = vmatpush.msra.mxu0 0.0
      %3464 = vmatpush.msra.mxu0 0.0
      %3465 = vmatpush.msra.mxu0 0.0
      %3466 = vmatpush.msra.mxu0 0.0
      %3467 = vmatpush.msra.mxu0 0.0
      %3468 = vmatpush.msra.mxu0 0.0
      %3469 = vmatpush.msra.mxu0 0.0
      %3470 = vmatpush.msra.mxu0 %v3453
      %3471 = vmatmul.f32.gmra.mxu0 %v2923
      %v3472 = vpop.f32.mrf.mxu0
      %v3473 = vadd.f32 0.0, %v3472
      %3474 = vmatmul.f32.gmra.mxu0 %v2925
      %v3475 = vpop.f32.mrf.mxu0
      %v3476 = vadd.f32 0.0, %v3475
      %3477 = vmatmul.f32.gmra.mxu0 %v2927
      %v3478 = vpop.f32.mrf.mxu0
      %v3479 = vadd.f32 0.0, %v3478
      %3480 = vmatmul.f32.gmra.mxu0 %v2929
      %v3481 = vpop.f32.mrf.mxu0
      %v3482 = vadd.f32 0.0, %v3481
      %3483 = vmatmul.f32.gmra.mxu0 %v2931
      %v3484 = vpop.f32.mrf.mxu0
      %v3485 = vadd.f32 0.0, %v3484
      %3486 = vmatmul.f32.gmra.mxu0 %v2933
      %v3487 = vpop.f32.mrf.mxu0
      %v3488 = vadd.f32 0.0, %v3487
      %3489 = vmatmul.f32.gmra.mxu0 %v2935
      %v3490 = vpop.f32.mrf.mxu0
      %v3491 = vadd.f32 0.0, %v3490
      %3492 = vmatmul.f32.gmra.mxu0 %v2937
      %v3493 = vpop.f32.mrf.mxu0
      %v3494 = vadd.f32 0.0, %v3493
      %3495 = vmatmul.f32.gmra.mxu0 %v2939
      %v3496 = vpop.f32.mrf.mxu0
      %v3497 = vadd.f32 0.0, %v3496
      %3498 = vmatmul.f32.gmra.mxu0 %v2941
      %v3499 = vpop.f32.mrf.mxu0
      %v3500 = vadd.f32 0.0, %v3499
      %3501 = vmatmul.f32.gmra.mxu0 %v2943
      %v3502 = vpop.f32.mrf.mxu0
      %v3503 = vadd.f32 0.0, %v3502
      %3504 = vmatmul.f32.gmra.mxu0 %v2945
      %v3505 = vpop.f32.mrf.mxu0
      %v3506 = vadd.f32 0.0, %v3505
      %3507 = vmatmul.f32.gmra.mxu0 %v2947
      %v3508 = vpop.f32.mrf.mxu0
      %v3509 = vadd.f32 0.0, %v3508
      %3510 = vmatmul.f32.gmra.mxu0 %v2949
      %v3511 = vpop.f32.mrf.mxu0
      %v3512 = vadd.f32 0.0, %v3511
      %3513 = vmatmul.f32.gmra.mxu0 %v2951
      %v3514 = vpop.f32.mrf.mxu0
      %v3515 = vadd.f32 0.0, %v3514
      %3516 = vmatmul.f32.gmra.mxu0 %v2953
      %v3517 = vpop.f32.mrf.mxu0
      %v3518 = vadd.f32 0.0, %v3517
      %3519 = vmatmul.f32.gmra.mxu0 %v2955
      %v3520 = vpop.f32.mrf.mxu0
      %v3521 = vadd.f32 0.0, %v3520
      %3522 = vmatmul.f32.gmra.mxu0 %v2957
      %v3523 = vpop.f32.mrf.mxu0
      %v3524 = vadd.f32 0.0, %v3523
      %3525 = vmatmul.f32.gmra.mxu0 %v2959
      %v3526 = vpop.f32.mrf.mxu0
      %v3527 = vadd.f32 0.0, %v3526
      %3528 = vmatmul.f32.gmra.mxu0 %v2961
      %v3529 = vpop.f32.mrf.mxu0
      %v3530 = vadd.f32 0.0, %v3529
      %3531 = vmatmul.f32.gmra.mxu0 %v2963
      %v3532 = vpop.f32.mrf.mxu0
      %v3533 = vadd.f32 0.0, %v3532
      %3534 = vmatmul.f32.gmra.mxu0 %v2965
      %v3535 = vpop.f32.mrf.mxu0
      %v3536 = vadd.f32 0.0, %v3535
      %3537 = vmatmul.f32.gmra.mxu0 %v2967
      %v3538 = vpop.f32.mrf.mxu0
      %v3539 = vadd.f32 0.0, %v3538
      %3540 = vmatmul.f32.gmra.mxu0 %v2969
      %v3541 = vpop.f32.mrf.mxu0
      %v3542 = vadd.f32 0.0, %v3541
      %3543 = vmatmul.f32.gmra.mxu0 %v2971
      %v3544 = vpop.f32.mrf.mxu0
      %v3545 = vadd.f32 0.0, %v3544
      %3546 = vmatmul.f32.gmra.mxu0 %v2973
      %v3547 = vpop.f32.mrf.mxu0
      %v3548 = vadd.f32 0.0, %v3547
      %3549 = vmatmul.f32.gmra.mxu0 %v2975
      %v3550 = vpop.f32.mrf.mxu0
      %v3551 = vadd.f32 0.0, %v3550
      %3552 = vmatmul.f32.gmra.mxu0 %v2977
      %v3553 = vpop.f32.mrf.mxu0
      %v3554 = vadd.f32 0.0, %v3553
      %3555 = vmatmul.f32.gmra.mxu0 %v2979
      %v3556 = vpop.f32.mrf.mxu0
      %v3557 = vadd.f32 0.0, %v3556
      %3558 = vmatmul.f32.gmra.mxu0 %v2981
      %v3559 = vpop.f32.mrf.mxu0
      %v3560 = vadd.f32 0.0, %v3559
      %3561 = vmatmul.f32.gmra.mxu0 %v3448
      %v3562 = vpop.f32.mrf.mxu0
      %v3563 = vadd.f32 0.0, %v3562
      %3564 = vmatmul.f32.gmra.mxu0 %v3450
      %v3565 = vpop.f32.mrf.mxu0
      %v3566 = vadd.f32 0.0, %v3565
      %3567 = vdwg.mxu0
      %v3568 = vadd.f32 %v3411, %v3473
      %v3569 = vadd.f32 %v3412, %v3476
      %v3570 = vadd.f32 %v3413, %v3479
      %v3571 = vadd.f32 %v3414, %v3482
      %v3572 = vadd.f32 %v3415, %v3485
      %v3573 = vadd.f32 %v3416, %v3488
      %v3574 = vadd.f32 %v3417, %v3491
      %v3575 = vadd.f32 %v3418, %v3494
      %v3576 = vadd.f32 %v3419, %v3497
      %v3577 = vadd.f32 %v3420, %v3500
      %v3578 = vadd.f32 %v3421, %v3503
      %v3579 = vadd.f32 %v3422, %v3506
      %v3580 = vadd.f32 %v3423, %v3509
      %v3581 = vadd.f32 %v3424, %v3512
      %v3582 = vadd.f32 %v3425, %v3515
      %v3583 = vadd.f32 %v3426, %v3518
      %v3584 = vadd.f32 %v3427, %v3521
      %v3585 = vadd.f32 %v3428, %v3524
      %v3586 = vadd.f32 %v3429, %v3527
      %v3587 = vadd.f32 %v3430, %v3530
      %v3588 = vadd.f32 %v3431, %v3533
      %v3589 = vadd.f32 %v3432, %v3536
      %v3590 = vadd.f32 %v3433, %v3539
      %v3591 = vadd.f32 %v3434, %v3542
      %v3592 = vadd.f32 %v3435, %v3545
      %v3593 = vadd.f32 %v3436, %v3548
      %v3594 = vadd.f32 %v3437, %v3551
      %v3595 = vadd.f32 %v3438, %v3554
      %v3596 = vadd.f32 %v3439, %v3557
      %v3597 = vadd.f32 %v3440, %v3560
      %v3598 = vadd.f32 %v3441, %v3563
      %v3599 = vadd.f32 %v3442, %v3566
      %v3601 = vsel %vm480, %v2348, 0
      %v3604 = vsel %vm480, %v2349, 0
      %v3607 = vsel %vm545, %v348, 0
      %3609 = vmatpush.msra.mxu0 0.0
      %3610 = vmatpush.msra.mxu0 0.0
      %3611 = vmatpush.msra.mxu0 0.0
      %3612 = vmatpush.msra.mxu0 0.0
      %3613 = vmatpush.msra.mxu0 0.0
      %3614 = vmatpush.msra.mxu0 0.0
      %3615 = vmatpush.msra.mxu0 0.0
      %3616 = vmatpush.msra.mxu0 0.0
      %3617 = vmatpush.msra.mxu0 0.0
      %3618 = vmatpush.msra.mxu0 0.0
      %3619 = vmatpush.msra.mxu0 0.0
      %3620 = vmatpush.msra.mxu0 0.0
      %3621 = vmatpush.msra.mxu0 0.0
      %3622 = vmatpush.msra.mxu0 0.0
      %3623 = vmatpush.msra.mxu0 0.0
      %3624 = vmatpush.msra.mxu0 %v3607
      %3625 = vmatmul.f32.gmra.mxu0 %v2667
      %v3626 = vpop.f32.mrf.mxu0
      %v3627 = vadd.f32 0.0, %v3626
      %3628 = vmatmul.f32.gmra.mxu0 %v2669
      %v3629 = vpop.f32.mrf.mxu0
      %v3630 = vadd.f32 0.0, %v3629
      %3631 = vmatmul.f32.gmra.mxu0 %v2671
      %v3632 = vpop.f32.mrf.mxu0
      %v3633 = vadd.f32 0.0, %v3632
      %3634 = vmatmul.f32.gmra.mxu0 %v2673
      %v3635 = vpop.f32.mrf.mxu0
      %v3636 = vadd.f32 0.0, %v3635
      %3637 = vmatmul.f32.gmra.mxu0 %v2675
      %v3638 = vpop.f32.mrf.mxu0
      %v3639 = vadd.f32 0.0, %v3638
      %3640 = vmatmul.f32.gmra.mxu0 %v2677
      %v3641 = vpop.f32.mrf.mxu0
      %v3642 = vadd.f32 0.0, %v3641
      %3643 = vmatmul.f32.gmra.mxu0 %v2679
      %v3644 = vpop.f32.mrf.mxu0
      %v3645 = vadd.f32 0.0, %v3644
      %3646 = vmatmul.f32.gmra.mxu0 %v2681
      %v3647 = vpop.f32.mrf.mxu0
      %v3648 = vadd.f32 0.0, %v3647
      %3649 = vmatmul.f32.gmra.mxu0 %v2683
      %v3650 = vpop.f32.mrf.mxu0
      %v3651 = vadd.f32 0.0, %v3650
      %3652 = vmatmul.f32.gmra.mxu0 %v2685
      %v3653 = vpop.f32.mrf.mxu0
      %v3654 = vadd.f32 0.0, %v3653
      %3655 = vmatmul.f32.gmra.mxu0 %v2687
      %v3656 = vpop.f32.mrf.mxu0
      %v3657 = vadd.f32 0.0, %v3656
      %3658 = vmatmul.f32.gmra.mxu0 %v2689
      %v3659 = vpop.f32.mrf.mxu0
      %v3660 = vadd.f32 0.0, %v3659
      %3661 = vmatmul.f32.gmra.mxu0 %v2691
      %v3662 = vpop.f32.mrf.mxu0
      %v3663 = vadd.f32 0.0, %v3662
      %3664 = vmatmul.f32.gmra.mxu0 %v2693
      %v3665 = vpop.f32.mrf.mxu0
      %v3666 = vadd.f32 0.0, %v3665
      %3667 = vmatmul.f32.gmra.mxu0 %v2695
      %v3668 = vpop.f32.mrf.mxu0
      %v3669 = vadd.f32 0.0, %v3668
      %3670 = vmatmul.f32.gmra.mxu0 %v2697
      %v3671 = vpop.f32.mrf.mxu0
      %v3672 = vadd.f32 0.0, %v3671
      %3673 = vmatmul.f32.gmra.mxu0 %v2699
      %v3674 = vpop.f32.mrf.mxu0
      %v3675 = vadd.f32 0.0, %v3674
      %3676 = vmatmul.f32.gmra.mxu0 %v2701
      %v3677 = vpop.f32.mrf.mxu0
      %v3678 = vadd.f32 0.0, %v3677
      %3679 = vmatmul.f32.gmra.mxu0 %v2703
      %v3680 = vpop.f32.mrf.mxu0
      %v3681 = vadd.f32 0.0, %v3680
      %3682 = vmatmul.f32.gmra.mxu0 %v2705
      %v3683 = vpop.f32.mrf.mxu0
      %v3684 = vadd.f32 0.0, %v3683
      %3685 = vmatmul.f32.gmra.mxu0 %v2707
      %v3686 = vpop.f32.mrf.mxu0
      %v3687 = vadd.f32 0.0, %v3686
      %3688 = vmatmul.f32.gmra.mxu0 %v2709
      %v3689 = vpop.f32.mrf.mxu0
      %v3690 = vadd.f32 0.0, %v3689
      %3691 = vmatmul.f32.gmra.mxu0 %v2711
      %v3692 = vpop.f32.mrf.mxu0
      %v3693 = vadd.f32 0.0, %v3692
      %3694 = vmatmul.f32.gmra.mxu0 %v2713
      %v3695 = vpop.f32.mrf.mxu0
      %v3696 = vadd.f32 0.0, %v3695
      %3697 = vmatmul.f32.gmra.mxu0 %v2715
      %v3698 = vpop.f32.mrf.mxu0
      %v3699 = vadd.f32 0.0, %v3698
      %3700 = vmatmul.f32.gmra.mxu0 %v2717
      %v3701 = vpop.f32.mrf.mxu0
      %v3702 = vadd.f32 0.0, %v3701
      %3703 = vmatmul.f32.gmra.mxu0 %v2719
      %v3704 = vpop.f32.mrf.mxu0
      %v3705 = vadd.f32 0.0, %v3704
      %3706 = vmatmul.f32.gmra.mxu0 %v2721
      %v3707 = vpop.f32.mrf.mxu0
      %v3708 = vadd.f32 0.0, %v3707
      %3709 = vmatmul.f32.gmra.mxu0 %v3132
      %v3710 = vpop.f32.mrf.mxu0
      %v3711 = vadd.f32 0.0, %v3710
      %3712 = vmatmul.f32.gmra.mxu0 %v3135
      %v3713 = vpop.f32.mrf.mxu0
      %v3714 = vadd.f32 0.0, %v3713
      %3715 = vmatmul.f32.gmra.mxu0 %v3601
      %v3716 = vpop.f32.mrf.mxu0
      %v3717 = vadd.f32 0.0, %v3716
      %3718 = vmatmul.f32.gmra.mxu0 %v3604
      %v3719 = vpop.f32.mrf.mxu0
      %v3720 = vadd.f32 0.0, %v3719
      %3721 = vdwg.mxu0
      %v3722 = vadd.f32 %v3568, %v3627
      %v3723 = vadd.f32 %v3569, %v3630
      %v3724 = vadd.f32 %v3570, %v3633
      %v3725 = vadd.f32 %v3571, %v3636
      %v3726 = vadd.f32 %v3572, %v3639
      %v3727 = vadd.f32 %v3573, %v3642
      %v3728 = vadd.f32 %v3574, %v3645
      %v3729 = vadd.f32 %v3575, %v3648
      %v3730 = vadd.f32 %v3576, %v3651
      %v3731 = vadd.f32 %v3577, %v3654
      %v3732 = vadd.f32 %v3578, %v3657
      %v3733 = vadd.f32 %v3579, %v3660
      %v3734 = vadd.f32 %v3580, %v3663
      %v3735 = vadd.f32 %v3581, %v3666
      %v3736 = vadd.f32 %v3582, %v3669
      %v3737 = vadd.f32 %v3583, %v3672
      %v3738 = vadd.f32 %v3584, %v3675
      %v3739 = vadd.f32 %v3585, %v3678
      %v3740 = vadd.f32 %v3586, %v3681
      %v3741 = vadd.f32 %v3587, %v3684
      %v3742 = vadd.f32 %v3588, %v3687
      %v3743 = vadd.f32 %v3589, %v3690
      %v3744 = vadd.f32 %v3590, %v3693
      %v3745 = vadd.f32 %v3591, %v3696
      %v3746 = vadd.f32 %v3592, %v3699
      %v3747 = vadd.f32 %v3593, %v3702
      %v3748 = vadd.f32 %v3594, %v3705
      %v3749 = vadd.f32 %v3595, %v3708
      %v3750 = vadd.f32 %v3596, %v3711
      %v3751 = vadd.f32 %v3597, %v3714
      %v3752 = vadd.f32 %v3598, %v3717
      %v3753 = vadd.f32 %v3599, %v3720
      %v3755 = vrot.slane %v2348, 1
      %v3756 = vrot.slane %v2349, 1
      %v3757 = vsel %vm399, %v3755, %v3756
      %v3758 = vrot.slane %v2350, 1
      %v3759 = vsel %vm399, %v3756, %v3758
      %v3760 = vsel %vm480, %v3757, 0
      %v3762 = vsel %vm480, %v3759, 0
      %v3765 = vsel %vm545, %v349, 0
      %3767 = vmatpush.msra.mxu0 0.0
      %3768 = vmatpush.msra.mxu0 0.0
      %3769 = vmatpush.msra.mxu0 0.0
      %3770 = vmatpush.msra.mxu0 0.0
      %3771 = vmatpush.msra.mxu0 0.0
      %3772 = vmatpush.msra.mxu0 0.0
      %3773 = vmatpush.msra.mxu0 0.0
      %3774 = vmatpush.msra.mxu0 0.0
      %3775 = vmatpush.msra.mxu0 0.0
      %3776 = vmatpush.msra.mxu0 0.0
      %3777 = vmatpush.msra.mxu0 0.0
      %3778 = vmatpush.msra.mxu0 0.0
      %3779 = vmatpush.msra.mxu0 0.0
      %3780 = vmatpush.msra.mxu0 0.0
      %3781 = vmatpush.msra.mxu0 0.0
      %3782 = vmatpush.msra.mxu0 %v3765
      %3783 = vmatmul.f32.gmra.mxu0 %v2487
      %v3784 = vpop.f32.mrf.mxu0
      %v3785 = vadd.f32 0.0, %v3784
      %3786 = vmatmul.f32.gmra.mxu0 %v2489
      %v3787 = vpop.f32.mrf.mxu0
      %v3788 = vadd.f32 0.0, %v3787
      %3789 = vmatmul.f32.gmra.mxu0 %v2491
      %v3790 = vpop.f32.mrf.mxu0
      %v3791 = vadd.f32 0.0, %v3790
      %3792 = vmatmul.f32.gmra.mxu0 %v2493
      %v3793 = vpop.f32.mrf.mxu0
      %v3794 = vadd.f32 0.0, %v3793
      %3795 = vmatmul.f32.gmra.mxu0 %v2495
      %v3796 = vpop.f32.mrf.mxu0
      %v3797 = vadd.f32 0.0, %v3796
      %3798 = vmatmul.f32.gmra.mxu0 %v2497
      %v3799 = vpop.f32.mrf.mxu0
      %v3800 = vadd.f32 0.0, %v3799
      %3801 = vmatmul.f32.gmra.mxu0 %v2499
      %v3802 = vpop.f32.mrf.mxu0
      %v3803 = vadd.f32 0.0, %v3802
      %3804 = vmatmul.f32.gmra.mxu0 %v2501
      %v3805 = vpop.f32.mrf.mxu0
      %v3806 = vadd.f32 0.0, %v3805
      %3807 = vmatmul.f32.gmra.mxu0 %v2503
      %v3808 = vpop.f32.mrf.mxu0
      %v3809 = vadd.f32 0.0, %v3808
      %3810 = vmatmul.f32.gmra.mxu0 %v2505
      %v3811 = vpop.f32.mrf.mxu0
      %v3812 = vadd.f32 0.0, %v3811
      %3813 = vmatmul.f32.gmra.mxu0 %v2507
      %v3814 = vpop.f32.mrf.mxu0
      %v3815 = vadd.f32 0.0, %v3814
      %3816 = vmatmul.f32.gmra.mxu0 %v2509
      %v3817 = vpop.f32.mrf.mxu0
      %v3818 = vadd.f32 0.0, %v3817
      %3819 = vmatmul.f32.gmra.mxu0 %v2511
      %v3820 = vpop.f32.mrf.mxu0
      %v3821 = vadd.f32 0.0, %v3820
      %3822 = vmatmul.f32.gmra.mxu0 %v2513
      %v3823 = vpop.f32.mrf.mxu0
      %v3824 = vadd.f32 0.0, %v3823
      %3825 = vmatmul.f32.gmra.mxu0 %v2515
      %v3826 = vpop.f32.mrf.mxu0
      %v3827 = vadd.f32 0.0, %v3826
      %3828 = vmatmul.f32.gmra.mxu0 %v2517
      %v3829 = vpop.f32.mrf.mxu0
      %v3830 = vadd.f32 0.0, %v3829
      %3831 = vmatmul.f32.gmra.mxu0 %v2519
      %v3832 = vpop.f32.mrf.mxu0
      %v3833 = vadd.f32 0.0, %v3832
      %3834 = vmatmul.f32.gmra.mxu0 %v2521
      %v3835 = vpop.f32.mrf.mxu0
      %v3836 = vadd.f32 0.0, %v3835
      %3837 = vmatmul.f32.gmra.mxu0 %v2523
      %v3838 = vpop.f32.mrf.mxu0
      %v3839 = vadd.f32 0.0, %v3838
      %3840 = vmatmul.f32.gmra.mxu0 %v2525
      %v3841 = vpop.f32.mrf.mxu0
      %v3842 = vadd.f32 0.0, %v3841
      %3843 = vmatmul.f32.gmra.mxu0 %v2527
      %v3844 = vpop.f32.mrf.mxu0
      %v3845 = vadd.f32 0.0, %v3844
      %3846 = vmatmul.f32.gmra.mxu0 %v2529
      %v3847 = vpop.f32.mrf.mxu0
      %v3848 = vadd.f32 0.0, %v3847
      %3849 = vmatmul.f32.gmra.mxu0 %v2531
      %v3850 = vpop.f32.mrf.mxu0
      %v3851 = vadd.f32 0.0, %v3850
      %3852 = vmatmul.f32.gmra.mxu0 %v2533
      %v3853 = vpop.f32.mrf.mxu0
      %v3854 = vadd.f32 0.0, %v3853
      %3855 = vmatmul.f32.gmra.mxu0 %v2535
      %v3856 = vpop.f32.mrf.mxu0
      %v3857 = vadd.f32 0.0, %v3856
      %3858 = vmatmul.f32.gmra.mxu0 %v2537
      %v3859 = vpop.f32.mrf.mxu0
      %v3860 = vadd.f32 0.0, %v3859
      %3861 = vmatmul.f32.gmra.mxu0 %v2539
      %v3862 = vpop.f32.mrf.mxu0
      %v3863 = vadd.f32 0.0, %v3862
      %3864 = vmatmul.f32.gmra.mxu0 %v2541
      %v3865 = vpop.f32.mrf.mxu0
      %v3866 = vadd.f32 0.0, %v3865
      %3867 = vmatmul.f32.gmra.mxu0 %v3291
      %v3868 = vpop.f32.mrf.mxu0
      %v3869 = vadd.f32 0.0, %v3868
      %3870 = vmatmul.f32.gmra.mxu0 %v3293
      %v3871 = vpop.f32.mrf.mxu0
      %v3872 = vadd.f32 0.0, %v3871
      %3873 = vmatmul.f32.gmra.mxu0 %v3760
      %v3874 = vpop.f32.mrf.mxu0
      %v3875 = vadd.f32 0.0, %v3874
      %3876 = vmatmul.f32.gmra.mxu0 %v3762
      %v3877 = vpop.f32.mrf.mxu0
      %v3878 = vadd.f32 0.0, %v3877
      %3879 = vdwg.mxu0
      %v3880 = vadd.f32 %v3722, %v3785
      %v3881 = vadd.f32 %v3723, %v3788
      %v3882 = vadd.f32 %v3724, %v3791
      %v3883 = vadd.f32 %v3725, %v3794
      %v3884 = vadd.f32 %v3726, %v3797
      %v3885 = vadd.f32 %v3727, %v3800
      %v3886 = vadd.f32 %v3728, %v3803
      %v3887 = vadd.f32 %v3729, %v3806
      %v3888 = vadd.f32 %v3730, %v3809
      %v3889 = vadd.f32 %v3731, %v3812
      %v3890 = vadd.f32 %v3732, %v3815
      %v3891 = vadd.f32 %v3733, %v3818
      %v3892 = vadd.f32 %v3734, %v3821
      %v3893 = vadd.f32 %v3735, %v3824
      %v3894 = vadd.f32 %v3736, %v3827
      %v3895 = vadd.f32 %v3737, %v3830
      %v3896 = vadd.f32 %v3738, %v3833
      %v3897 = vadd.f32 %v3739, %v3836
      %v3898 = vadd.f32 %v3740, %v3839
      %v3899 = vadd.f32 %v3741, %v3842
      %v3900 = vadd.f32 %v3742, %v3845
      %v3901 = vadd.f32 %v3743, %v3848
      %v3902 = vadd.f32 %v3744, %v3851
      %v3903 = vadd.f32 %v3745, %v3854
      %v3904 = vadd.f32 %v3746, %v3857
      %v3905 = vadd.f32 %v3747, %v3860
      %v3906 = vadd.f32 %v3748, %v3863
      %v3907 = vadd.f32 %v3749, %v3866
      %v3908 = vadd.f32 %v3750, %v3869
      %v3909 = vadd.f32 %v3751, %v3872
      %v3910 = vadd.f32 %v3752, %v3875
      %v3911 = vadd.f32 %v3753, %v3878
      %v3912 = vrot.slane %v2348, 2
      %v3913 = vrot.slane %v2349, 2
      %v3914 = vsel %vm842, %v3912, %v3913
      %v3915 = vrot.slane %v2350, 2
      %v3916 = vsel %vm842, %v3913, %v3915
      %v3917 = vsel %vm480, %v3914, 0
      %v3919 = vsel %vm480, %v3916, 0
      %v3922 = vsel %vm545, %v350, 0
      %3924 = vmatpush.msra.mxu0 0.0
      %3925 = vmatpush.msra.mxu0 0.0
      %3926 = vmatpush.msra.mxu0 0.0
      %3927 = vmatpush.msra.mxu0 0.0
      %3928 = vmatpush.msra.mxu0 0.0
      %3929 = vmatpush.msra.mxu0 0.0
      %3930 = vmatpush.msra.mxu0 0.0
      %3931 = vmatpush.msra.mxu0 0.0
      %3932 = vmatpush.msra.mxu0 0.0
      %3933 = vmatpush.msra.mxu0 0.0
      %3934 = vmatpush.msra.mxu0 0.0
      %3935 = vmatpush.msra.mxu0 0.0
      %3936 = vmatpush.msra.mxu0 0.0
      %3937 = vmatpush.msra.mxu0 0.0
      %3938 = vmatpush.msra.mxu0 0.0
      %3939 = vmatpush.msra.mxu0 %v3922
      %3940 = vmatmul.f32.gmra.mxu0 %v2927
      %v3941 = vpop.f32.mrf.mxu0
      %v3942 = vadd.f32 0.0, %v3941
      %3943 = vmatmul.f32.gmra.mxu0 %v2929
      %v3944 = vpop.f32.mrf.mxu0
      %v3945 = vadd.f32 0.0, %v3944
      %3946 = vmatmul.f32.gmra.mxu0 %v2931
      %v3947 = vpop.f32.mrf.mxu0
      %v3948 = vadd.f32 0.0, %v3947
      %3949 = vmatmul.f32.gmra.mxu0 %v2933
      %v3950 = vpop.f32.mrf.mxu0
      %v3951 = vadd.f32 0.0, %v3950
      %3952 = vmatmul.f32.gmra.mxu0 %v2935
      %v3953 = vpop.f32.mrf.mxu0
      %v3954 = vadd.f32 0.0, %v3953
      %3955 = vmatmul.f32.gmra.mxu0 %v2937
      %v3956 = vpop.f32.mrf.mxu0
      %v3957 = vadd.f32 0.0, %v3956
      %3958 = vmatmul.f32.gmra.mxu0 %v2939
      %v3959 = vpop.f32.mrf.mxu0
      %v3960 = vadd.f32 0.0, %v3959
      %3961 = vmatmul.f32.gmra.mxu0 %v2941
      %v3962 = vpop.f32.mrf.mxu0
      %v3963 = vadd.f32 0.0, %v3962
      %3964 = vmatmul.f32.gmra.mxu0 %v2943
      %v3965 = vpop.f32.mrf.mxu0
      %v3966 = vadd.f32 0.0, %v3965
      %3967 = vmatmul.f32.gmra.mxu0 %v2945
      %v3968 = vpop.f32.mrf.mxu0
      %v3969 = vadd.f32 0.0, %v3968
      %3970 = vmatmul.f32.gmra.mxu0 %v2947
      %v3971 = vpop.f32.mrf.mxu0
      %v3972 = vadd.f32 0.0, %v3971
      %3973 = vmatmul.f32.gmra.mxu0 %v2949
      %v3974 = vpop.f32.mrf.mxu0
      %v3975 = vadd.f32 0.0, %v3974
      %3976 = vmatmul.f32.gmra.mxu0 %v2951
      %v3977 = vpop.f32.mrf.mxu0
      %v3978 = vadd.f32 0.0, %v3977
      %3979 = vmatmul.f32.gmra.mxu0 %v2953
      %v3980 = vpop.f32.mrf.mxu0
      %v3981 = vadd.f32 0.0, %v3980
      %3982 = vmatmul.f32.gmra.mxu0 %v2955
      %v3983 = vpop.f32.mrf.mxu0
      %v3984 = vadd.f32 0.0, %v3983
      %3985 = vmatmul.f32.gmra.mxu0 %v2957
      %v3986 = vpop.f32.mrf.mxu0
      %v3987 = vadd.f32 0.0, %v3986
      %3988 = vmatmul.f32.gmra.mxu0 %v2959
      %v3989 = vpop.f32.mrf.mxu0
      %v3990 = vadd.f32 0.0, %v3989
      %3991 = vmatmul.f32.gmra.mxu0 %v2961
      %v3992 = vpop.f32.mrf.mxu0
      %v3993 = vadd.f32 0.0, %v3992
      %3994 = vmatmul.f32.gmra.mxu0 %v2963
      %v3995 = vpop.f32.mrf.mxu0
      %v3996 = vadd.f32 0.0, %v3995
      %3997 = vmatmul.f32.gmra.mxu0 %v2965
      %v3998 = vpop.f32.mrf.mxu0
      %v3999 = vadd.f32 0.0, %v3998
      %4000 = vmatmul.f32.gmra.mxu0 %v2967
      %v4001 = vpop.f32.mrf.mxu0
      %v4002 = vadd.f32 0.0, %v4001
      %4003 = vmatmul.f32.gmra.mxu0 %v2969
      %v4004 = vpop.f32.mrf.mxu0
      %v4005 = vadd.f32 0.0, %v4004
      %4006 = vmatmul.f32.gmra.mxu0 %v2971
      %v4007 = vpop.f32.mrf.mxu0
      %v4008 = vadd.f32 0.0, %v4007
      %4009 = vmatmul.f32.gmra.mxu0 %v2973
      %v4010 = vpop.f32.mrf.mxu0
      %v4011 = vadd.f32 0.0, %v4010
      %4012 = vmatmul.f32.gmra.mxu0 %v2975
      %v4013 = vpop.f32.mrf.mxu0
      %v4014 = vadd.f32 0.0, %v4013
      %4015 = vmatmul.f32.gmra.mxu0 %v2977
      %v4016 = vpop.f32.mrf.mxu0
      %v4017 = vadd.f32 0.0, %v4016
      %4018 = vmatmul.f32.gmra.mxu0 %v2979
      %v4019 = vpop.f32.mrf.mxu0
      %v4020 = vadd.f32 0.0, %v4019
      %4021 = vmatmul.f32.gmra.mxu0 %v2981
      %v4022 = vpop.f32.mrf.mxu0
      %v4023 = vadd.f32 0.0, %v4022
      %4024 = vmatmul.f32.gmra.mxu0 %v3448
      %v4025 = vpop.f32.mrf.mxu0
      %v4026 = vadd.f32 0.0, %v4025
      %4027 = vmatmul.f32.gmra.mxu0 %v3450
      %v4028 = vpop.f32.mrf.mxu0
      %v4029 = vadd.f32 0.0, %v4028
      %4030 = vmatmul.f32.gmra.mxu0 %v3917
      %v4031 = vpop.f32.mrf.mxu0
      %v4032 = vadd.f32 0.0, %v4031
      %4033 = vmatmul.f32.gmra.mxu0 %v3919
      %v4034 = vpop.f32.mrf.mxu0
      %v4035 = vadd.f32 0.0, %v4034
      %4036 = vdwg.mxu0
      %v4037 = vadd.f32 %v3880, %v3942
      %v4038 = vadd.f32 %v3881, %v3945
      %v4039 = vadd.f32 %v3882, %v3948
      %v4040 = vadd.f32 %v3883, %v3951
      %v4041 = vadd.f32 %v3884, %v3954
      %v4042 = vadd.f32 %v3885, %v3957
      %v4043 = vadd.f32 %v3886, %v3960
      %v4044 = vadd.f32 %v3887, %v3963
      %v4045 = vadd.f32 %v3888, %v3966
      %v4046 = vadd.f32 %v3889, %v3969
      %v4047 = vadd.f32 %v3890, %v3972
      %v4048 = vadd.f32 %v3891, %v3975
      %v4049 = vadd.f32 %v3892, %v3978
      %v4050 = vadd.f32 %v3893, %v3981
      %v4051 = vadd.f32 %v3894, %v3984
      %v4052 = vadd.f32 %v3895, %v3987
      %v4053 = vadd.f32 %v3896, %v3990
      %v4054 = vadd.f32 %v3897, %v3993
      %v4055 = vadd.f32 %v3898, %v3996
      %v4056 = vadd.f32 %v3899, %v3999
      %v4057 = vadd.f32 %v3900, %v4002
      %v4058 = vadd.f32 %v3901, %v4005
      %v4059 = vadd.f32 %v3902, %v4008
      %v4060 = vadd.f32 %v3903, %v4011
      %v4061 = vadd.f32 %v3904, %v4014
      %v4062 = vadd.f32 %v3905, %v4017
      %v4063 = vadd.f32 %v3906, %v4020
      %v4064 = vadd.f32 %v3907, %v4023
      %v4065 = vadd.f32 %v3908, %v4026
      %v4066 = vadd.f32 %v3909, %v4029
      %v4067 = vadd.f32 %v3910, %v4032
      %v4068 = vadd.f32 %v3911, %v4035
      %v4069 = vld [vmem:[%s5] sm:$0x1]
      %v4071 = vperm.slane %v4069, 0
      %v4073 = vmul.f32 %v4037, %v4071
      %v4074 = vmul.f32 %v4038, %v4071
      %v4075 = vmul.f32 %v4039, %v4071
      %v4076 = vmul.f32 %v4040, %v4071
      %v4077 = vmul.f32 %v4041, %v4071
      %v4078 = vmul.f32 %v4042, %v4071
      %v4079 = vmul.f32 %v4043, %v4071
      %v4080 = vmul.f32 %v4044, %v4071
      %v4081 = vmul.f32 %v4045, %v4071
      %v4082 = vmul.f32 %v4046, %v4071
      %v4083 = vmul.f32 %v4047, %v4071
      %v4084 = vmul.f32 %v4048, %v4071
      %v4085 = vmul.f32 %v4049, %v4071
      %v4086 = vmul.f32 %v4050, %v4071
      %v4087 = vmul.f32 %v4051, %v4071
      %v4088 = vmul.f32 %v4052, %v4071
      %v4089 = vmul.f32 %v4053, %v4071
      %v4090 = vmul.f32 %v4054, %v4071
      %v4091 = vmul.f32 %v4055, %v4071
      %v4092 = vmul.f32 %v4056, %v4071
      %v4093 = vmul.f32 %v4057, %v4071
      %v4094 = vmul.f32 %v4058, %v4071
      %v4095 = vmul.f32 %v4059, %v4071
      %v4096 = vmul.f32 %v4060, %v4071
      %v4097 = vmul.f32 %v4061, %v4071
      %v4098 = vmul.f32 %v4062, %v4071
      %v4099 = vmul.f32 %v4063, %v4071
      %v4100 = vmul.f32 %v4064, %v4071
      %v4101 = vmul.f32 %v4065, %v4071
      %v4102 = vmul.f32 %v4066, %v4071
      %v4103 = vmul.f32 %v4067, %v4071
      %v4104 = vmul.f32 %v4068, %v4071
      %v4105 = vld [vmem:[%s6] sm:$0x1]
      %v4107 = vperm.slane %v4105, 0
      %v4109 = vadd.f32 %v4073, %v4107
      %v4110 = vadd.f32 %v4074, %v4107
      %v4111 = vadd.f32 %v4075, %v4107
      %v4112 = vadd.f32 %v4076, %v4107
      %v4113 = vadd.f32 %v4077, %v4107
      %v4114 = vadd.f32 %v4078, %v4107
      %v4115 = vadd.f32 %v4079, %v4107
      %v4116 = vadd.f32 %v4080, %v4107
      %v4117 = vadd.f32 %v4081, %v4107
      %v4118 = vadd.f32 %v4082, %v4107
      %v4119 = vadd.f32 %v4083, %v4107
      %v4120 = vadd.f32 %v4084, %v4107
      %v4121 = vadd.f32 %v4085, %v4107
      %v4122 = vadd.f32 %v4086, %v4107
      %v4123 = vadd.f32 %v4087, %v4107
      %v4124 = vadd.f32 %v4088, %v4107
      %v4125 = vadd.f32 %v4089, %v4107
      %v4126 = vadd.f32 %v4090, %v4107
      %v4127 = vadd.f32 %v4091, %v4107
      %v4128 = vadd.f32 %v4092, %v4107
      %v4129 = vadd.f32 %v4093, %v4107
      %v4130 = vadd.f32 %v4094, %v4107
      %v4131 = vadd.f32 %v4095, %v4107
      %v4132 = vadd.f32 %v4096, %v4107
      %v4133 = vadd.f32 %v4097, %v4107
      %v4134 = vadd.f32 %v4098, %v4107
      %v4135 = vadd.f32 %v4099, %v4107
      %v4136 = vadd.f32 %v4100, %v4107
      %v4137 = vadd.f32 %v4101, %v4107
      %v4138 = vadd.f32 %v4102, %v4107
      %v4139 = vadd.f32 %v4103, %v4107
      %v4140 = vadd.f32 %v4104, %v4107
      %v4141 = vadd.f32 %v4109, %v407
      %v4142 = vadd.f32 %v4110, %v409
      %v4143 = vadd.f32 %v4111, %v412
      %v4144 = vadd.f32 %v4112, %v414
      %v4145 = vadd.f32 %v4113, %v417
      %v4146 = vadd.f32 %v4114, %v419
      %v4147 = vadd.f32 %v4115, %v422
      %v4148 = vadd.f32 %v4116, %v424
      %v4149 = vadd.f32 %v4117, %v427
      %v4150 = vadd.f32 %v4118, %v429
      %v4151 = vadd.f32 %v4119, %v432
      %v4152 = vadd.f32 %v4120, %v434
      %v4153 = vadd.f32 %v4121, %v437
      %v4154 = vadd.f32 %v4122, %v439
      %v4155 = vadd.f32 %v4123, %v442
      %v4156 = vadd.f32 %v4124, %v444
      %v4157 = vadd.f32 %v4125, %v447
      %v4158 = vadd.f32 %v4126, %v449
      %v4159 = vadd.f32 %v4127, %v452
      %v4160 = vadd.f32 %v4128, %v454
      %v4161 = vadd.f32 %v4129, %v457
      %v4162 = vadd.f32 %v4130, %v459
      %v4163 = vadd.f32 %v4131, %v462
      %v4164 = vadd.f32 %v4132, %v464
      %v4165 = vadd.f32 %v4133, %v467
      %v4166 = vadd.f32 %v4134, %v469
      %v4167 = vadd.f32 %v4135, %v472
      %v4168 = vadd.f32 %v4136, %v474
      %v4169 = vadd.f32 %v4137, %v477
      %v4170 = vadd.f32 %v4138, %v479
      %v4171 = vadd.f32 %v4139, %v1292
      %v4172 = vadd.f32 %v4140, %v1294
      %v4173 = vmax.f32 %v4141, 0.0
      %v4174 = vmax.f32 %v4142, 0.0
      %v4175 = vmax.f32 %v4143, 0.0
      %v4176 = vmax.f32 %v4144, 0.0
      %v4177 = vmax.f32 %v4145, 0.0
      %v4178 = vmax.f32 %v4146, 0.0
      %v4179 = vmax.f32 %v4147, 0.0
      %v4180 = vmax.f32 %v4148, 0.0
      %v4181 = vmax.f32 %v4149, 0.0
      %v4182 = vmax.f32 %v4150, 0.0
      %v4183 = vmax.f32 %v4151, 0.0
      %v4184 = vmax.f32 %v4152, 0.0
      %v4185 = vmax.f32 %v4153, 0.0
      %v4186 = vmax.f32 %v4154, 0.0
      %v4187 = vmax.f32 %v4155, 0.0
      %v4188 = vmax.f32 %v4156, 0.0
      %v4189 = vmax.f32 %v4157, 0.0
      %v4190 = vmax.f32 %v4158, 0.0
      %v4191 = vmax.f32 %v4159, 0.0
      %v4192 = vmax.f32 %v4160, 0.0
      %v4193 = vmax.f32 %v4161, 0.0
      %v4194 = vmax.f32 %v4162, 0.0
      %v4195 = vmax.f32 %v4163, 0.0
      %v4196 = vmax.f32 %v4164, 0.0
      %v4197 = vmax.f32 %v4165, 0.0
      %v4198 = vmax.f32 %v4166, 0.0
      %v4199 = vmax.f32 %v4167, 0.0
      %v4200 = vmax.f32 %v4168, 0.0
      %v4201 = vmax.f32 %v4169, 0.0
      %v4202 = vmax.f32 %v4170, 0.0
      %v4203 = vmax.f32 %v4171, 0.0
      %v4204 = vmax.f32 %v4172, 0.0
      %4205 = vst.msk [vmem:[%s278] sm:$0xff] %vm480, %v4173
      %4206 = vst.msk [vmem:[%s278 + $0x8] sm:$0xff] %vm480, %v4174
      %4207 = vst.msk [vmem:[%s278 + $0x10] sm:$0xff] %vm480, %v4175
      %4208 = vst.msk [vmem:[%s278 + $0x18] sm:$0xff] %vm480, %v4176
      %4209 = vst.msk [vmem:[%s278 + $0x20] sm:$0xff] %vm480, %v4177
      %4210 = vst.msk [vmem:[%s278 + $0x28] sm:$0xff] %vm480, %v4178
      %4211 = vst.msk [vmem:[%s278 + $0x30] sm:$0xff] %vm480, %v4179
      %4212 = vst.msk [vmem:[%s278 + $0x38] sm:$0xff] %vm480, %v4180
      %4213 = vst.msk [vmem:[%s278 + $0x40] sm:$0xff] %vm480, %v4181
      %4214 = vst.msk [vmem:[%s278 + $0x48] sm:$0xff] %vm480, %v4182
      %4215 = vst.msk [vmem:[%s278 + $0x50] sm:$0xff] %vm480, %v4183
      %4216 = vst.msk [vmem:[%s278 + $0x58] sm:$0xff] %vm480, %v4184
      %4217 = vst.msk [vmem:[%s278 + $0x60] sm:$0xff] %vm480, %v4185
      %4218 = vst.msk [vmem:[%s278 + $0x68] sm:$0xff] %vm480, %v4186
      %4219 = vst.msk [vmem:[%s278 + $0x70] sm:$0xff] %vm480, %v4187
      %4220 = vst.msk [vmem:[%s278 + $0x78] sm:$0xff] %vm480, %v4188
      %4221 = vst.msk [vmem:[%s278 + $0x80] sm:$0xff] %vm480, %v4189
      %4222 = vst.msk [vmem:[%s278 + $0x88] sm:$0xff] %vm480, %v4190
      %4223 = vst.msk [vmem:[%s278 + $0x90] sm:$0xff] %vm480, %v4191
      %4224 = vst.msk [vmem:[%s278 + $0x98] sm:$0xff] %vm480, %v4192
      %4225 = vst.msk [vmem:[%s278 + $0xa0] sm:$0xff] %vm480, %v4193
      %4226 = vst.msk [vmem:[%s278 + $0xa8] sm:$0xff] %vm480, %v4194
      %4227 = vst.msk [vmem:[%s278 + $0xb0] sm:$0xff] %vm480, %v4195
      %4228 = vst.msk [vmem:[%s278 + $0xb8] sm:$0xff] %vm480, %v4196
      %4229 = vst.msk [vmem:[%s278 + $0xc0] sm:$0xff] %vm480, %v4197
      %4230 = vst.msk [vmem:[%s278 + $0xc8] sm:$0xff] %vm480, %v4198
      %4231 = vst.msk [vmem:[%s278 + $0xd0] sm:$0xff] %vm480, %v4199
      %4232 = vst.msk [vmem:[%s278 + $0xd8] sm:$0xff] %vm480, %v4200
      %4233 = vst.msk [vmem:[%s278 + $0xe0] sm:$0xff] %vm480, %v4201
      %4234 = vst.msk [vmem:[%s278 + $0xe8] sm:$0xff] %vm480, %v4202
      %4235 = vst.msk [vmem:[%s278 + $0xf0] sm:$0xff] %vm480, %v4203
      %4236 = vst.msk [vmem:[%s278 + $0xf8] sm:$0xff] %vm480, %v4204
      %p4237 = scmp.lt.s32.totalorder %s18, 1
      %s4238 = scalar_select %p4237, %s18, 1
      %s4239 = smul.addr %s4238, 32
      %s4240 = smul.addr %s4239, 8
      %s4241 = scalar_lea.vmem %s7, %s4240
      // Predicated region
      $region49: #{tpu_custom_call.1} parent=47 // pred_check
        %p4242 = pneg %p188
      $region50: #{tpu_custom_call.1} parent=47 // pred_check_branch
        %4244 = sbr.rel (%p4242) target = $region52
      $region51: #{tpu_custom_call.1} parent=47 // pred_region
        _
      $region52: #{tpu_custom_call.1} parent=47 // pred_fallthru
        _
    $region48: #{tpu_custom_call.1} parent=5 // pred_fallthru
      _
    %p4245 = scmp.le.s32.totalorder 2, %s13
    // Predicated region
    $region53: #{tpu_custom_call.1} parent=5 // pred_check
      %p4246 = pneg %p4245
    $region54: #{tpu_custom_call.1} parent=5 // pred_check_branch
      %4248 = sbr.rel (%p4246) target = $region56
    $region55: #{tpu_custom_call.1} parent=5 // pred_region
      %s4249 = ssub.s32 %s13, 2
      // Predicated region
      $region57: #{tpu_custom_call.1} parent=55 // pred_check
        %p4250 = pneg %p194
      $region58: #{tpu_custom_call.1} parent=55 // pred_check_branch
        %4252 = sbr.rel (%p4250) target = $region60
      $region59: #{tpu_custom_call.1} parent=55 // pred_region
        %p4253 = scmp.lt.s32.totalorder %s19, 1
        %s4254 = scalar_select %p4253, %s19, 1
        %s4255 = smul.addr %s4254, 32
        %s4256 = smul.addr %s4255, 8
        %s4257 = scalar_lea.vmem %s7, %s4256
      $region60: #{tpu_custom_call.1} parent=55 // pred_fallthru
        _
    $region56: #{tpu_custom_call.1} parent=5 // pred_fallthru
      _
  $region6: #{tpu_custom_call.1} parent=0 // loop_footer
    %s17 = sadd.s32 1, %s13
  $region7: #{tpu_custom_call.1} parent=0 // loop_footer_branch
    %12 = sbr.rel target = $region3
  $region8: #{tpu_custom_call.1} parent=0 // loop_exit
    _

</llo_original>
